<compile_context>
chip_gen: v7x
topology: tpu7x:2x2x1
jax: 0.10.0
libtpu: 0.0.40
codegen_flags: <defaults>
</compile_context>

<pallas_src>
import functools

import jax
import jax.numpy as jnp
from jax.experimental import pallas as pl
from jax.experimental.pallas import tpu as pltpu

BN_EPS = 1e-5  # PyTorch BatchNorm2d default eps


def _round_up(x, m):
    return ((x + m - 1) // m) * m


def make_conv_stats_kernel(k, stride, Ho, Wo, Cin, Cout_p):
    """Per-sample conv (k*k accumulated shifted MXU matmuls) + BN stat partials."""
    P = Ho * Wo

    def kernel(x_ref, w_ref, conv_ref, stats_ref):
        # x_ref:     (1, Hp, Wp, Cin)    bf16 (spatially pre-padded input)
        # w_ref:     (k*k, Cin, Cout_p)  bf16 (per-tap weight slabs)
        # conv_ref:  (1, Ho*Wo, Cout_p)  bf16
        # stats_ref: (1, 2, Cout_p)      f32  row0 = sum, row1 = sum of squares
        xv = x_ref[0]                                    # (Hp, Wp, Cin)
        acc = jnp.zeros((P, Cout_p), jnp.float32)
        for di in range(k):
            for dj in range(k):
                if stride == 1:
                    win = xv[di:di + Ho, dj:dj + Wo, :]
                else:
                    # TODO(synk): strided sublane slicing is untested (test uses stride==1).
                    win = xv[di:di + (Ho - 1) * stride + 1:stride,
                             dj:dj + (Wo - 1) * stride + 1:stride, :]
                patch = win.reshape(P, Cin)              # stays in VMEM
                acc = acc + jnp.dot(patch, w_ref[di * k + dj],
                                    preferred_element_type=jnp.float32)
        # Fused single-pass BN statistics from the f32 accumulator
        # (finalized once, for the whole batch, in the tiny finalize kernel).
        csum = jnp.sum(acc, axis=0, keepdims=True)                 # (1, Cout_p)
        csq = jnp.sum(acc * acc, axis=0, keepdims=True)            # (1, Cout_p)
        stats_ref[0] = jnp.concatenate([csum, csq], axis=0)        # (2, Cout_p)
        # Store the conv intermediate as bf16 -> half the HBM traffic of f32.
        conv_ref[0] = acc.astype(jnp.bfloat16)

    return kernel


def make_bn_finalize_kernel(count):
    """Finalize BN batch stats into one folded per-channel scale/shift pair."""
    inv_count = 1.0 / float(count)   # 1 / (N*Ho*Wo)

    def kernel(stats_ref, gamma_ref, beta_ref, ss_ref):
        # stats_ref: (B, 2, Cout_p) f32; gamma/beta: (1, Cout_p); ss_ref: (2, Cout_p)
        total = jnp.sum(stats_ref[...], axis=0)            # (2, Cout_p)
        mean = total[0:1, :] * inv_count                   # (1, Cout_p)
        # Biased variance (PyTorch training-mode normalization); clamp >= 0 to
        # guard E[x^2]-E[x]^2 cancellation before rsqrt.
        var = jnp.maximum(total[1:2, :] * inv_count - mean * mean, 0.0)
        inv_std = jax.lax.rsqrt(var + BN_EPS)
        scale = gamma_ref[...] * inv_std                   # BN folded to one FMA
        shift = beta_ref[...] - mean * scale
        ss_ref[...] = jnp.concatenate([scale, shift], axis=0)

    return kernel


def make_bn_relu_se_kernel(p):
    """Per-sample folded BN + ReLU + SE (pool -> MLP -> sigmoid -> gate)."""
    inv_p = 1.0 / float(p)           # 1 / (Ho*Wo) for the SE average pool

    def kernel(conv_ref, ss_ref, w1_ref, b1_ref, w2_ref, b2_ref, out_ref):
        conv = conv_ref[0].astype(jnp.float32)             # (P, Cout_p)
        scale = ss_ref[0:1, :]                             # (1, Cout_p)
        shift = ss_ref[1:2, :]
        y = jnp.maximum(conv * scale + shift, 0.0)         # BN + ReLU

        # SELayer fused into the same pass (y never touches HBM).
        pooled = jnp.sum(y, axis=0, keepdims=True) * inv_p              # (1, Cout_p)
        h = jnp.dot(pooled.astype(jnp.bfloat16), w1_ref[...],
                    preferred_element_type=jnp.float32)
        h = jnp.maximum(h + b1_ref[...], 0.0)                           # (1, R_p)
        s = jnp.dot(h.astype(jnp.bfloat16), w2_ref[...],
                    preferred_element_type=jnp.float32)
        s = jax.nn.sigmoid(s + b2_ref[...])                             # (1, Cout_p)
        out_ref[0] = (y * s).astype(jnp.bfloat16)                       # gate

    return kernel


@functools.partial(jax.jit, static_argnames=("kernel_size", "stride", "pad"))
def conv_bn_relu(x_nchw, params, *, kernel_size, stride, pad):
    wconv, gamma, beta, fc1_w, fc1_b, fc2_w, fc2_b = params
    B, Cin, H, W = x_nchw.shape
    Cout = wconv.shape[0]
    k = kernel_size
    Ho = (H + 2 * pad - k) // stride + 1
    Wo = (W + 2 * pad - k) // stride + 1
    P = Ho * Wo
    K = k * k * Cin
    red = fc1_w.shape[0]
    Cout_p = _round_up(Cout, 128)     # lane-dense output channels
    R_p = _round_up(red, 128)         # lane-dense SE hidden width
    Hp, Wp = H + 2 * pad, W + 2 * pad

    # ---- glue: layout / padding / dtype prep (no heavy compute) ----
    x = x_nchw.astype(jnp.bfloat16)                                  # cast BEFORE pad/transpose
    x = jnp.transpose(x, (0, 2, 3, 1))                               # NHWC
    x = jnp.pad(x, ((0, 0), (pad, pad), (pad, pad), (0, 0)))

    # (O, Cin, kh, kw) -> (kh, kw, Cin, O) -> (k*k, Cin, Cout_p): per-tap weight
    # slabs matching the on-chip accumulation order; zero-pad O to Cout_p.
    wmat = jnp.transpose(wconv, (2, 3, 1, 0)).reshape(k * k, Cin, Cout)
    wmat = jnp.pad(wmat, ((0, 0), (0, 0), (0, Cout_p - Cout))).astype(jnp.bfloat16)

    gamma_p = jnp.pad(gamma.astype(jnp.float32), (0, Cout_p - Cout),
                      constant_values=1.0).reshape(1, Cout_p)
    beta_p = jnp.pad(beta.astype(jnp.float32),
                     (0, Cout_p - Cout)).reshape(1, Cout_p)
    w1 = jnp.pad(fc1_w.T, ((0, Cout_p - Cout), (0, R_p - red))).astype(jnp.bfloat16)
    b1 = jnp.pad(fc1_b.astype(jnp.float32), (0, R_p - red)).reshape(1, R_p)
    w2 = jnp.pad(fc2_w.T, ((0, R_p - red), (0, Cout_p - Cout))).astype(jnp.bfloat16)
    b2 = jnp.pad(fc2_b.astype(jnp.float32),
                 (0, Cout_p - Cout)).reshape(1, Cout_p)

    cparams = pltpu.CompilerParams(dimension_semantics=("parallel",),
                                   vmem_limit_bytes=64 * 1024 * 1024)

    # ---- kernel 1: conv + single-pass BN statistics (per sample) ----
    k1_cost = pl.CostEstimate(
        flops=2 * B * P * K * Cout_p,
        transcendentals=0,
        bytes_accessed=(B * Hp * Wp * Cin * 2 + k * k * Cin * Cout_p * 2
                        + B * P * Cout_p * 2 + B * 2 * Cout_p * 4))
    conv_out, stats = pl.pallas_call(
        make_conv_stats_kernel(k, stride, Ho, Wo, Cin, Cout_p),
        grid=(B,),
        in_specs=[
            pl.BlockSpec((1, Hp, Wp, Cin), lambda b: (b, 0, 0, 0)),
            pl.BlockSpec((k * k, Cin, Cout_p), lambda b: (0, 0, 0)),
        ],
        out_specs=[
            pl.BlockSpec((1, P, Cout_p), lambda b: (b, 0, 0)),
            pl.BlockSpec((1, 2, Cout_p), lambda b: (b, 0, 0)),
        ],
        out_shape=[
            jax.ShapeDtypeStruct((B, P, Cout_p), jnp.bfloat16),
            jax.ShapeDtypeStruct((B, 2, Cout_p), jnp.float32),
        ],
        compiler_params=cparams,
        cost_estimate=k1_cost,
    )(x, wmat)

    # ---- tiny kernel: finalize BN stats once (hoisted out of per-sample loop) ----
    scale_shift = pl.pallas_call(
        make_bn_finalize_kernel(B * P),
        grid=(1,),
        in_specs=[
            pl.BlockSpec((B, 2, Cout_p), lambda i: (0, 0, 0)),
            pl.BlockSpec((1, Cout_p), lambda i: (0, 0)),
            pl.BlockSpec((1, Cout_p), lambda i: (0, 0)),
        ],
        out_specs=pl.BlockSpec((2, Cout_p), lambda i: (0, 0)),
        out_shape=jax.ShapeDtypeStruct((2, Cout_p), jnp.float32),
        compiler_params=pltpu.CompilerParams(dimension_semantics=("arbitrary",)),
    )(stats, gamma_p, beta_p)

    # ---- kernel 2: BN finalize-apply + ReLU + SE (pool, MLP, sigmoid, gate) ----
    k2_cost = pl.CostEstimate(
        flops=B * (5 * P * Cout_p + 2 * Cout_p * R_p + 2 * R_p * Cout_p),
        transcendentals=B * Cout_p,
        bytes_accessed=(2 * B * P * Cout_p * 2 + 2 * Cout_p * 4
                        + (Cout_p * R_p + R_p * Cout_p) * 2
                        + (R_p + 2 * Cout_p) * 4))
    out = pl.pallas_call(
        make_bn_relu_se_kernel(P),
        grid=(B,),
        in_specs=[
            pl.BlockSpec((1, P, Cout_p), lambda b: (b, 0, 0)),
            pl.BlockSpec((2, Cout_p), lambda b: (0, 0)),
            pl.BlockSpec((Cout_p, R_p), lambda b: (0, 0)),
            pl.BlockSpec((1, R_p), lambda b: (0, 0)),
            pl.BlockSpec((R_p, Cout_p), lambda b: (0, 0)),
            pl.BlockSpec((1, Cout_p), lambda b: (0, 0)),
        ],
        out_specs=pl.BlockSpec((1, P, Cout_p), lambda b: (b, 0, 0)),
        out_shape=jax.ShapeDtypeStruct((B, P, Cout_p), jnp.bfloat16),
        input_output_aliases={0: 0},   # reuse the conv_out HBM buffer for the output
        compiler_params=cparams,
        cost_estimate=k2_cost,
    )(conv_out, scale_shift, w1, b1, w2, b2)

    # ---- glue: drop channel padding, back to NCHW f32 (module contract) ----
    out = out[:, :, :Cout].reshape(B, Ho, Wo, Cout).astype(jnp.float32)
    return jnp.transpose(out, (0, 3, 1, 2))


def init_params(key, inp, oup):
    kc, k1, k1b, k2, k2b = jax.random.split(key, 5)
    red = oup // 2
    wconv = jax.random.normal(kc, (oup, inp, 3, 3), jnp.float32) * 0.1
    gamma = jnp.ones((oup,), jnp.float32)       # BatchNorm2d default affine init
    beta = jnp.zeros((oup,), jnp.float32)
    fc1_w = jax.random.normal(k1, (red, oup), jnp.float32) * 0.1
    fc1_b = jax.random.normal(k1b, (red,), jnp.float32) * 0.1
    fc2_w = jax.random.normal(k2, (oup, red), jnp.float32) * 0.1
    fc2_b = jax.random.normal(k2b, (oup,), jnp.float32) * 0.1
    return (wconv, gamma, beta, fc1_w, fc1_b, fc2_w, fc2_b)


if __name__ == "__main__":
    key = jax.random.PRNGKey(0)
    kx, kp = jax.random.split(key)

    B, Cin, H, W = 2, 4, 16, 16
    Cout = 8
    x = jax.random.normal(kx, (B, Cin, H, W), jnp.float32)
    params = init_params(kp, Cin, Cout)

    out = conv_bn_relu(x, params, kernel_size=3, stride=1, pad=1)
    jax.block_until_ready(out)
    assert out.shape == (B, Cout, H, W)
    assert bool(jnp.all(jnp.isfinite(out)))
    print("KERNEL_OK")
</pallas_src>

<mosaic_0001>
module attributes {stable_mosaic.version = 11 : i64} {
  func.func @kernel(%arg0: i32, %arg1: memref<2x2x128xf32, #tpu.memory_space<vmem>>, %arg2: memref<1x128xf32, #tpu.memory_space<vmem>>, %arg3: memref<1x128xf32, #tpu.memory_space<vmem>>, %arg4: memref<2x128xf32, #tpu.memory_space<vmem>>) attributes {dimension_semantics = [#tpu.dimension_semantics<arbitrary>], iteration_bounds = array<i64: 1>, scalar_prefetch = 0 : i64, scratch_operands = 0 : i64, tpu.core_type = #tpu.core_type<tc>, window_params = [{pipeline_mode = #tpu.pipeline_mode<synchronous>, transform_indices = @transform_0, window_bounds = array<i64: 2, 2, 128>}, {pipeline_mode = #tpu.pipeline_mode<synchronous>, transform_indices = @transform_1, window_bounds = array<i64: 1, 128>}, {pipeline_mode = #tpu.pipeline_mode<synchronous>, transform_indices = @transform_2, window_bounds = array<i64: 1, 128>}, {pipeline_mode = #tpu.pipeline_mode<synchronous>, transform_indices = @transform_3, window_bounds = array<i64: 2, 128>}]} {
    %c0 = arith.constant 0 : index
    %c0_0 = arith.constant 0 : index
    %c0_1 = arith.constant 0 : index
    %0 = vector.load %arg1[%c0, %c0_0, %c0_1] : memref<2x2x128xf32, #tpu.memory_space<vmem>>, vector<2x2x128xf32>
    %cst = arith.constant dense<0.000000e+00> : vector<2x128xf32>
    %1 = vector.multi_reduction <add>, %0, %cst [0] : vector<2x2x128xf32> to vector<2x128xf32>
    %2 = vector.extract_strided_slice %1 {offsets = [0, 0], sizes = [1, 128], strides = [1, 1]} : vector<2x128xf32> to vector<1x128xf32>
    %cst_2 = arith.constant 0.001953125 : f32
    %3 = vector.broadcast %cst_2 : f32 to vector<1x128xf32>
    %4 = arith.mulf %2, %3 : vector<1x128xf32>
    %5 = vector.extract_strided_slice %1 {offsets = [1, 0], sizes = [1, 128], strides = [1, 1]} : vector<2x128xf32> to vector<1x128xf32>
    %cst_3 = arith.constant 0.001953125 : f32
    %6 = vector.broadcast %cst_3 : f32 to vector<1x128xf32>
    %7 = arith.mulf %5, %6 : vector<1x128xf32>
    %8 = arith.mulf %4, %4 : vector<1x128xf32>
    %9 = arith.subf %7, %8 : vector<1x128xf32>
    %cst_4 = arith.constant 0.000000e+00 : f32
    %10 = vector.broadcast %cst_4 : f32 to vector<1x128xf32>
    %11 = arith.maximumf %9, %10 : vector<1x128xf32>
    %cst_5 = arith.constant 9.99999974E-6 : f32
    %12 = vector.broadcast %cst_5 : f32 to vector<1x128xf32>
    %13 = arith.addf %11, %12 : vector<1x128xf32>
    %14 = math.rsqrt %13 : vector<1x128xf32>
    %c0_6 = arith.constant 0 : index
    %c0_7 = arith.constant 0 : index
    %15 = vector.load %arg2[%c0_6, %c0_7] : memref<1x128xf32, #tpu.memory_space<vmem>>, vector<1x128xf32>
    %16 = arith.mulf %15, %14 : vector<1x128xf32>
    %c0_8 = arith.constant 0 : index
    %c0_9 = arith.constant 0 : index
    %17 = vector.load %arg3[%c0_8, %c0_9] : memref<1x128xf32, #tpu.memory_space<vmem>>, vector<1x128xf32>
    %18 = arith.mulf %4, %16 : vector<1x128xf32>
    %19 = arith.subf %17, %18 : vector<1x128xf32>
    %20 = tpu.concatenate %16, %19 in 0 : vector<1x128xf32>, vector<1x128xf32> -> vector<2x128xf32>
    %c0_10 = arith.constant 0 : index
    %c0_11 = arith.constant 0 : index
    %21 = vector.load %arg4[%c0_10, %c0_11] : memref<2x128xf32, #tpu.memory_space<vmem>>, vector<2x128xf32>
    tpu.vector_store %arg4[%c0_10, %c0_11], %20 {strides = array<i32>} : memref<2x128xf32, #tpu.memory_space<vmem>>, vector<2x128xf32>,
    return
  }
  func.func @transform_0(%arg0: i32) -> (i32, i32, i32) {
    %c0_i32 = arith.constant 0 : i32
    %c0_i32_0 = arith.constant 0 : i32
    %c0_i32_1 = arith.constant 0 : i32
    %c0_i32_2 = arith.constant 0 : i32
    return %c0_i32, %c0_i32_0, %c0_i32_1 : i32, i32, i32
  }
  func.func @transform_1(%arg0: i32) -> (i32, i32) {
    %c0_i32 = arith.constant 0 : i32
    %c0_i32_0 = arith.constant 0 : i32
    %c0_i32_1 = arith.constant 0 : i32
    return %c0_i32, %c0_i32_0 : i32, i32
  }
  func.func @transform_2(%arg0: i32) -> (i32, i32) {
    %c0_i32 = arith.constant 0 : i32
    %c0_i32_0 = arith.constant 0 : i32
    %c0_i32_1 = arith.constant 0 : i32
    return %c0_i32, %c0_i32_0 : i32, i32
  }
  func.func @transform_3(%arg0: i32) -> (i32, i32) {
    %c0_i32 = arith.constant 0 : i32
    %c0_i32_0 = arith.constant 0 : i32
    %c0_i32_1 = arith.constant 0 : i32
    return %c0_i32, %c0_i32_0 : i32, i32
  }
}

module attributes {stable_mosaic.version = 11 : i64} {
  func.func @kernel(%arg0: i32, %arg1: memref<1x18x18x4xbf16, #tpu.memory_space<vmem>>, %arg2: memref<9x4x128xbf16, #tpu.memory_space<vmem>>, %arg3: memref<1x256x128xbf16, #tpu.memory_space<vmem>>, %arg4: memref<1x2x128xf32, #tpu.memory_space<vmem>>) attributes {dimension_semantics = [#tpu.dimension_semantics<parallel>], iteration_bounds = array<i64: 2>, scalar_prefetch = 0 : i64, scratch_operands = 0 : i64, tpu.core_type = #tpu.core_type<tc>, window_params = [{transform_indices = @transform_0, window_bounds = array<i64: 1, 18, 18, 4>}, {pipeline_mode = #tpu.pipeline_mode<synchronous>, transform_indices = @transform_1, window_bounds = array<i64: 9, 4, 128>}, {transform_indices = @transform_2, window_bounds = array<i64: 1, 256, 128>}, {transform_indices = @transform_3, window_bounds = array<i64: 1, 2, 128>}]} {
    %c0 = arith.constant 0 : index
    %c0_0 = arith.constant 0 : index
    %c0_1 = arith.constant 0 : index
    %c0_2 = arith.constant 0 : index
    %0 = vector.load %arg1[%c0, %c0_0, %c0_1, %c0_2] : memref<1x18x18x4xbf16, #tpu.memory_space<vmem>>, vector<1x18x18x4xbf16>
    %1 = vector.shape_cast %0 : vector<1x18x18x4xbf16> to vector<18x18x4xbf16>
    %cst = arith.constant 0.000000e+00 : f32
    %2 = vector.broadcast %cst : f32 to vector<256x128xf32>
    %3 = vector.extract_strided_slice %1 {offsets = [0, 0, 0], sizes = [16, 16, 4], strides = [1, 1, 1]} : vector<18x18x4xbf16> to vector<16x16x4xbf16>
    %4 = vector.shape_cast %3 : vector<16x16x4xbf16> to vector<256x4xbf16>
    %c0_3 = arith.constant 0 : index
    %c0_4 = arith.constant 0 : index
    %c0_5 = arith.constant 0 : index
    %5 = vector.load %arg2[%c0_3, %c0_4, %c0_5] : memref<9x4x128xbf16, #tpu.memory_space<vmem>>, vector<1x4x128xbf16>
    %6 = vector.shape_cast %5 : vector<1x4x128xbf16> to vector<4x128xbf16>
    %cst_6 = arith.constant dense<0.000000e+00> : vector<256x128xf32>
    %7 = tpu.matmul %4, %6, %cst_6 {dimension_numbers = #tpu.dot_dimension_numbers<[1], [0], [0], [1], [0, 0, 1, 1], [], []>} : vector<256x4xbf16>, vector<4x128xbf16>, vector<256x128xf32> -> vector<256x128xf32>
    %8 = arith.addf %2, %7 : vector<256x128xf32>
    %9 = vector.extract_strided_slice %1 {offsets = [0, 1, 0], sizes = [16, 16, 4], strides = [1, 1, 1]} : vector<18x18x4xbf16> to vector<16x16x4xbf16>
    %10 = vector.shape_cast %9 : vector<16x16x4xbf16> to vector<256x4xbf16>
    %c1 = arith.constant 1 : index
    %c0_7 = arith.constant 0 : index
    %c0_8 = arith.constant 0 : index
    %11 = vector.load %arg2[%c1, %c0_7, %c0_8] : memref<9x4x128xbf16, #tpu.memory_space<vmem>>, vector<1x4x128xbf16>
    %12 = vector.shape_cast %11 : vector<1x4x128xbf16> to vector<4x128xbf16>
    %cst_9 = arith.constant dense<0.000000e+00> : vector<256x128xf32>
    %13 = tpu.matmul %10, %12, %cst_9 {dimension_numbers = #tpu.dot_dimension_numbers<[1], [0], [0], [1], [0, 0, 1, 1], [], []>} : vector<256x4xbf16>, vector<4x128xbf16>, vector<256x128xf32> -> vector<256x128xf32>
    %14 = arith.addf %8, %13 : vector<256x128xf32>
    %15 = vector.extract_strided_slice %1 {offsets = [0, 2, 0], sizes = [16, 16, 4], strides = [1, 1, 1]} : vector<18x18x4xbf16> to vector<16x16x4xbf16>
    %16 = vector.shape_cast %15 : vector<16x16x4xbf16> to vector<256x4xbf16>
    %c2 = arith.constant 2 : index
    %c0_10 = arith.constant 0 : index
    %c0_11 = arith.constant 0 : index
    %17 = vector.load %arg2[%c2, %c0_10, %c0_11] : memref<9x4x128xbf16, #tpu.memory_space<vmem>>, vector<1x4x128xbf16>
    %18 = vector.shape_cast %17 : vector<1x4x128xbf16> to vector<4x128xbf16>
    %cst_12 = arith.constant dense<0.000000e+00> : vector<256x128xf32>
    %19 = tpu.matmul %16, %18, %cst_12 {dimension_numbers = #tpu.dot_dimension_numbers<[1], [0], [0], [1], [0, 0, 1, 1], [], []>} : vector<256x4xbf16>, vector<4x128xbf16>, vector<256x128xf32> -> vector<256x128xf32>
    %20 = arith.addf %14, %19 : vector<256x128xf32>
    %21 = vector.extract_strided_slice %1 {offsets = [1, 0, 0], sizes = [16, 16, 4], strides = [1, 1, 1]} : vector<18x18x4xbf16> to vector<16x16x4xbf16>
    %22 = vector.shape_cast %21 : vector<16x16x4xbf16> to vector<256x4xbf16>
    %c3 = arith.constant 3 : index
    %c0_13 = arith.constant 0 : index
    %c0_14 = arith.constant 0 : index
    %23 = vector.load %arg2[%c3, %c0_13, %c0_14] : memref<9x4x128xbf16, #tpu.memory_space<vmem>>, vector<1x4x128xbf16>
    %24 = vector.shape_cast %23 : vector<1x4x128xbf16> to vector<4x128xbf16>
    %cst_15 = arith.constant dense<0.000000e+00> : vector<256x128xf32>
    %25 = tpu.matmul %22, %24, %cst_15 {dimension_numbers = #tpu.dot_dimension_numbers<[1], [0], [0], [1], [0, 0, 1, 1], [], []>} : vector<256x4xbf16>, vector<4x128xbf16>, vector<256x128xf32> -> vector<256x128xf32>
    %26 = arith.addf %20, %25 : vector<256x128xf32>
    %27 = vector.extract_strided_slice %1 {offsets = [1, 1, 0], sizes = [16, 16, 4], strides = [1, 1, 1]} : vector<18x18x4xbf16> to vector<16x16x4xbf16>
    %28 = vector.shape_cast %27 : vector<16x16x4xbf16> to vector<256x4xbf16>
    %c4 = arith.constant 4 : index
    %c0_16 = arith.constant 0 : index
    %c0_17 = arith.constant 0 : index
    %29 = vector.load %arg2[%c4, %c0_16, %c0_17] : memref<9x4x128xbf16, #tpu.memory_space<vmem>>, vector<1x4x128xbf16>
    %30 = vector.shape_cast %29 : vector<1x4x128xbf16> to vector<4x128xbf16>
    %cst_18 = arith.constant dense<0.000000e+00> : vector<256x128xf32>
    %31 = tpu.matmul %28, %30, %cst_18 {dimension_numbers = #tpu.dot_dimension_numbers<[1], [0], [0], [1], [0, 0, 1, 1], [], []>} : vector<256x4xbf16>, vector<4x128xbf16>, vector<256x128xf32> -> vector<256x128xf32>
    %32 = arith.addf %26, %31 : vector<256x128xf32>
    %33 = vector.extract_strided_slice %1 {offsets = [1, 2, 0], sizes = [16, 16, 4], strides = [1, 1, 1]} : vector<18x18x4xbf16> to vector<16x16x4xbf16>
    %34 = vector.shape_cast %33 : vector<16x16x4xbf16> to vector<256x4xbf16>
    %c5 = arith.constant 5 : index
    %c0_19 = arith.constant 0 : index
    %c0_20 = arith.constant 0 : index
    %35 = vector.load %arg2[%c5, %c0_19, %c0_20] : memref<9x4x128xbf16, #tpu.memory_space<vmem>>, vector<1x4x128xbf16>
    %36 = vector.shape_cast %35 : vector<1x4x128xbf16> to vector<4x128xbf16>
    %cst_21 = arith.constant dense<0.000000e+00> : vector<256x128xf32>
    %37 = tpu.matmul %34, %36, %cst_21 {dimension_numbers = #tpu.dot_dimension_numbers<[1], [0], [0], [1], [0, 0, 1, 1], [], []>} : vector<256x4xbf16>, vector<4x128xbf16>, vector<256x128xf32> -> vector<256x128xf32>
    %38 = arith.addf %32, %37 : vector<256x128xf32>
    %39 = vector.extract_strided_slice %1 {offsets = [2, 0, 0], sizes = [16, 16, 4], strides = [1, 1, 1]} : vector<18x18x4xbf16> to vector<16x16x4xbf16>
    %40 = vector.shape_cast %39 : vector<16x16x4xbf16> to vector<256x4xbf16>
    %c6 = arith.constant 6 : index
    %c0_22 = arith.constant 0 : index
    %c0_23 = arith.constant 0 : index
    %41 = vector.load %arg2[%c6, %c0_22, %c0_23] : memref<9x4x128xbf16, #tpu.memory_space<vmem>>, vector<1x4x128xbf16>
    %42 = vector.shape_cast %41 : vector<1x4x128xbf16> to vector<4x128xbf16>
    %cst_24 = arith.constant dense<0.000000e+00> : vector<256x128xf32>
    %43 = tpu.matmul %40, %42, %cst_24 {dimension_numbers = #tpu.dot_dimension_numbers<[1], [0], [0], [1], [0, 0, 1, 1], [], []>} : vector<256x4xbf16>, vector<4x128xbf16>, vector<256x128xf32> -> vector<256x128xf32>
    %44 = arith.addf %38, %43 : vector<256x128xf32>
    %45 = vector.extract_strided_slice %1 {offsets = [2, 1, 0], sizes = [16, 16, 4], strides = [1, 1, 1]} : vector<18x18x4xbf16> to vector<16x16x4xbf16>
    %46 = vector.shape_cast %45 : vector<16x16x4xbf16> to vector<256x4xbf16>
    %c7 = arith.constant 7 : index
    %c0_25 = arith.constant 0 : index
    %c0_26 = arith.constant 0 : index
    %47 = vector.load %arg2[%c7, %c0_25, %c0_26] : memref<9x4x128xbf16, #tpu.memory_space<vmem>>, vector<1x4x128xbf16>
    %48 = vector.shape_cast %47 : vector<1x4x128xbf16> to vector<4x128xbf16>
    %cst_27 = arith.constant dense<0.000000e+00> : vector<256x128xf32>
    %49 = tpu.matmul %46, %48, %cst_27 {dimension_numbers = #tpu.dot_dimension_numbers<[1], [0], [0], [1], [0, 0, 1, 1], [], []>} : vector<256x4xbf16>, vector<4x128xbf16>, vector<256x128xf32> -> vector<256x128xf32>
    %50 = arith.addf %44, %49 : vector<256x128xf32>
    %51 = vector.extract_strided_slice %1 {offsets = [2, 2, 0], sizes = [16, 16, 4], strides = [1, 1, 1]} : vector<18x18x4xbf16> to vector<16x16x4xbf16>
    %52 = vector.shape_cast %51 : vector<16x16x4xbf16> to vector<256x4xbf16>
    %c8 = arith.constant 8 : index
    %c0_28 = arith.constant 0 : index
    %c0_29 = arith.constant 0 : index
    %53 = vector.load %arg2[%c8, %c0_28, %c0_29] : memref<9x4x128xbf16, #tpu.memory_space<vmem>>, vector<1x4x128xbf16>
    %54 = vector.shape_cast %53 : vector<1x4x128xbf16> to vector<4x128xbf16>
    %cst_30 = arith.constant dense<0.000000e+00> : vector<256x128xf32>
    %55 = tpu.matmul %52, %54, %cst_30 {dimension_numbers = #tpu.dot_dimension_numbers<[1], [0], [0], [1], [0, 0, 1, 1], [], []>} : vector<256x4xbf16>, vector<4x128xbf16>, vector<256x128xf32> -> vector<256x128xf32>
    %56 = arith.addf %50, %55 : vector<256x128xf32>
    %cst_31 = arith.constant dense<0.000000e+00> : vector<128xf32>
    %57 = vector.multi_reduction <add>, %56, %cst_31 [0] : vector<256x128xf32> to vector<128xf32>
    %58 = vector.shape_cast %57 : vector<128xf32> to vector<1x128xf32>
    %59 = arith.mulf %56, %56 : vector<256x128xf32>
    %cst_32 = arith.constant dense<0.000000e+00> : vector<128xf32>
    %60 = vector.multi_reduction <add>, %59, %cst_32 [0] : vector<256x128xf32> to vector<128xf32>
    %61 = vector.shape_cast %60 : vector<128xf32> to vector<1x128xf32>
    %62 = tpu.concatenate %58, %61 in 0 : vector<1x128xf32>, vector<1x128xf32> -> vector<2x128xf32>
    %c0_33 = arith.constant 0 : index
    %c0_34 = arith.constant 0 : index
    %c0_35 = arith.constant 0 : index
    %63 = vector.load %arg4[%c0_33, %c0_34, %c0_35] : memref<1x2x128xf32, #tpu.memory_space<vmem>>, vector<1x2x128xf32>
    %64 = vector.shape_cast %63 : vector<1x2x128xf32> to vector<2x128xf32>
    %65 = vector.shape_cast %62 : vector<2x128xf32> to vector<1x2x128xf32>
    tpu.vector_store %arg4[%c0_33, %c0_34, %c0_35], %65 {strides = array<i32>} : memref<1x2x128xf32, #tpu.memory_space<vmem>>, vector<1x2x128xf32>,
    %66 = arith.truncf %56 : vector<256x128xf32> to vector<256x128xbf16>
    %c0_36 = arith.constant 0 : index
    %c0_37 = arith.constant 0 : index
    %c0_38 = arith.constant 0 : index
    %67 = vector.load %arg3[%c0_36, %c0_37, %c0_38] : memref<1x256x128xbf16, #tpu.memory_space<vmem>>, vector<1x256x128xbf16>
    %68 = vector.shape_cast %67 : vector<1x256x128xbf16> to vector<256x128xbf16>
    %69 = vector.shape_cast %66 : vector<256x128xbf16> to vector<1x256x128xbf16>
    tpu.vector_store %arg3[%c0_36, %c0_37, %c0_38], %69 {strides = array<i32>} : memref<1x256x128xbf16, #tpu.memory_space<vmem>>, vector<1x256x128xbf16>,
    return
  }
  func.func @transform_0(%arg0: i32) -> (i32, i32, i32, i32) {
    %c0_i32 = arith.constant 0 : i32
    %c0_i32_0 = arith.constant 0 : i32
    %c0_i32_1 = arith.constant 0 : i32
    %c0_i32_2 = arith.constant 0 : i32
    return %arg0, %c0_i32, %c0_i32_0, %c0_i32_1 : i32, i32, i32, i32
  }
  func.func @transform_1(%arg0: i32) -> (i32, i32, i32) {
    %c0_i32 = arith.constant 0 : i32
    %c0_i32_0 = arith.constant 0 : i32
    %c0_i32_1 = arith.constant 0 : i32
    %c0_i32_2 = arith.constant 0 : i32
    return %c0_i32, %c0_i32_0, %c0_i32_1 : i32, i32, i32
  }
  func.func @transform_2(%arg0: i32) -> (i32, i32, i32) {
    %c0_i32 = arith.constant 0 : i32
    %c0_i32_0 = arith.constant 0 : i32
    %c0_i32_1 = arith.constant 0 : i32
    return %arg0, %c0_i32, %c0_i32_0 : i32, i32, i32
  }
  func.func @transform_3(%arg0: i32) -> (i32, i32, i32) {
    %c0_i32 = arith.constant 0 : i32
    %c0_i32_0 = arith.constant 0 : i32
    %c0_i32_1 = arith.constant 0 : i32
    return %arg0, %c0_i32, %c0_i32_0 : i32, i32, i32
  }
}

module attributes {stable_mosaic.version = 11 : i64} {
  func.func @kernel(%arg0: i32, %arg1: memref<1x256x128xbf16, #tpu.memory_space<vmem>>, %arg2: memref<2x128xf32, #tpu.memory_space<vmem>>, %arg3: memref<128x128xbf16, #tpu.memory_space<vmem>>, %arg4: memref<1x128xf32, #tpu.memory_space<vmem>>, %arg5: memref<128x128xbf16, #tpu.memory_space<vmem>>, %arg6: memref<1x128xf32, #tpu.memory_space<vmem>>, %arg7: memref<1x256x128xbf16, #tpu.memory_space<vmem>>) attributes {dimension_semantics = [#tpu.dimension_semantics<parallel>], iteration_bounds = array<i64: 2>, scalar_prefetch = 0 : i64, scratch_operands = 0 : i64, tpu.core_type = #tpu.core_type<tc>, window_params = [{transform_indices = @transform_0, window_bounds = array<i64: 1, 256, 128>}, {pipeline_mode = #tpu.pipeline_mode<synchronous>, transform_indices = @transform_1, window_bounds = array<i64: 2, 128>}, {pipeline_mode = #tpu.pipeline_mode<synchronous>, transform_indices = @transform_2, window_bounds = array<i64: 128, 128>}, {pipeline_mode = #tpu.pipeline_mode<synchronous>, transform_indices = @transform_3, window_bounds = array<i64: 1, 128>}, {pipeline_mode = #tpu.pipeline_mode<synchronous>, transform_indices = @transform_4, window_bounds = array<i64: 128, 128>}, {pipeline_mode = #tpu.pipeline_mode<synchronous>, transform_indices = @transform_5, window_bounds = array<i64: 1, 128>}, {transform_indices = @transform_6, window_bounds = array<i64: 1, 256, 128>}]} {
    %c0 = arith.constant 0 : index
    %c0_0 = arith.constant 0 : index
    %c0_1 = arith.constant 0 : index
    %0 = vector.load %arg1[%c0, %c0_0, %c0_1] : memref<1x256x128xbf16, #tpu.memory_space<vmem>>, vector<1x256x128xbf16>
    %1 = vector.shape_cast %0 : vector<1x256x128xbf16> to vector<256x128xbf16>
    %2 = arith.extf %1 : vector<256x128xbf16> to vector<256x128xf32>
    %c0_2 = arith.constant 0 : index
    %c0_3 = arith.constant 0 : index
    %3 = vector.load %arg2[%c0_2, %c0_3] : memref<2x128xf32, #tpu.memory_space<vmem>>, vector<1x128xf32>
    %c1 = arith.constant 1 : index
    %c0_4 = arith.constant 0 : index
    %4 = vector.load %arg2[%c1, %c0_4] : memref<2x128xf32, #tpu.memory_space<vmem>>, vector<1x128xf32>
    %5 = vector.broadcast %3 : vector<1x128xf32> to vector<256x128xf32>
    %6 = arith.mulf %2, %5 : vector<256x128xf32>
    %7 = vector.broadcast %4 : vector<1x128xf32> to vector<256x128xf32>
    %8 = arith.addf %6, %7 : vector<256x128xf32>
    %cst = arith.constant 0.000000e+00 : f32
    %9 = vector.broadcast %cst : f32 to vector<256x128xf32>
    %10 = arith.maximumf %8, %9 : vector<256x128xf32>
    %cst_5 = arith.constant dense<0.000000e+00> : vector<128xf32>
    %11 = vector.multi_reduction <add>, %10, %cst_5 [0] : vector<256x128xf32> to vector<128xf32>
    %12 = vector.shape_cast %11 : vector<128xf32> to vector<1x128xf32>
    %cst_6 = arith.constant 3.906250e-03 : f32
    %13 = vector.broadcast %cst_6 : f32 to vector<1x128xf32>
    %14 = arith.mulf %12, %13 : vector<1x128xf32>
    %15 = arith.truncf %14 : vector<1x128xf32> to vector<1x128xbf16>
    %c0_7 = arith.constant 0 : index
    %c0_8 = arith.constant 0 : index
    %16 = vector.load %arg3[%c0_7, %c0_8] : memref<128x128xbf16, #tpu.memory_space<vmem>>, vector<128x128xbf16>
    %cst_9 = arith.constant dense<0.000000e+00> : vector<1x128xf32>
    %17 = tpu.matmul %15, %16, %cst_9 {dimension_numbers = #tpu.dot_dimension_numbers<[1], [0], [0], [1], [0, 0, 1, 1], [], []>} : vector<1x128xbf16>, vector<128x128xbf16>, vector<1x128xf32> -> vector<1x128xf32>
    %c0_10 = arith.constant 0 : index
    %c0_11 = arith.constant 0 : index
    %18 = vector.load %arg4[%c0_10, %c0_11] : memref<1x128xf32, #tpu.memory_space<vmem>>, vector<1x128xf32>
    %19 = arith.addf %17, %18 : vector<1x128xf32>
    %cst_12 = arith.constant 0.000000e+00 : f32
    %20 = vector.broadcast %cst_12 : f32 to vector<1x128xf32>
    %21 = arith.maximumf %19, %20 : vector<1x128xf32>
    %22 = arith.truncf %21 : vector<1x128xf32> to vector<1x128xbf16>
    %c0_13 = arith.constant 0 : index
    %c0_14 = arith.constant 0 : index
    %23 = vector.load %arg5[%c0_13, %c0_14] : memref<128x128xbf16, #tpu.memory_space<vmem>>, vector<128x128xbf16>
    %cst_15 = arith.constant dense<0.000000e+00> : vector<1x128xf32>
    %24 = tpu.matmul %22, %23, %cst_15 {dimension_numbers = #tpu.dot_dimension_numbers<[1], [0], [0], [1], [0, 0, 1, 1], [], []>} : vector<1x128xbf16>, vector<128x128xbf16>, vector<1x128xf32> -> vector<1x128xf32>
    %c0_16 = arith.constant 0 : index
    %c0_17 = arith.constant 0 : index
    %25 = vector.load %arg6[%c0_16, %c0_17] : memref<1x128xf32, #tpu.memory_space<vmem>>, vector<1x128xf32>
    %26 = arith.addf %24, %25 : vector<1x128xf32>
    %27 = arith.negf %26 : vector<1x128xf32>
    %28 = math.exp %27 : vector<1x128xf32>
    %cst_18 = arith.constant 1.000000e+00 : f32
    %29 = vector.broadcast %cst_18 : f32 to vector<1x128xf32>
    %30 = arith.addf %29, %28 : vector<1x128xf32>
    %31 = arith.divf %29, %30 : vector<1x128xf32>
    %32 = vector.broadcast %31 : vector<1x128xf32> to vector<256x128xf32>
    %33 = arith.mulf %10, %32 : vector<256x128xf32>
    %34 = arith.truncf %33 : vector<256x128xf32> to vector<256x128xbf16>
    %c0_19 = arith.constant 0 : index
    %c0_20 = arith.constant 0 : index
    %c0_21 = arith.constant 0 : index
    %35 = vector.load %arg7[%c0_19, %c0_20, %c0_21] : memref<1x256x128xbf16, #tpu.memory_space<vmem>>, vector<1x256x128xbf16>
    %36 = vector.shape_cast %35 : vector<1x256x128xbf16> to vector<256x128xbf16>
    %37 = vector.shape_cast %34 : vector<256x128xbf16> to vector<1x256x128xbf16>
    tpu.vector_store %arg7[%c0_19, %c0_20, %c0_21], %37 {strides = array<i32>} : memref<1x256x128xbf16, #tpu.memory_space<vmem>>, vector<1x256x128xbf16>,
    return
  }
  func.func @transform_0(%arg0: i32) -> (i32, i32, i32) {
    %c0_i32 = arith.constant 0 : i32
    %c0_i32_0 = arith.constant 0 : i32
    %c0_i32_1 = arith.constant 0 : i32
    return %arg0, %c0_i32, %c0_i32_0 : i32, i32, i32
  }
  func.func @transform_1(%arg0: i32) -> (i32, i32) {
    %c0_i32 = arith.constant 0 : i32
    %c0_i32_0 = arith.constant 0 : i32
    %c0_i32_1 = arith.constant 0 : i32
    return %c0_i32, %c0_i32_0 : i32, i32
  }
  func.func @transform_2(%arg0: i32) -> (i32, i32) {
    %c0_i32 = arith.constant 0 : i32
    %c0_i32_0 = arith.constant 0 : i32
    %c0_i32_1 = arith.constant 0 : i32
    return %c0_i32, %c0_i32_0 : i32, i32
  }
  func.func @transform_3(%arg0: i32) -> (i32, i32) {
    %c0_i32 = arith.constant 0 : i32
    %c0_i32_0 = arith.constant 0 : i32
    %c0_i32_1 = arith.constant 0 : i32
    return %c0_i32, %c0_i32_0 : i32, i32
  }
  func.func @transform_4(%arg0: i32) -> (i32, i32) {
    %c0_i32 = arith.constant 0 : i32
    %c0_i32_0 = arith.constant 0 : i32
    %c0_i32_1 = arith.constant 0 : i32
    return %c0_i32, %c0_i32_0 : i32, i32
  }
  func.func @transform_5(%arg0: i32) -> (i32, i32) {
    %c0_i32 = arith.constant 0 : i32
    %c0_i32_0 = arith.constant 0 : i32
    %c0_i32_1 = arith.constant 0 : i32
    return %c0_i32, %c0_i32_0 : i32, i32
  }
  func.func @transform_6(%arg0: i32) -> (i32, i32, i32) {
    %c0_i32 = arith.constant 0 : i32
    %c0_i32_0 = arith.constant 0 : i32
    %c0_i32_1 = arith.constant 0 : i32
    return %arg0, %c0_i32, %c0_i32_0 : i32, i32, i32
  }
}

</mosaic_0001>

<llo_original>
// kernel: conv_bn_relu.4
$region0: #{conv_bn_relu.4}
  #allocation0 [shape = 'u32[]', space=smem, size = 0x4, offset = 0x4, fixed_abs, tag = 'smem constant byte address 0x4 - core index']
  #allocation1 [shape = 'u32[144,128]{1,0:T(1,128)}', space=vmem, size = 0x12000, scoped, tag = 'internal scratch']
  %s0 = inlined_call_operand.vmem [shape: f32[2,2,128], index: 0, kind: input, shape index: {}]
  %s1 = inlined_call_operand.vmem [shape: f32[1,128], index: 1, kind: input, shape index: {}]
  %s2 = inlined_call_operand.vmem [shape: f32[1,128], index: 2, kind: input, shape index: {}]
  %s3 = inlined_call_operand.hbm [shape: f32[2,128], index: 3, kind: output, shape index: {}]
  %s4 = sld [smem:[#allocation0]]
  $region22: #{conv_bn_relu.4} parent=0
    _
  %s6 = ssub.s32 1, %s4
  %s7 = scalar_select 0, %s6, %s4
  $region1: #{conv_bn_relu.4} parent=0
    #allocation2 [shape = 'u8[1024]{0}', space=vmem, size = 0x400, scoped, tag = 'output window, operand 0, single buffered']
    #allocation3 [shape = 's32[1]{0}', space=sflag, size = 0x4, scoped, tag = 'scoped memory for conv_bn_relu.4']
    %8 = vsyncpa [#allocation3], 0
    // Predicated region
    $region2: #{conv_bn_relu.4} parent=1 // pred_check
      _
    $region3: #{conv_bn_relu.4} parent=1 // pred_check_branch
      %10 = sbr.rel (0) target = $region5
    $region4: #{conv_bn_relu.4} parent=1 // pred_region
      _
    $region5: #{conv_bn_relu.4} parent=1 // pred_fallthru
      _
    // Predicated region
    $region6: #{conv_bn_relu.4} parent=1 // pred_check
      _
    $region7: #{conv_bn_relu.4} parent=1 // pred_check_branch
      %12 = sbr.rel (0) target = $region9
    $region8: #{conv_bn_relu.4} parent=1 // pred_region
      _
    $region9: #{conv_bn_relu.4} parent=1 // pred_fallthru
      _
    // Predicated region
    $region10: #{conv_bn_relu.4} parent=1 // pred_check
      _
    $region11: #{conv_bn_relu.4} parent=1 // pred_check_branch
      %14 = sbr.rel (0) target = $region13
    $region12: #{conv_bn_relu.4} parent=1 // pred_region
      _
    $region13: #{conv_bn_relu.4} parent=1 // pred_fallthru
      _
    %v15 = vld [vmem:[%s0] sm:$0x3]
    %v16 = vld [vmem:[%s0 + $0x2] sm:$0x3]
    %vm17 = vcmask 1041408
    %v18 = vsel %vm17, %v15, 0.0
    %v19 = vsel %vm17, %v16, 0.0
    %v20 = vadd.f32 %v18, %v19
    %v21 = vmul.f32 %v20, 0.001953125
    %v22 = vmul.f32 %v21, %v21
    %v24 = vrot.slane %v22, 7
    %v26 = vsub.f32 %v21, %v24
    %v27 = vmax.f32 %v26, 0.0
    %v28 = vadd.f32 %v27, 1e-05
    %v29 = vrsqrt.pop %v28
    %v30 = vld [vmem:[%s1] sm:$0x1]
    %v33 = vunpack.c.l.s4 1966171168
    %v34 = vunpack.c.0.s8 %v33
    %v35 = vlaneseq
    %v36 = vshrl.u32 %v35, 7
    %v37 = vsub.s32 %v34, %v36
    %v38 = vrot.slane %v29, %v37
    %v39 = vcombine.high %v38, %v38
    %v41 = vunpack.c.l.s4 1966171168
    %v42 = vunpack.c.0.s8 %v41
    %v43 = vlaneseq
    %v44 = vshrl.u32 %v43, 7
    %v45 = vsub.s32 %v42, %v44
    %v46 = vrot.slane %v39, %v45
    %v48 = vmul.f32 %v30, %v46
    %v49 = vld [vmem:[%s2] sm:$0x1]
    %v50 = vmul.f32 %v21, %v48
    %v51 = vsub.f32 %v49, %v50
    %v53 = vlaneseq
    %v54 = vshrl.u32 %v53, 7
    %v55 = vsub.s32 0, %v54
    %v56 = vrot.slane %v51, %v55
    %vm58 = vcmask 1040384
    %v59 = vsel %vm58, %v48, %v56
    %60 = vst [vmem:[#allocation2] sm:$0x3] %v59
    // Predicated region
    $region14: #{conv_bn_relu.4} parent=1 // pred_check
      _
    $region15: #{conv_bn_relu.4} parent=1 // pred_check_branch
      %62 = sbr.rel (0) target = $region17
    $region16: #{conv_bn_relu.4} parent=1 // pred_region
      %s64 = ssub.s32 32, 32
      %65 = vsyncadd [#allocation3], %s64
      %s67 = sshll.u32 [#allocation2], 4
      %s68 = int_to_ptr.vmem [resolvable:$true] %s67
      %70 = dma.vmem_to_hbm [thread:$0]  %s68, 32, %s3, [#allocation3]
    $region17: #{conv_bn_relu.4} parent=1 // pred_fallthru
      _
    // Predicated region
    $region18: #{conv_bn_relu.4} parent=1 // pred_check
      _
    $region19: #{conv_bn_relu.4} parent=1 // pred_check_branch
      %72 = sbr.rel (0) target = $region21
    $region20: #{conv_bn_relu.4} parent=1 // pred_region
      %73 = dma.done [#allocation3], 32
    $region21: #{conv_bn_relu.4} parent=1 // pred_fallthru
      _
    %74 = vsyncpa [#allocation3], 1

// kernel: conv_bn_relu.5
$region0: #{conv_bn_relu.5}
  #allocation0 [shape = 'u32[]', space=smem, size = 0x4, offset = 0x4, fixed_abs, tag = 'smem constant byte address 0x4 - core index']
  #allocation1 [shape = 'u32[144,128]{1,0:T(1,128)}', space=vmem, size = 0x12000, scoped, tag = 'internal scratch']
  %s0 = inlined_call_operand.hbm [shape: bf16[2,256,128], index: 0, kind: input, shape index: {}, may-alias: {0,6}]
  %s1 = inlined_call_operand.hbm [shape: f32[2,128], index: 1, kind: input, shape index: {}]
  %s2 = inlined_call_operand.hbm [shape: bf16[128,128], index: 2, kind: input, shape index: {}]
  %s3 = inlined_call_operand.hbm [shape: f32[1,128], index: 3, kind: input, shape index: {}]
  %s4 = inlined_call_operand.hbm [shape: bf16[128,128], index: 4, kind: input, shape index: {}]
  %s5 = inlined_call_operand.hbm [shape: f32[1,128], index: 5, kind: input, shape index: {}]
  %s6 = inlined_call_operand.hbm [shape: bf16[2,256,128], index: 6, kind: output, shape index: {}, may-alias: {0,6}]
  %s7 = sld [smem:[#allocation0]]
  $region81: #{conv_bn_relu.5} parent=0
    _
  %s9 = ssub.s32 1, %s7
  %s10 = scalar_select 0, %s9, %s7
  $region1: #{conv_bn_relu.5} parent=0
    #allocation2 [shape = 'u8[131072]{0}', space=vmem, size = 0x20000, scoped, tag = 'input window, operand 0']
    #allocation3 [shape = 's32[2]{0}', space=sflag, size = 0x8, scoped, tag = 'scoped memory for conv_bn_relu.5']
    #allocation4 [shape = 's32[2]{0}', space=sflag, size = 0x8, scoped, tag = 'scoped memory for conv_bn_relu.5']
    #allocation5 [shape = 'u8[1024]{0}', space=vmem, size = 0x400, scoped, tag = 'input window, operand 1, single buffered']
    #allocation6 [shape = 's32[1]{0}', space=sflag, size = 0x4, scoped, tag = 'scoped memory for conv_bn_relu.5']
    #allocation7 [shape = 'u8[32768]{0}', space=vmem, size = 0x8000, scoped, tag = 'input window, operand 2, single buffered']
    #allocation8 [shape = 'u8[512]{0}', space=vmem, size = 0x400, scoped, tag = 'input window, operand 3, single buffered']
    #allocation9 [shape = 's32[1]{0}', space=sflag, size = 0x4, scoped, tag = 'scoped memory for conv_bn_relu.5']
    #allocation10 [shape = 'u8[32768]{0}', space=vmem, size = 0x8000, scoped, tag = 'input window, operand 4, single buffered']
    #allocation11 [shape = 'u8[512]{0}', space=vmem, size = 0x400, scoped, tag = 'input window, operand 5, single buffered']
    #allocation12 [shape = 's32[1]{0}', space=sflag, size = 0x4, scoped, tag = 'scoped memory for conv_bn_relu.5']
    #allocation13 [shape = 'u8[131072]{0}', space=vmem, size = 0x20000, scoped, tag = 'output window, operand 0']
    %11 = vsyncpa [#allocation3], 0
    %s12 = scalar_lea.sflag [#allocation3], 1
    %13 = vsyncpa %s12, 0
    %14 = vsyncpa [#allocation6], 0
    %15 = vsyncpa [#allocation9], 0
    %16 = vsyncpa [#allocation12], 0
    %17 = vsyncpa [#allocation4], 0
    %s18 = scalar_lea.sflag [#allocation4], 1
    %19 = vsyncpa %s18, 0
    loop: start=0, step=1, limit=4
    $region2: #{conv_bn_relu.5} parent=1 // loop_pre_header
      _
    $region3: #{conv_bn_relu.5} parent=1 // loop_header
      %s21 = sphi 0, %s25
      %p22 = scmp.ge.s32.totalorder %s21, 4
      %s31 = sphi 0, %s33
      %s34 = sphi 0, %s31
      %s35 = sphi 0, %s34
      %s51 = sphi 0, %s35
      %s55 = sphi 0, %s55
      %s57 = sphi 0, %s55
      %s58 = sphi 0, %s57
      %s72 = sphi 0, %s58
      %s76 = sphi 0, %s76
      %s78 = sphi 0, %s76
      %s79 = sphi 0, %s78
      %s93 = sphi 0, %s79
      %s97 = sphi 0, %s97
      %s99 = sphi 0, %s97
      %s100 = sphi 0, %s99
      %s114 = sphi 0, %s100
      %s118 = sphi 0, %s118
      %s120 = sphi 0, %s118
      %s121 = sphi 0, %s120
      %s135 = sphi 0, %s121
      %s139 = sphi 0, %s139
      %s141 = sphi 0, %s139
      %s142 = sphi 0, %s141
      %s156 = sphi 0, %s142
      %s162 = sphi 0, %s164
      %s165 = sphi 0, %s162
      %s166 = sphi 0, %s165
      %s182 = sphi 0, %s166
    $region4: #{conv_bn_relu.5} parent=1 // loop_header_branch
      %24 = sbr.rel (%p22) target = $region8
    $region5: #{conv_bn_relu.5} parent=1 // loop_body
      %s26 = ssub.s32 %s21, 1
      %s27 = ssub.s32 %s21, 2
      %s28 = sadd.s32 %s21, 1
      %s29 = ssub.s32 %s21, %s28
      %p30 = scmp.eq.s32.totalorder %s29, 0
      %s32 = sadd.s32 %s31, 1
      %s33 = scalar_select %p30, %s31, %s32
      %p36 = pneg %p30
      %p37 = scmp.eq.s32.totalorder %s21, 1
      %p38 = por %p36, %p37
      %p39 = scmp.ne.s32.totalorder %s31, %s34
      %p40 = scmp.eq.s32.totalorder %s21, 0
      %p41 = por %p39, %p40
      %p42 = scmp.ne.s32.totalorder %s31, %s34
      %p43 = scmp.eq.s32.totalorder %s26, 1
      %p44 = por %p42, %p43
      %p45 = scmp.ne.s32.totalorder %s34, %s35
      %p46 = scmp.eq.s32.totalorder %s26, 0
      %p47 = por %p45, %p46
      %p48 = scmp.ne.s32.totalorder %s34, %s35
      %p49 = scmp.eq.s32.totalorder %s27, 1
      %p50 = por %p48, %p49
      %p52 = scmp.ne.s32.totalorder %s35, %s51
      %p53 = scmp.eq.s32.totalorder %s27, 0
      %p54 = por %p52, %p53
      %s56 = sadd.s32 %s55, 1
      %p59 = scmp.eq.s32.totalorder %s21, 1
      %p60 = scmp.ne.s32.totalorder %s55, %s57
      %p61 = scmp.eq.s32.totalorder %s21, 0
      %p62 = por %p60, %p61
      %p63 = scmp.ne.s32.totalorder %s55, %s57
      %p64 = scmp.eq.s32.totalorder %s26, 1
      %p65 = por %p63, %p64
      %p66 = scmp.ne.s32.totalorder %s57, %s58
      %p67 = scmp.eq.s32.totalorder %s26, 0
      %p68 = por %p66, %p67
      %p69 = scmp.ne.s32.totalorder %s57, %s58
      %p70 = scmp.eq.s32.totalorder %s27, 1
      %p71 = por %p69, %p70
      %p73 = scmp.ne.s32.totalorder %s58, %s72
      %p74 = scmp.eq.s32.totalorder %s27, 0
      %p75 = por %p73, %p74
      %s77 = sadd.s32 %s76, 1
      %p80 = scmp.eq.s32.totalorder %s21, 1
      %p81 = scmp.ne.s32.totalorder %s76, %s78
      %p82 = scmp.eq.s32.totalorder %s21, 0
      %p83 = por %p81, %p82
      %p84 = scmp.ne.s32.totalorder %s76, %s78
      %p85 = scmp.eq.s32.totalorder %s26, 1
      %p86 = por %p84, %p85
      %p87 = scmp.ne.s32.totalorder %s78, %s79
      %p88 = scmp.eq.s32.totalorder %s26, 0
      %p89 = por %p87, %p88
      %p90 = scmp.ne.s32.totalorder %s78, %s79
      %p91 = scmp.eq.s32.totalorder %s27, 1
      %p92 = por %p90, %p91
      %p94 = scmp.ne.s32.totalorder %s79, %s93
      %p95 = scmp.eq.s32.totalorder %s27, 0
      %p96 = por %p94, %p95
      %s98 = sadd.s32 %s97, 1
      %p101 = scmp.eq.s32.totalorder %s21, 1
      %p102 = scmp.ne.s32.totalorder %s97, %s99
      %p103 = scmp.eq.s32.totalorder %s21, 0
      %p104 = por %p102, %p103
      %p105 = scmp.ne.s32.totalorder %s97, %s99
      %p106 = scmp.eq.s32.totalorder %s26, 1
      %p107 = por %p105, %p106
      %p108 = scmp.ne.s32.totalorder %s99, %s100
      %p109 = scmp.eq.s32.totalorder %s26, 0
      %p110 = por %p108, %p109
      %p111 = scmp.ne.s32.totalorder %s99, %s100
      %p112 = scmp.eq.s32.totalorder %s27, 1
      %p113 = por %p111, %p112
      %p115 = scmp.ne.s32.totalorder %s100, %s114
      %p116 = scmp.eq.s32.totalorder %s27, 0
      %p117 = por %p115, %p116
      %s119 = sadd.s32 %s118, 1
      %p122 = scmp.eq.s32.totalorder %s21, 1
      %p123 = scmp.ne.s32.totalorder %s118, %s120
      %p124 = scmp.eq.s32.totalorder %s21, 0
      %p125 = por %p123, %p124
      %p126 = scmp.ne.s32.totalorder %s118, %s120
      %p127 = scmp.eq.s32.totalorder %s26, 1
      %p128 = por %p126, %p127
      %p129 = scmp.ne.s32.totalorder %s120, %s121
      %p130 = scmp.eq.s32.totalorder %s26, 0
      %p131 = por %p129, %p130
      %p132 = scmp.ne.s32.totalorder %s120, %s121
      %p133 = scmp.eq.s32.totalorder %s27, 1
      %p134 = por %p132, %p133
      %p136 = scmp.ne.s32.totalorder %s121, %s135
      %p137 = scmp.eq.s32.totalorder %s27, 0
      %p138 = por %p136, %p137
      %s140 = sadd.s32 %s139, 1
      %p143 = scmp.eq.s32.totalorder %s21, 1
      %p144 = scmp.ne.s32.totalorder %s139, %s141
      %p145 = scmp.eq.s32.totalorder %s21, 0
      %p146 = por %p144, %p145
      %p147 = scmp.ne.s32.totalorder %s139, %s141
      %p148 = scmp.eq.s32.totalorder %s26, 1
      %p149 = por %p147, %p148
      %p150 = scmp.ne.s32.totalorder %s141, %s142
      %p151 = scmp.eq.s32.totalorder %s26, 0
      %p152 = por %p150, %p151
      %p153 = scmp.ne.s32.totalorder %s141, %s142
      %p154 = scmp.eq.s32.totalorder %s27, 1
      %p155 = por %p153, %p154
      %p157 = scmp.ne.s32.totalorder %s142, %s156
      %p158 = scmp.eq.s32.totalorder %s27, 0
      %p159 = por %p157, %p158
      %s160 = ssub.s32 %s21, %s28
      %p161 = scmp.eq.s32.totalorder %s160, 0
      %s163 = sadd.s32 %s162, 1
      %s164 = scalar_select %p161, %s162, %s163
      %p167 = pneg %p161
      %p168 = scmp.eq.s32.totalorder %s21, 1
      %p169 = por %p167, %p168
      %p170 = scmp.ne.s32.totalorder %s162, %s165
      %p171 = scmp.eq.s32.totalorder %s21, 0
      %p172 = por %p170, %p171
      %p173 = scmp.ne.s32.totalorder %s162, %s165
      %p174 = scmp.eq.s32.totalorder %s26, 1
      %p175 = por %p173, %p174
      %p176 = scmp.ne.s32.totalorder %s165, %s166
      %p177 = scmp.eq.s32.totalorder %s26, 0
      %p178 = por %p176, %p177
      %p179 = scmp.ne.s32.totalorder %s165, %s166
      %p180 = scmp.eq.s32.totalorder %s27, 1
      %p181 = por %p179, %p180
      %p183 = scmp.ne.s32.totalorder %s166, %s182
      %p184 = scmp.eq.s32.totalorder %s27, 0
      %p185 = por %p183, %p184
      %p186 = scmp.le.s32.totalorder 1, %s21
      %p187 = scmp.lt.s32.totalorder %s21, 3
      %p188 = pnand %p186, %p187
      %p189 = pneg %p188
      // Predicated region
      $region9: #{conv_bn_relu.5} parent=5 // pred_check
        _
      $region10: #{conv_bn_relu.5} parent=5 // pred_check_branch
        %191 = sbr.rel (%p188) target = $region12
      $region11: #{conv_bn_relu.5} parent=5 // pred_region
        %s192 = ssub.s32 %s21, 1
        // Predicated region
        $region13: #{conv_bn_relu.5} parent=11 // pred_check
          %p193 = pneg %p68
        $region14: #{conv_bn_relu.5} parent=11 // pred_check_branch
          %195 = sbr.rel (%p193) target = $region16
        $region15: #{conv_bn_relu.5} parent=11 // pred_region
          %s197 = ssub.s32 32, 32
          %198 = vsyncadd [#allocation6], %s197
          %s200 = sshll.u32 [#allocation5], 4
          %s201 = int_to_ptr.vmem [resolvable:$true] %s200
          %203 = dma.hbm_to_vmem [thread:$0]  %s1, 32, %s201, [#allocation6]
        $region16: #{conv_bn_relu.5} parent=11 // pred_fallthru
          _
        // Predicated region
        $region17: #{conv_bn_relu.5} parent=11 // pred_check
          %p204 = pneg %p89
        $region18: #{conv_bn_relu.5} parent=11 // pred_check_branch
          %206 = sbr.rel (%p204) target = $region20
        $region19: #{conv_bn_relu.5} parent=11 // pred_region
          %s208 = ssub.s32 1024, 1024
          %209 = vsyncadd [#allocation6], %s208
          %s210 = sshll.u32 [#allocation7], 4
          %s211 = int_to_ptr.vmem [resolvable:$true] %s210
          %216 = dma.hbm_to_vmem [thread:$0]  %s2, 1024, %s211, [#allocation6], 64, 64, 4
        $region20: #{conv_bn_relu.5} parent=11 // pred_fallthru
          _
        // Predicated region
        $region21: #{conv_bn_relu.5} parent=11 // pred_check
          %p217 = pneg %p110
        $region22: #{conv_bn_relu.5} parent=11 // pred_check_branch
          %219 = sbr.rel (%p217) target = $region24
        $region23: #{conv_bn_relu.5} parent=11 // pred_region
          %s221 = ssub.s32 16, 16
          %222 = vsyncadd [#allocation9], %s221
          %s224 = sshll.u32 [#allocation8], 4
          %s225 = int_to_ptr.vmem [resolvable:$true] %s224
          %227 = dma.hbm_to_vmem [thread:$0]  %s3, 16, %s225, [#allocation9]
        $region24: #{conv_bn_relu.5} parent=11 // pred_fallthru
          _
        // Predicated region
        $region25: #{conv_bn_relu.5} parent=11 // pred_check
          %p228 = pneg %p131
        $region26: #{conv_bn_relu.5} parent=11 // pred_check_branch
          %230 = sbr.rel (%p228) target = $region28
        $region27: #{conv_bn_relu.5} parent=11 // pred_region
          %s232 = ssub.s32 1024, 1024
          %233 = vsyncadd [#allocation9], %s232
          %s234 = sshll.u32 [#allocation10], 4
          %s235 = int_to_ptr.vmem [resolvable:$true] %s234
          %240 = dma.hbm_to_vmem [thread:$0]  %s4, 1024, %s235, [#allocation9], 64, 64, 4
        $region28: #{conv_bn_relu.5} parent=11 // pred_fallthru
          _
        // Predicated region
        $region29: #{conv_bn_relu.5} parent=11 // pred_check
          %p241 = pneg %p152
        $region30: #{conv_bn_relu.5} parent=11 // pred_check_branch
          %243 = sbr.rel (%p241) target = $region32
        $region31: #{conv_bn_relu.5} parent=11 // pred_region
          %s245 = ssub.s32 16, 16
          %246 = vsyncadd [#allocation12], %s245
          %s248 = sshll.u32 [#allocation11], 4
          %s249 = int_to_ptr.vmem [resolvable:$true] %s248
          %251 = dma.hbm_to_vmem [thread:$0]  %s5, 16, %s249, [#allocation12]
        $region32: #{conv_bn_relu.5} parent=11 // pred_fallthru
          _
      $region12: #{conv_bn_relu.5} parent=5 // pred_fallthru
        _
      %p252 = scmp.lt.s32.totalorder %s21, 2
      // Predicated region
      $region33: #{conv_bn_relu.5} parent=5 // pred_check
        %p253 = pneg %p252
      $region34: #{conv_bn_relu.5} parent=5 // pred_check_branch
        %255 = sbr.rel (%p253) target = $region36
      $region35: #{conv_bn_relu.5} parent=5 // pred_region
        // Predicated region
        $region37: #{conv_bn_relu.5} parent=35 // pred_check
          %p256 = pneg %p41
        $region38: #{conv_bn_relu.5} parent=35 // pred_check_branch
          %258 = sbr.rel (%p256) target = $region40
        $region39: #{conv_bn_relu.5} parent=35 // pred_region
          %s259 = sand.u32 %s31, 1
          %s260 = scalar_lea.sflag [#allocation3], %s259
          %s261 = sand.u32 %s31, 1
          %s262 = smul.addr %s261, 128
          %s263 = scalar_lea.vmem [#allocation2], %s262
          %s265 = ssub.s32 2048, 2048
          %266 = vsyncadd %s260, %s265
          %s267 = smul.addr %s21, 32
          %s268 = smul.addr %s267, 64
          %s269 = scalar_lea.hbm %s0, %s268
          %s270 = sshll.u32 %s263, 4
          %s271 = int_to_ptr.vmem [resolvable:$true] %s270
          %276 = dma.hbm_to_vmem [thread:$0]  %s269, 2048, %s271, %s260, 64, 64, 4
        $region40: #{conv_bn_relu.5} parent=35 // pred_fallthru
          _
      $region36: #{conv_bn_relu.5} parent=5 // pred_fallthru
        _
      %p277 = scmp.le.s32.totalorder 1, %s21
      %p278 = scmp.lt.s32.totalorder %s21, 3
      %p279 = pnand %p277, %p278
      %p280 = pneg %p279
      // Predicated region
      $region41: #{conv_bn_relu.5} parent=5 // pred_check
        _
      $region42: #{conv_bn_relu.5} parent=5 // pred_check_branch
        %282 = sbr.rel (%p279) target = $region44
      $region43: #{conv_bn_relu.5} parent=5 // pred_region
        %s283 = ssub.s32 %s21, 1
        %s284 = sand.u32 %s34, 1
        %s285 = scalar_lea.sflag [#allocation3], %s284
        %s286 = sand.u32 %s34, 1
        %s287 = smul.addr %s286, 128
        %s288 = scalar_lea.vmem [#allocation2], %s287
        // Predicated region
        $region45: #{conv_bn_relu.5} parent=43 // pred_check
          %p289 = pneg %p47
        $region46: #{conv_bn_relu.5} parent=43 // pred_check_branch
          %291 = sbr.rel (%p289) target = $region48
        $region47: #{conv_bn_relu.5} parent=43 // pred_region
          %292 = dma.done %s285, 2048
        $region48: #{conv_bn_relu.5} parent=43 // pred_fallthru
          _
        // Predicated region
        $region49: #{conv_bn_relu.5} parent=43 // pred_check
          %p293 = pneg %p68
        $region50: #{conv_bn_relu.5} parent=43 // pred_check_branch
          %295 = sbr.rel (%p293) target = $region52
        $region51: #{conv_bn_relu.5} parent=43 // pred_region
          %296 = dma.done [#allocation6], 32
        $region52: #{conv_bn_relu.5} parent=43 // pred_fallthru
          _
        // Predicated region
        $region53: #{conv_bn_relu.5} parent=43 // pred_check
          %p297 = pneg %p89
        $region54: #{conv_bn_relu.5} parent=43 // pred_check_branch
          %299 = sbr.rel (%p297) target = $region56
        $region55: #{conv_bn_relu.5} parent=43 // pred_region
          %300 = dma.done [#allocation6], 1024
        $region56: #{conv_bn_relu.5} parent=43 // pred_fallthru
          _
        // Predicated region
        $region57: #{conv_bn_relu.5} parent=43 // pred_check
          %p301 = pneg %p110
        $region58: #{conv_bn_relu.5} parent=43 // pred_check_branch
          %303 = sbr.rel (%p301) target = $region60
        $region59: #{conv_bn_relu.5} parent=43 // pred_region
          %304 = dma.done [#allocation9], 16
        $region60: #{conv_bn_relu.5} parent=43 // pred_fallthru
          _
        // Predicated region
        $region61: #{conv_bn_relu.5} parent=43 // pred_check
          %p305 = pneg %p131
        $region62: #{conv_bn_relu.5} parent=43 // pred_check_branch
          %307 = sbr.rel (%p305) target = $region64
        $region63: #{conv_bn_relu.5} parent=43 // pred_region
          %308 = dma.done [#allocation9], 1024
        $region64: #{conv_bn_relu.5} parent=43 // pred_fallthru
          _
        // Predicated region
        $region65: #{conv_bn_relu.5} parent=43 // pred_check
          %p309 = pneg %p152
        $region66: #{conv_bn_relu.5} parent=43 // pred_check_branch
          %311 = sbr.rel (%p309) target = $region68
        $region67: #{conv_bn_relu.5} parent=43 // pred_region
          %312 = dma.done [#allocation12], 16
        $region68: #{conv_bn_relu.5} parent=43 // pred_fallthru
          _
        %s313 = sand.u32 %s34, 1
        %s314 = scalar_lea.sflag [#allocation3], %s313
        %s315 = sand.u32 %s34, 1
        %s316 = smul.addr %s315, 128
        %s317 = scalar_lea.vmem [#allocation2], %s316
        %p318 = pneg %p47
        %p319 = pneg %p44
        %p320 = pneg %p68
        %p321 = pneg %p65
        %p322 = pneg %p89
        %p323 = pneg %p86
        %p324 = pneg %p110
        %p325 = pneg %p107
        %p326 = pneg %p131
        %p327 = pneg %p128
        %p328 = pneg %p152
        %p329 = pneg %p149
        %p330 = pneg %p178
        %p331 = pneg %p175
        %s332 = sand.u32 %s165, 1
        %s333 = scalar_lea.sflag [#allocation4], %s332
        %s334 = sand.u32 %s165, 1
        %s335 = smul.addr %s334, 128
        %s336 = scalar_lea.vmem [#allocation13], %s335
        %v338 = vld [vmem:[%s288] sm:$0xf]
        %v339 = vld [vmem:[%s288 + $0x4] sm:$0xf]
        %v340 = vld [vmem:[%s288 + $0x8] sm:$0xf]
        %v341 = vld [vmem:[%s288 + $0xc] sm:$0xf]
        %v342 = vld [vmem:[%s288 + $0x10] sm:$0xf]
        %v343 = vld [vmem:[%s288 + $0x14] sm:$0xf]
        %v344 = vld [vmem:[%s288 + $0x18] sm:$0xf]
        %v345 = vld [vmem:[%s288 + $0x1c] sm:$0xf]
        %v346 = vld [vmem:[%s288 + $0x20] sm:$0xf]
        %v347 = vld [vmem:[%s288 + $0x24] sm:$0xf]
        %v348 = vld [vmem:[%s288 + $0x28] sm:$0xf]
        %v349 = vld [vmem:[%s288 + $0x2c] sm:$0xf]
        %v350 = vld [vmem:[%s288 + $0x30] sm:$0xf]
        %v351 = vld [vmem:[%s288 + $0x34] sm:$0xf]
        %v352 = vld [vmem:[%s288 + $0x38] sm:$0xf]
        %v353 = vld [vmem:[%s288 + $0x3c] sm:$0xf]
        %v354 = vld [vmem:[%s288 + $0x40] sm:$0xf]
        %v355 = vld [vmem:[%s288 + $0x44] sm:$0xf]
        %v356 = vld [vmem:[%s288 + $0x48] sm:$0xf]
        %v357 = vld [vmem:[%s288 + $0x4c] sm:$0xf]
        %v358 = vld [vmem:[%s288 + $0x50] sm:$0xf]
        %v359 = vld [vmem:[%s288 + $0x54] sm:$0xf]
        %v360 = vld [vmem:[%s288 + $0x58] sm:$0xf]
        %v361 = vld [vmem:[%s288 + $0x5c] sm:$0xf]
        %v362 = vld [vmem:[%s288 + $0x60] sm:$0xf]
        %v363 = vld [vmem:[%s288 + $0x64] sm:$0xf]
        %v364 = vld [vmem:[%s288 + $0x68] sm:$0xf]
        %v365 = vld [vmem:[%s288 + $0x6c] sm:$0xf]
        %v366 = vld [vmem:[%s288 + $0x70] sm:$0xf]
        %v367 = vld [vmem:[%s288 + $0x74] sm:$0xf]
        %v368 = vld [vmem:[%s288 + $0x78] sm:$0xf]
        %v369 = vld [vmem:[%s288 + $0x7c] sm:$0xf]
        %v370 = vunpack.c.l.bf16 %v338
        %v371 = vunpack.c.l.bf16 %v339
        %v372 = vunpack.c.l.bf16 %v340
        %v373 = vunpack.c.l.bf16 %v341
        %v374 = vunpack.c.l.bf16 %v342
        %v375 = vunpack.c.l.bf16 %v343
        %v376 = vunpack.c.l.bf16 %v344
        %v377 = vunpack.c.l.bf16 %v345
        %v378 = vunpack.c.l.bf16 %v346
        %v379 = vunpack.c.l.bf16 %v347
        %v380 = vunpack.c.l.bf16 %v348
        %v381 = vunpack.c.l.bf16 %v349
        %v382 = vunpack.c.l.bf16 %v350
        %v383 = vunpack.c.l.bf16 %v351
        %v384 = vunpack.c.l.bf16 %v352
        %v385 = vunpack.c.l.bf16 %v353
        %v386 = vunpack.c.l.bf16 %v354
        %v387 = vunpack.c.l.bf16 %v355
        %v388 = vunpack.c.l.bf16 %v356
        %v389 = vunpack.c.l.bf16 %v357
        %v390 = vunpack.c.l.bf16 %v358
        %v391 = vunpack.c.l.bf16 %v359
        %v392 = vunpack.c.l.bf16 %v360
        %v393 = vunpack.c.l.bf16 %v361
        %v394 = vunpack.c.l.bf16 %v362
        %v395 = vunpack.c.l.bf16 %v363
        %v396 = vunpack.c.l.bf16 %v364
        %v397 = vunpack.c.l.bf16 %v365
        %v398 = vunpack.c.l.bf16 %v366
        %v399 = vunpack.c.l.bf16 %v367
        %v400 = vunpack.c.l.bf16 %v368
        %v401 = vunpack.c.l.bf16 %v369
        %v402 = vld [vmem:[#allocation5] sm:$0x1]
        %v403 = vld [vmem:[#allocation5 + $0x1] sm:$0x1]
        %v404 = vlaneseq
        %v405 = vshrl.u32 %v404, 7
        %v406 = vsub.s32 0, %v405
        %v407 = vrot.slane %v402, %v406
        %v408 = vmul.f32 %v370, %v407
        %v409 = vmul.f32 %v371, %v407
        %v410 = vmul.f32 %v372, %v407
        %v411 = vmul.f32 %v373, %v407
        %v412 = vmul.f32 %v374, %v407
        %v413 = vmul.f32 %v375, %v407
        %v414 = vmul.f32 %v376, %v407
        %v415 = vmul.f32 %v377, %v407
        %v416 = vmul.f32 %v378, %v407
        %v417 = vmul.f32 %v379, %v407
        %v418 = vmul.f32 %v380, %v407
        %v419 = vmul.f32 %v381, %v407
        %v420 = vmul.f32 %v382, %v407
        %v421 = vmul.f32 %v383, %v407
        %v422 = vmul.f32 %v384, %v407
        %v423 = vmul.f32 %v385, %v407
        %v424 = vmul.f32 %v386, %v407
        %v425 = vmul.f32 %v387, %v407
        %v426 = vmul.f32 %v388, %v407
        %v427 = vmul.f32 %v389, %v407
        %v428 = vmul.f32 %v390, %v407
        %v429 = vmul.f32 %v391, %v407
        %v430 = vmul.f32 %v392, %v407
        %v431 = vmul.f32 %v393, %v407
        %v432 = vmul.f32 %v394, %v407
        %v433 = vmul.f32 %v395, %v407
        %v434 = vmul.f32 %v396, %v407
        %v435 = vmul.f32 %v397, %v407
        %v436 = vmul.f32 %v398, %v407
        %v437 = vmul.f32 %v399, %v407
        %v438 = vmul.f32 %v400, %v407
        %v439 = vmul.f32 %v401, %v407
        %v440 = vlaneseq
        %v441 = vshrl.u32 %v440, 7
        %v442 = vsub.s32 0, %v441
        %v443 = vrot.slane %v403, %v442
        %v444 = vadd.f32 %v408, %v443
        %v445 = vadd.f32 %v409, %v443
        %v446 = vadd.f32 %v410, %v443
        %v447 = vadd.f32 %v411, %v443
        %v448 = vadd.f32 %v412, %v443
        %v449 = vadd.f32 %v413, %v443
        %v450 = vadd.f32 %v414, %v443
        %v451 = vadd.f32 %v415, %v443
        %v452 = vadd.f32 %v416, %v443
        %v453 = vadd.f32 %v417, %v443
        %v454 = vadd.f32 %v418, %v443
        %v455 = vadd.f32 %v419, %v443
        %v456 = vadd.f32 %v420, %v443
        %v457 = vadd.f32 %v421, %v443
        %v458 = vadd.f32 %v422, %v443
        %v459 = vadd.f32 %v423, %v443
        %v460 = vadd.f32 %v424, %v443
        %v461 = vadd.f32 %v425, %v443
        %v462 = vadd.f32 %v426, %v443
        %v463 = vadd.f32 %v427, %v443
        %v464 = vadd.f32 %v428, %v443
        %v465 = vadd.f32 %v429, %v443
        %v466 = vadd.f32 %v430, %v443
        %v467 = vadd.f32 %v431, %v443
        %v468 = vadd.f32 %v432, %v443
        %v469 = vadd.f32 %v433, %v443
        %v470 = vadd.f32 %v434, %v443
        %v471 = vadd.f32 %v435, %v443
        %v472 = vadd.f32 %v436, %v443
        %v473 = vadd.f32 %v437, %v443
        %v474 = vadd.f32 %v438, %v443
        %v475 = vadd.f32 %v439, %v443
        %v476 = vmax.f32 %v444, 0.0
        %v477 = vmax.f32 %v445, 0.0
        %v478 = vmax.f32 %v446, 0.0
        %v479 = vmax.f32 %v447, 0.0
        %v480 = vmax.f32 %v448, 0.0
        %v481 = vmax.f32 %v449, 0.0
        %v482 = vmax.f32 %v450, 0.0
        %v483 = vmax.f32 %v451, 0.0
        %v484 = vmax.f32 %v452, 0.0
        %v485 = vmax.f32 %v453, 0.0
        %v486 = vmax.f32 %v454, 0.0
        %v487 = vmax.f32 %v455, 0.0
        %v488 = vmax.f32 %v456, 0.0
        %v489 = vmax.f32 %v457, 0.0
        %v490 = vmax.f32 %v458, 0.0
        %v491 = vmax.f32 %v459, 0.0
        %v492 = vmax.f32 %v460, 0.0
        %v493 = vmax.f32 %v461, 0.0
        %v494 = vmax.f32 %v462, 0.0
        %v495 = vmax.f32 %v463, 0.0
        %v496 = vmax.f32 %v464, 0.0
        %v497 = vmax.f32 %v465, 0.0
        %v498 = vmax.f32 %v466, 0.0
        %v499 = vmax.f32 %v467, 0.0
        %v500 = vmax.f32 %v468, 0.0
        %v501 = vmax.f32 %v469, 0.0
        %v502 = vmax.f32 %v470, 0.0
        %v503 = vmax.f32 %v471, 0.0
        %v504 = vmax.f32 %v472, 0.0
        %v505 = vmax.f32 %v473, 0.0
        %v506 = vmax.f32 %v474, 0.0
        %v507 = vmax.f32 %v475, 0.0
        %v508 = vadd.f32 %v476, %v477
        %v509 = vadd.f32 %v508, %v478
        %v510 = vadd.f32 %v509, %v479
        %v511 = vadd.f32 %v510, %v480
        %v512 = vadd.f32 %v511, %v481
        %v513 = vadd.f32 %v512, %v482
        %v514 = vadd.f32 %v513, %v483
        %v515 = vadd.f32 %v514, %v484
        %v516 = vadd.f32 %v515, %v485
        %v517 = vadd.f32 %v516, %v486
        %v518 = vadd.f32 %v517, %v487
        %v519 = vadd.f32 %v518, %v488
        %v520 = vadd.f32 %v519, %v489
        %v521 = vadd.f32 %v520, %v490
        %v522 = vadd.f32 %v521, %v491
        %v523 = vadd.f32 %v522, %v492
        %v524 = vadd.f32 %v523, %v493
        %v525 = vadd.f32 %v524, %v494
        %v526 = vadd.f32 %v525, %v495
        %v527 = vadd.f32 %v526, %v496
        %v528 = vadd.f32 %v527, %v497
        %v529 = vadd.f32 %v528, %v498
        %v530 = vadd.f32 %v529, %v499
        %v531 = vadd.f32 %v530, %v500
        %v532 = vadd.f32 %v531, %v501
        %v533 = vadd.f32 %v532, %v502
        %v534 = vadd.f32 %v533, %v503
        %v535 = vadd.f32 %v534, %v504
        %v536 = vadd.f32 %v535, %v505
        %v537 = vadd.f32 %v536, %v506
        %v538 = vadd.f32 %v537, %v507
        %v539 = vrot.slane %v538, 4
        %v540 = vadd.f32 %v538, %v539
        %v541 = vrot.slane %v540, 2
        %v542 = vadd.f32 %v540, %v541
        %v543 = vrot.slane %v542, 1
        %v544 = vadd.f32 %v542, %v543
        %v545 = vmul.f32 %v544, 0.00390625
        %v546 = vpack.c.bf16 %v545, %v545
        %v547 = vld [vmem:[#allocation7] sm:$0xf]
        %v548 = vld [vmem:[#allocation7 + $0x4] sm:$0xf]
        %v549 = vld [vmem:[#allocation7 + $0x8] sm:$0xf]
        %v550 = vld [vmem:[#allocation7 + $0xc] sm:$0xf]
        %v551 = vld [vmem:[#allocation7 + $0x10] sm:$0xf]
        %v552 = vld [vmem:[#allocation7 + $0x14] sm:$0xf]
        %v553 = vld [vmem:[#allocation7 + $0x18] sm:$0xf]
        %v554 = vld [vmem:[#allocation7 + $0x1c] sm:$0xf]
        %v555 = vld [vmem:[#allocation7 + $0x20] sm:$0xf]
        %v556 = vld [vmem:[#allocation7 + $0x24] sm:$0xf]
        %v557 = vld [vmem:[#allocation7 + $0x28] sm:$0xf]
        %v558 = vld [vmem:[#allocation7 + $0x2c] sm:$0xf]
        %v559 = vld [vmem:[#allocation7 + $0x30] sm:$0xf]
        %v560 = vld [vmem:[#allocation7 + $0x34] sm:$0xf]
        %v561 = vld [vmem:[#allocation7 + $0x38] sm:$0xf]
        %v562 = vld [vmem:[#allocation7 + $0x3c] sm:$0xf]
        %v563 = vld [vmem:[#allocation8] sm:$0x1]
        %v580 = vunpack.c.l.b16 %v547
        %v581 = vunpack.c.l.b16 %v548
        %v582 = vunpack.c.l.b16 %v549
        %v583 = vunpack.c.l.b16 %v550
        %v584 = vunpack.c.l.b16 %v551
        %v585 = vunpack.c.l.b16 %v552
        %v586 = vunpack.c.l.b16 %v553
        %v587 = vunpack.c.l.b16 %v554
        %v588 = vunpack.c.l.b16 %v555
        %v589 = vunpack.c.l.b16 %v556
        %v590 = vunpack.c.l.b16 %v557
        %v591 = vunpack.c.l.b16 %v558
        %v592 = vunpack.c.l.b16 %v559
        %v593 = vunpack.c.l.b16 %v560
        %v594 = vunpack.c.l.b16 %v561
        %v595 = vunpack.c.l.b16 %v562
        %v596 = vpack.c.b16 %v581, %v580
        %v597 = vpack.c.b16 %v583, %v582
        %v598 = vpack.c.b16 %v585, %v584
        %v599 = vpack.c.b16 %v587, %v586
        %v600 = vpack.c.b16 %v589, %v588
        %v601 = vpack.c.b16 %v591, %v590
        %v602 = vpack.c.b16 %v593, %v592
        %v603 = vpack.c.b16 %v595, %v594
        %612 = vmatprep.subr.bf16.mxu0 0
        %613 = vmatpush1.bf16.msra.mxu0 %v596
        %614 = vmatprep.subr.bf16.mxu0 0
        %615 = vmatpush1.bf16.msra.mxu0 %v597
        %616 = vmatprep.subr.bf16.mxu0 0
        %617 = vmatpush1.bf16.msra.mxu0 %v598
        %618 = vmatprep.subr.bf16.mxu0 0
        %619 = vmatpush1.bf16.msra.mxu0 %v599
        %620 = vmatprep.subr.bf16.mxu0 0
        %621 = vmatpush1.bf16.msra.mxu0 %v600
        %622 = vmatprep.subr.bf16.mxu0 0
        %623 = vmatpush1.bf16.msra.mxu0 %v601
        %624 = vmatprep.subr.bf16.mxu0 0
        %625 = vmatpush1.bf16.msra.mxu0 %v602
        %626 = vmatprep.subr.bf16.mxu0 0
        %627 = vmatpush1.bf16.msra.mxu0 %v603
        %628 = vmatprep.subr.bf16.mxu0 0
        %629 = vmatpush1.bf16.msra.mxu0 0
        %630 = vmatprep.subr.bf16.mxu0 0
        %631 = vmatpush1.bf16.msra.mxu0 0
        %632 = vmatprep.subr.bf16.mxu0 0
        %633 = vmatpush1.bf16.msra.mxu0 0
        %634 = vmatprep.subr.bf16.mxu0 0
        %635 = vmatpush1.bf16.msra.mxu0 0
        %636 = vmatprep.subr.bf16.mxu0 0
        %637 = vmatpush1.bf16.msra.mxu0 0
        %638 = vmatprep.subr.bf16.mxu0 0
        %639 = vmatpush1.bf16.msra.mxu0 0
        %640 = vmatprep.subr.bf16.mxu0 0
        %641 = vmatpush1.bf16.msra.mxu0 0
        %642 = vmatprep.subr.bf16.mxu0 0
        %643 = vmatpush1.bf16.msra.mxu0 0
        %644 = vmatprep.mubr.bf16.mxu0 0
        %645 = vmatmul.mubr.bf16.gmra.mrb[0].mxu0 %v546
        %v646 = vpop.f32.mrb[0].mxu0
        %v647 = vadd.f32 %v563, %v646
        %v648 = vpop.f32.mrb[0].mxu0
        %v649 = vpop.f32.mrb[0].mxu0
        %v650 = vpop.f32.mrb[0].mxu0
        %651 = vdwg.mxu0
        %v652 = vmax.f32 %v647, 0.0
        %v653 = vpack.c.bf16 %v652, %v652
        %v654 = vld [vmem:[#allocation10] sm:$0xf]
        %v655 = vld [vmem:[#allocation10 + $0x4] sm:$0xf]
        %v656 = vld [vmem:[#allocation10 + $0x8] sm:$0xf]
        %v657 = vld [vmem:[#allocation10 + $0xc] sm:$0xf]
        %v658 = vld [vmem:[#allocation10 + $0x10] sm:$0xf]
        %v659 = vld [vmem:[#allocation10 + $0x14] sm:$0xf]
        %v660 = vld [vmem:[#allocation10 + $0x18] sm:$0xf]
        %v661 = vld [vmem:[#allocation10 + $0x1c] sm:$0xf]
        %v662 = vld [vmem:[#allocation10 + $0x20] sm:$0xf]
        %v663 = vld [vmem:[#allocation10 + $0x24] sm:$0xf]
        %v664 = vld [vmem:[#allocation10 + $0x28] sm:$0xf]
        %v665 = vld [vmem:[#allocation10 + $0x2c] sm:$0xf]
        %v666 = vld [vmem:[#allocation10 + $0x30] sm:$0xf]
        %v667 = vld [vmem:[#allocation10 + $0x34] sm:$0xf]
        %v668 = vld [vmem:[#allocation10 + $0x38] sm:$0xf]
        %v669 = vld [vmem:[#allocation10 + $0x3c] sm:$0xf]
        %v670 = vld [vmem:[#allocation11] sm:$0x1]
        %v687 = vunpack.c.l.b16 %v654
        %v688 = vunpack.c.l.b16 %v655
        %v689 = vunpack.c.l.b16 %v656
        %v690 = vunpack.c.l.b16 %v657
        %v691 = vunpack.c.l.b16 %v658
        %v692 = vunpack.c.l.b16 %v659
        %v693 = vunpack.c.l.b16 %v660
        %v694 = vunpack.c.l.b16 %v661
        %v695 = vunpack.c.l.b16 %v662
        %v696 = vunpack.c.l.b16 %v663
        %v697 = vunpack.c.l.b16 %v664
        %v698 = vunpack.c.l.b16 %v665
        %v699 = vunpack.c.l.b16 %v666
        %v700 = vunpack.c.l.b16 %v667
        %v701 = vunpack.c.l.b16 %v668
        %v702 = vunpack.c.l.b16 %v669
        %v703 = vpack.c.b16 %v688, %v687
        %v704 = vpack.c.b16 %v690, %v689
        %v705 = vpack.c.b16 %v692, %v691
        %v706 = vpack.c.b16 %v694, %v693
        %v707 = vpack.c.b16 %v696, %v695
        %v708 = vpack.c.b16 %v698, %v697
        %v709 = vpack.c.b16 %v700, %v699
        %v710 = vpack.c.b16 %v702, %v701
        %719 = vmatprep.subr.bf16.mxu0 0
        %720 = vmatpush1.bf16.msra.mxu0 %v703
        %721 = vmatprep.subr.bf16.mxu0 0
        %722 = vmatpush1.bf16.msra.mxu0 %v704
        %723 = vmatprep.subr.bf16.mxu0 0
        %724 = vmatpush1.bf16.msra.mxu0 %v705
        %725 = vmatprep.subr.bf16.mxu0 0
        %726 = vmatpush1.bf16.msra.mxu0 %v706
        %727 = vmatprep.subr.bf16.mxu0 0
        %728 = vmatpush1.bf16.msra.mxu0 %v707
        %729 = vmatprep.subr.bf16.mxu0 0
        %730 = vmatpush1.bf16.msra.mxu0 %v708
        %731 = vmatprep.subr.bf16.mxu0 0
        %732 = vmatpush1.bf16.msra.mxu0 %v709
        %733 = vmatprep.subr.bf16.mxu0 0
        %734 = vmatpush1.bf16.msra.mxu0 %v710
        %735 = vmatprep.subr.bf16.mxu0 0
        %736 = vmatpush1.bf16.msra.mxu0 0
        %737 = vmatprep.subr.bf16.mxu0 0
        %738 = vmatpush1.bf16.msra.mxu0 0
        %739 = vmatprep.subr.bf16.mxu0 0
        %740 = vmatpush1.bf16.msra.mxu0 0
        %741 = vmatprep.subr.bf16.mxu0 0
        %742 = vmatpush1.bf16.msra.mxu0 0
        %743 = vmatprep.subr.bf16.mxu0 0
        %744 = vmatpush1.bf16.msra.mxu0 0
        %745 = vmatprep.subr.bf16.mxu0 0
        %746 = vmatpush1.bf16.msra.mxu0 0
        %747 = vmatprep.subr.bf16.mxu0 0
        %748 = vmatpush1.bf16.msra.mxu0 0
        %749 = vmatprep.subr.bf16.mxu0 0
        %750 = vmatpush1.bf16.msra.mxu0 0
        %751 = vmatprep.mubr.bf16.mxu0 0
        %752 = vmatmul.mubr.bf16.gmra.mrb[0].mxu0 %v653
        %v753 = vpop.f32.mrb[0].mxu0
        %v754 = vadd.f32 %v670, %v753
        %v755 = vpop.f32.mrb[0].mxu0
        %v756 = vpop.f32.mrb[0].mxu0
        %v757 = vpop.f32.mrb[0].mxu0
        %758 = vdwg.mxu0
        %v759 = vxor.u32 %v754, 2147483648
        %v760 = vmul.f32 %v759, 1.442695
        %v761 = vpow.pop %v760
        %v762 = vadd.f32 %v761, 1.0
        %v763 = vrcp.pop %v762
        %v764 = vmul.f32 1.0, %v763
        %v765 = vlaneseq
        %v766 = vshrl.u32 %v765, 7
        %v767 = vsub.s32 0, %v766
        %v768 = vrot.slane %v764, %v767
        %v769 = vmul.f32 %v476, %v768
        %v770 = vmul.f32 %v477, %v768
        %v771 = vmul.f32 %v478, %v768
        %v772 = vmul.f32 %v479, %v768
        %v773 = vmul.f32 %v480, %v768
        %v774 = vmul.f32 %v481, %v768
        %v775 = vmul.f32 %v482, %v768
        %v776 = vmul.f32 %v483, %v768
        %v777 = vmul.f32 %v484, %v768
        %v778 = vmul.f32 %v485, %v768
        %v779 = vmul.f32 %v486, %v768
        %v780 = vmul.f32 %v487, %v768
        %v781 = vmul.f32 %v488, %v768
        %v782 = vmul.f32 %v489, %v768
        %v783 = vmul.f32 %v490, %v768
        %v784 = vmul.f32 %v491, %v768
        %v785 = vmul.f32 %v492, %v768
        %v786 = vmul.f32 %v493, %v768
        %v787 = vmul.f32 %v494, %v768
        %v788 = vmul.f32 %v495, %v768
        %v789 = vmul.f32 %v496, %v768
        %v790 = vmul.f32 %v497, %v768
        %v791 = vmul.f32 %v498, %v768
        %v792 = vmul.f32 %v499, %v768
        %v793 = vmul.f32 %v500, %v768
        %v794 = vmul.f32 %v501, %v768
        %v795 = vmul.f32 %v502, %v768
        %v796 = vmul.f32 %v503, %v768
        %v797 = vmul.f32 %v504, %v768
        %v798 = vmul.f32 %v505, %v768
        %v799 = vmul.f32 %v506, %v768
        %v800 = vmul.f32 %v507, %v768
        %v801 = vpack.c.bf16 %v770, %v769
        %v802 = vpack.c.bf16 %v772, %v771
        %v803 = vpack.c.bf16 %v774, %v773
        %v804 = vpack.c.bf16 %v776, %v775
        %v805 = vpack.c.bf16 %v778, %v777
        %v806 = vpack.c.bf16 %v780, %v779
        %v807 = vpack.c.bf16 %v782, %v781
        %v808 = vpack.c.bf16 %v784, %v783
        %v809 = vpack.c.bf16 %v786, %v785
        %v810 = vpack.c.bf16 %v788, %v787
        %v811 = vpack.c.bf16 %v790, %v789
        %v812 = vpack.c.bf16 %v792, %v791
        %v813 = vpack.c.bf16 %v794, %v793
        %v814 = vpack.c.bf16 %v796, %v795
        %v815 = vpack.c.bf16 %v798, %v797
        %v816 = vpack.c.bf16 %v800, %v799
        %v833 = vunpack.c.l.b16 %v801
        %v834 = vunpack.c.h.b16 %v801
        %v835 = vunpack.c.l.b16 %v802
        %v836 = vunpack.c.h.b16 %v802
        %v837 = vunpack.c.l.b16 %v803
        %v838 = vunpack.c.h.b16 %v803
        %v839 = vunpack.c.l.b16 %v804
        %v840 = vunpack.c.h.b16 %v804
        %v841 = vunpack.c.l.b16 %v805
        %v842 = vunpack.c.h.b16 %v805
        %v843 = vunpack.c.l.b16 %v806
        %v844 = vunpack.c.h.b16 %v806
        %v845 = vunpack.c.l.b16 %v807
        %v846 = vunpack.c.h.b16 %v807
        %v847 = vunpack.c.l.b16 %v808
        %v848 = vunpack.c.h.b16 %v808
        %v849 = vunpack.c.l.b16 %v809
        %v850 = vunpack.c.h.b16 %v809
        %v851 = vunpack.c.l.b16 %v810
        %v852 = vunpack.c.h.b16 %v810
        %v853 = vunpack.c.l.b16 %v811
        %v854 = vunpack.c.h.b16 %v811
        %v855 = vunpack.c.l.b16 %v812
        %v856 = vunpack.c.h.b16 %v812
        %v857 = vunpack.c.l.b16 %v813
        %v858 = vunpack.c.h.b16 %v813
        %v859 = vunpack.c.l.b16 %v814
        %v860 = vunpack.c.h.b16 %v814
        %v861 = vunpack.c.l.b16 %v815
        %v862 = vunpack.c.h.b16 %v815
        %v863 = vunpack.c.l.b16 %v816
        %v864 = vunpack.c.h.b16 %v816
        %v865 = vpack.c.b16 %v833, %v833
        %v866 = vpack.c.b16 %v834, %v834
        %v867 = vpack.c.b16 %v835, %v835
        %v868 = vpack.c.b16 %v836, %v836
        %v869 = vpack.c.b16 %v837, %v837
        %v870 = vpack.c.b16 %v838, %v838
        %v871 = vpack.c.b16 %v839, %v839
        %v872 = vpack.c.b16 %v840, %v840
        %v873 = vpack.c.b16 %v841, %v841
        %v874 = vpack.c.b16 %v842, %v842
        %v875 = vpack.c.b16 %v843, %v843
        %v876 = vpack.c.b16 %v844, %v844
        %v877 = vpack.c.b16 %v845, %v845
        %v878 = vpack.c.b16 %v846, %v846
        %v879 = vpack.c.b16 %v847, %v847
        %v880 = vpack.c.b16 %v848, %v848
        %v881 = vpack.c.b16 %v849, %v849
        %v882 = vpack.c.b16 %v850, %v850
        %v883 = vpack.c.b16 %v851, %v851
        %v884 = vpack.c.b16 %v852, %v852
        %v885 = vpack.c.b16 %v853, %v853
        %v886 = vpack.c.b16 %v854, %v854
        %v887 = vpack.c.b16 %v855, %v855
        %v888 = vpack.c.b16 %v856, %v856
        %v889 = vpack.c.b16 %v857, %v857
        %v890 = vpack.c.b16 %v858, %v858
        %v891 = vpack.c.b16 %v859, %v859
        %v892 = vpack.c.b16 %v860, %v860
        %v893 = vpack.c.b16 %v861, %v861
        %v894 = vpack.c.b16 %v862, %v862
        %v895 = vpack.c.b16 %v863, %v863
        %v896 = vpack.c.b16 %v864, %v864
        %929 = vst [vmem:[%s336] sm:$0xf] %v865
        %930 = vst [vmem:[%s336 + $0x4] sm:$0xf] %v866
        %931 = vst [vmem:[%s336 + $0x8] sm:$0xf] %v867
        %932 = vst [vmem:[%s336 + $0xc] sm:$0xf] %v868
        %933 = vst [vmem:[%s336 + $0x10] sm:$0xf] %v869
        %934 = vst [vmem:[%s336 + $0x14] sm:$0xf] %v870
        %935 = vst [vmem:[%s336 + $0x18] sm:$0xf] %v871
        %936 = vst [vmem:[%s336 + $0x1c] sm:$0xf] %v872
        %937 = vst [vmem:[%s336 + $0x20] sm:$0xf] %v873
        %938 = vst [vmem:[%s336 + $0x24] sm:$0xf] %v874
        %939 = vst [vmem:[%s336 + $0x28] sm:$0xf] %v875
        %940 = vst [vmem:[%s336 + $0x2c] sm:$0xf] %v876
        %941 = vst [vmem:[%s336 + $0x30] sm:$0xf] %v877
        %942 = vst [vmem:[%s336 + $0x34] sm:$0xf] %v878
        %943 = vst [vmem:[%s336 + $0x38] sm:$0xf] %v879
        %944 = vst [vmem:[%s336 + $0x3c] sm:$0xf] %v880
        %945 = vst [vmem:[%s336 + $0x40] sm:$0xf] %v881
        %946 = vst [vmem:[%s336 + $0x44] sm:$0xf] %v882
        %947 = vst [vmem:[%s336 + $0x48] sm:$0xf] %v883
        %948 = vst [vmem:[%s336 + $0x4c] sm:$0xf] %v884
        %949 = vst [vmem:[%s336 + $0x50] sm:$0xf] %v885
        %950 = vst [vmem:[%s336 + $0x54] sm:$0xf] %v886
        %951 = vst [vmem:[%s336 + $0x58] sm:$0xf] %v887
        %952 = vst [vmem:[%s336 + $0x5c] sm:$0xf] %v888
        %953 = vst [vmem:[%s336 + $0x60] sm:$0xf] %v889
        %954 = vst [vmem:[%s336 + $0x64] sm:$0xf] %v890
        %955 = vst [vmem:[%s336 + $0x68] sm:$0xf] %v891
        %956 = vst [vmem:[%s336 + $0x6c] sm:$0xf] %v892
        %957 = vst [vmem:[%s336 + $0x70] sm:$0xf] %v893
        %958 = vst [vmem:[%s336 + $0x74] sm:$0xf] %v894
        %959 = vst [vmem:[%s336 + $0x78] sm:$0xf] %v895
        %960 = vst [vmem:[%s336 + $0x7c] sm:$0xf] %v896
        %s961 = sand.u32 %s165, 1
        %s962 = scalar_lea.sflag [#allocation4], %s961
        %s963 = sand.u32 %s165, 1
        %s964 = smul.addr %s963, 128
        %s965 = scalar_lea.vmem [#allocation13], %s964
        // Predicated region
        $region69: #{conv_bn_relu.5} parent=43 // pred_check
          %p966 = pneg %p175
        $region70: #{conv_bn_relu.5} parent=43 // pred_check_branch
          %968 = sbr.rel (%p966) target = $region72
        $region71: #{conv_bn_relu.5} parent=43 // pred_region
          %s970 = ssub.s32 2048, 2048
          %971 = vsyncadd %s962, %s970
          %s972 = smul.addr %s26, 32
          %s973 = smul.addr %s972, 64
          %s974 = scalar_lea.hbm %s6, %s973
          %s975 = sshll.u32 %s965, 4
          %s976 = int_to_ptr.vmem [resolvable:$true] %s975
          %981 = dma.vmem_to_hbm [thread:$0]  %s976, 2048, %s974, %s962, 64, 64, 4
        $region72: #{conv_bn_relu.5} parent=43 // pred_fallthru
          _
      $region44: #{conv_bn_relu.5} parent=5 // pred_fallthru
        _
      %p982 = scmp.le.s32.totalorder 2, %s21
      // Predicated region
      $region73: #{conv_bn_relu.5} parent=5 // pred_check
        %p983 = pneg %p982
      $region74: #{conv_bn_relu.5} parent=5 // pred_check_branch
        %985 = sbr.rel (%p983) target = $region76
      $region75: #{conv_bn_relu.5} parent=5 // pred_region
        %s986 = ssub.s32 %s21, 2
        // Predicated region
        $region77: #{conv_bn_relu.5} parent=75 // pred_check
          %p987 = pneg %p181
        $region78: #{conv_bn_relu.5} parent=75 // pred_check_branch
          %989 = sbr.rel (%p987) target = $region80
        $region79: #{conv_bn_relu.5} parent=75 // pred_region
          %s990 = sand.u32 %s166, 1
          %s991 = scalar_lea.sflag [#allocation4], %s990
          %s992 = sand.u32 %s166, 1
          %s993 = smul.addr %s992, 128
          %s994 = scalar_lea.vmem [#allocation13], %s993
          %995 = dma.done %s991, 2048
        $region80: #{conv_bn_relu.5} parent=75 // pred_fallthru
          _
      $region76: #{conv_bn_relu.5} parent=5 // pred_fallthru
        _
    $region6: #{conv_bn_relu.5} parent=1 // loop_footer
      %s25 = sadd.s32 1, %s21
    $region7: #{conv_bn_relu.5} parent=1 // loop_footer_branch
      %20 = sbr.rel target = $region3
    $region8: #{conv_bn_relu.5} parent=1 // loop_exit
      _
    %996 = vsyncpa [#allocation3], 1
    %s997 = scalar_lea.sflag [#allocation3], 1
    %998 = vsyncpa %s997, 1
    %999 = vsyncpa [#allocation6], 1
    %1000 = vsyncpa [#allocation9], 1
    %1001 = vsyncpa [#allocation12], 1
    %1002 = vsyncpa [#allocation4], 1
    %s1003 = scalar_lea.sflag [#allocation4], 1
    %1004 = vsyncpa %s1003, 1

// kernel: conv_bn_relu.3
$region0: #{conv_bn_relu.3}
  #allocation0 [shape = 'u32[]', space=smem, size = 0x4, offset = 0x4, fixed_abs, tag = 'smem constant byte address 0x4 - core index']
  #allocation1 [shape = 'u32[144,128]{1,0:T(1,128)}', space=vmem, size = 0x12000, scoped, tag = 'internal scratch']
  %s0 = inlined_call_operand.hbm [shape: bf16[2,18,18,4], index: 0, kind: input, shape index: {}]
  %s1 = inlined_call_operand.hbm [shape: bf16[9,4,128], index: 1, kind: input, shape index: {}]
  %s2 = inlined_call_operand.hbm [shape: bf16[2,256,128], index: 2, kind: output, shape index: {0}]
  %s3 = inlined_call_operand.hbm [shape: f32[2,2,128], index: 3, kind: output, shape index: {1}]
  %4 = xla_tuple %s2, %s3
  %s5 = sld [smem:[#allocation0]]
  $region57: #{conv_bn_relu.3} parent=0
    _
  %s7 = ssub.s32 1, %s5
  %s8 = scalar_select 0, %s7, %s5
  $region1: #{conv_bn_relu.3} parent=0
    #allocation2 [shape = 'u8[221184]{0}', space=vmem, size = 0x36000, scoped, tag = 'input window, operand 0']
    #allocation3 [shape = 's32[2]{0}', space=sflag, size = 0x8, scoped, tag = 'scoped memory for conv_bn_relu.3']
    #allocation4 [shape = 's32[2]{0}', space=sflag, size = 0x8, scoped, tag = 'scoped memory for conv_bn_relu.3']
    #allocation5 [shape = 'u8[9216]{0}', space=vmem, size = 0x2400, scoped, tag = 'input window, operand 1, single buffered']
    #allocation6 [shape = 's32[1]{0}', space=sflag, size = 0x4, scoped, tag = 'scoped memory for conv_bn_relu.3']
    #allocation7 [shape = 'u8[131072]{0}', space=vmem, size = 0x20000, scoped, tag = 'output window, operand 0']
    #allocation8 [shape = 'u8[2048]{0}', space=vmem, size = 0x800, scoped, tag = 'output window, operand 1']
    #allocation9 [shape = 's32[2]{0}', space=sflag, size = 0x8, scoped, tag = 'scoped memory for conv_bn_relu.3']
    %9 = vsyncpa [#allocation3], 0
    %s10 = scalar_lea.sflag [#allocation3], 1
    %11 = vsyncpa %s10, 0
    %12 = vsyncpa [#allocation6], 0
    %13 = vsyncpa [#allocation4], 0
    %s14 = scalar_lea.sflag [#allocation4], 1
    %15 = vsyncpa %s14, 0
    %16 = vsyncpa [#allocation9], 0
    %s17 = scalar_lea.sflag [#allocation9], 1
    %18 = vsyncpa %s17, 0
    loop: start=0, step=1, limit=4
    $region2: #{conv_bn_relu.3} parent=1 // loop_pre_header
      _
    $region3: #{conv_bn_relu.3} parent=1 // loop_header
      %s20 = sphi 0, %s24
      %p21 = scmp.ge.s32.totalorder %s20, 4
      %s30 = sphi 0, %s32
      %s33 = sphi 0, %s30
      %s34 = sphi 0, %s33
      %s50 = sphi 0, %s34
      %s54 = sphi 0, %s54
      %s56 = sphi 0, %s54
      %s57 = sphi 0, %s56
      %s71 = sphi 0, %s57
      %s77 = sphi 0, %s79
      %s80 = sphi 0, %s77
      %s81 = sphi 0, %s80
      %s97 = sphi 0, %s81
      %s103 = sphi 0, %s105
      %s106 = sphi 0, %s103
      %s107 = sphi 0, %s106
      %s123 = sphi 0, %s107
    $region4: #{conv_bn_relu.3} parent=1 // loop_header_branch
      %23 = sbr.rel (%p21) target = $region8
    $region5: #{conv_bn_relu.3} parent=1 // loop_body
      %s25 = ssub.s32 %s20, 1
      %s26 = ssub.s32 %s20, 2
      %s27 = sadd.s32 %s20, 1
      %s28 = ssub.s32 %s20, %s27
      %p29 = scmp.eq.s32.totalorder %s28, 0
      %s31 = sadd.s32 %s30, 1
      %s32 = scalar_select %p29, %s30, %s31
      %p35 = pneg %p29
      %p36 = scmp.eq.s32.totalorder %s20, 1
      %p37 = por %p35, %p36
      %p38 = scmp.ne.s32.totalorder %s30, %s33
      %p39 = scmp.eq.s32.totalorder %s20, 0
      %p40 = por %p38, %p39
      %p41 = scmp.ne.s32.totalorder %s30, %s33
      %p42 = scmp.eq.s32.totalorder %s25, 1
      %p43 = por %p41, %p42
      %p44 = scmp.ne.s32.totalorder %s33, %s34
      %p45 = scmp.eq.s32.totalorder %s25, 0
      %p46 = por %p44, %p45
      %p47 = scmp.ne.s32.totalorder %s33, %s34
      %p48 = scmp.eq.s32.totalorder %s26, 1
      %p49 = por %p47, %p48
      %p51 = scmp.ne.s32.totalorder %s34, %s50
      %p52 = scmp.eq.s32.totalorder %s26, 0
      %p53 = por %p51, %p52
      %s55 = sadd.s32 %s54, 1
      %p58 = scmp.eq.s32.totalorder %s20, 1
      %p59 = scmp.ne.s32.totalorder %s54, %s56
      %p60 = scmp.eq.s32.totalorder %s20, 0
      %p61 = por %p59, %p60
      %p62 = scmp.ne.s32.totalorder %s54, %s56
      %p63 = scmp.eq.s32.totalorder %s25, 1
      %p64 = por %p62, %p63
      %p65 = scmp.ne.s32.totalorder %s56, %s57
      %p66 = scmp.eq.s32.totalorder %s25, 0
      %p67 = por %p65, %p66
      %p68 = scmp.ne.s32.totalorder %s56, %s57
      %p69 = scmp.eq.s32.totalorder %s26, 1
      %p70 = por %p68, %p69
      %p72 = scmp.ne.s32.totalorder %s57, %s71
      %p73 = scmp.eq.s32.totalorder %s26, 0
      %p74 = por %p72, %p73
      %s75 = ssub.s32 %s20, %s27
      %p76 = scmp.eq.s32.totalorder %s75, 0
      %s78 = sadd.s32 %s77, 1
      %s79 = scalar_select %p76, %s77, %s78
      %p82 = pneg %p76
      %p83 = scmp.eq.s32.totalorder %s20, 1
      %p84 = por %p82, %p83
      %p85 = scmp.ne.s32.totalorder %s77, %s80
      %p86 = scmp.eq.s32.totalorder %s20, 0
      %p87 = por %p85, %p86
      %p88 = scmp.ne.s32.totalorder %s77, %s80
      %p89 = scmp.eq.s32.totalorder %s25, 1
      %p90 = por %p88, %p89
      %p91 = scmp.ne.s32.totalorder %s80, %s81
      %p92 = scmp.eq.s32.totalorder %s25, 0
      %p93 = por %p91, %p92
      %p94 = scmp.ne.s32.totalorder %s80, %s81
      %p95 = scmp.eq.s32.totalorder %s26, 1
      %p96 = por %p94, %p95
      %p98 = scmp.ne.s32.totalorder %s81, %s97
      %p99 = scmp.eq.s32.totalorder %s26, 0
      %p100 = por %p98, %p99
      %s101 = ssub.s32 %s20, %s27
      %p102 = scmp.eq.s32.totalorder %s101, 0
      %s104 = sadd.s32 %s103, 1
      %s105 = scalar_select %p102, %s103, %s104
      %p108 = pneg %p102
      %p109 = scmp.eq.s32.totalorder %s20, 1
      %p110 = por %p108, %p109
      %p111 = scmp.ne.s32.totalorder %s103, %s106
      %p112 = scmp.eq.s32.totalorder %s20, 0
      %p113 = por %p111, %p112
      %p114 = scmp.ne.s32.totalorder %s103, %s106
      %p115 = scmp.eq.s32.totalorder %s25, 1
      %p116 = por %p114, %p115
      %p117 = scmp.ne.s32.totalorder %s106, %s107
      %p118 = scmp.eq.s32.totalorder %s25, 0
      %p119 = por %p117, %p118
      %p120 = scmp.ne.s32.totalorder %s106, %s107
      %p121 = scmp.eq.s32.totalorder %s26, 1
      %p122 = por %p120, %p121
      %p124 = scmp.ne.s32.totalorder %s107, %s123
      %p125 = scmp.eq.s32.totalorder %s26, 0
      %p126 = por %p124, %p125
      %p127 = scmp.le.s32.totalorder 1, %s20
      %p128 = scmp.lt.s32.totalorder %s20, 3
      %p129 = pnand %p127, %p128
      %p130 = pneg %p129
      // Predicated region
      $region9: #{conv_bn_relu.3} parent=5 // pred_check
        _
      $region10: #{conv_bn_relu.3} parent=5 // pred_check_branch
        %132 = sbr.rel (%p129) target = $region12
      $region11: #{conv_bn_relu.3} parent=5 // pred_region
        %s133 = ssub.s32 %s20, 1
        // Predicated region
        $region13: #{conv_bn_relu.3} parent=11 // pred_check
          %p134 = pneg %p67
        $region14: #{conv_bn_relu.3} parent=11 // pred_check_branch
          %136 = sbr.rel (%p134) target = $region16
        $region15: #{conv_bn_relu.3} parent=11 // pred_region
          %s138 = ssub.s32 288, 288
          %139 = vsyncadd [#allocation6], %s138
          %s140 = sshll.u32 [#allocation5], 4
          %s141 = int_to_ptr.vmem [resolvable:$true] %s140
          %146 = dma.hbm_to_vmem [thread:$0]  %s1, 288, %s141, [#allocation6], 32, 32, 2
        $region16: #{conv_bn_relu.3} parent=11 // pred_fallthru
          _
      $region12: #{conv_bn_relu.3} parent=5 // pred_fallthru
        _
      %p147 = scmp.lt.s32.totalorder %s20, 2
      // Predicated region
      $region17: #{conv_bn_relu.3} parent=5 // pred_check
        %p148 = pneg %p147
      $region18: #{conv_bn_relu.3} parent=5 // pred_check_branch
        %150 = sbr.rel (%p148) target = $region20
      $region19: #{conv_bn_relu.3} parent=5 // pred_region
        // Predicated region
        $region21: #{conv_bn_relu.3} parent=19 // pred_check
          %p151 = pneg %p40
        $region22: #{conv_bn_relu.3} parent=19 // pred_check_branch
          %153 = sbr.rel (%p151) target = $region24
        $region23: #{conv_bn_relu.3} parent=19 // pred_region
          %s154 = sand.u32 %s30, 1
          %s155 = scalar_lea.sflag [#allocation3], %s154
          %s156 = sand.u32 %s30, 1
          %s157 = smul.addr %s156, 216
          %s158 = scalar_lea.vmem [#allocation2], %s157
          %s160 = ssub.s32 3456, 3456
          %161 = vsyncadd %s155, %s160
          %s162 = smul.addr %s20, 54
          %s163 = smul.addr %s162, 64
          %s164 = scalar_lea.hbm %s0, %s163
          %s165 = sshll.u32 %s158, 4
          %s166 = int_to_ptr.vmem [resolvable:$true] %s165
          %171 = dma.hbm_to_vmem [thread:$0]  %s164, 3456, %s166, %s155, 64, 64, 4
        $region24: #{conv_bn_relu.3} parent=19 // pred_fallthru
          _
      $region20: #{conv_bn_relu.3} parent=5 // pred_fallthru
        _
      %p172 = scmp.le.s32.totalorder 1, %s20
      %p173 = scmp.lt.s32.totalorder %s20, 3
      %p174 = pnand %p172, %p173
      %p175 = pneg %p174
      // Predicated region
      $region25: #{conv_bn_relu.3} parent=5 // pred_check
        _
      $region26: #{conv_bn_relu.3} parent=5 // pred_check_branch
        %177 = sbr.rel (%p174) target = $region28
      $region27: #{conv_bn_relu.3} parent=5 // pred_region
        %s178 = ssub.s32 %s20, 1
        %s179 = sand.u32 %s33, 1
        %s180 = scalar_lea.sflag [#allocation3], %s179
        %s181 = sand.u32 %s33, 1
        %s182 = smul.addr %s181, 216
        %s183 = scalar_lea.vmem [#allocation2], %s182
        // Predicated region
        $region29: #{conv_bn_relu.3} parent=27 // pred_check
          %p184 = pneg %p46
        $region30: #{conv_bn_relu.3} parent=27 // pred_check_branch
          %186 = sbr.rel (%p184) target = $region32
        $region31: #{conv_bn_relu.3} parent=27 // pred_region
          %187 = dma.done %s180, 3456
        $region32: #{conv_bn_relu.3} parent=27 // pred_fallthru
          _
        // Predicated region
        $region33: #{conv_bn_relu.3} parent=27 // pred_check
          %p188 = pneg %p67
        $region34: #{conv_bn_relu.3} parent=27 // pred_check_branch
          %190 = sbr.rel (%p188) target = $region36
        $region35: #{conv_bn_relu.3} parent=27 // pred_region
          %191 = dma.done [#allocation6], 288
        $region36: #{conv_bn_relu.3} parent=27 // pred_fallthru
          _
        %s192 = sand.u32 %s33, 1
        %s193 = scalar_lea.sflag [#allocation3], %s192
        %s194 = sand.u32 %s33, 1
        %s195 = smul.addr %s194, 216
        %s196 = scalar_lea.vmem [#allocation2], %s195
        %p197 = pneg %p46
        %p198 = pneg %p43
        %p199 = pneg %p67
        %p200 = pneg %p64
        %p201 = pneg %p93
        %p202 = pneg %p90
        %s203 = sand.u32 %s80, 1
        %s204 = scalar_lea.sflag [#allocation4], %s203
        %s205 = sand.u32 %s80, 1
        %s206 = smul.addr %s205, 128
        %s207 = scalar_lea.vmem [#allocation7], %s206
        %p208 = pneg %p119
        %p209 = pneg %p116
        %s210 = sand.u32 %s106, 1
        %s211 = scalar_lea.sflag [#allocation9], %s210
        %s212 = sand.u32 %s106, 1
        %s213 = smul.addr %s212, 2
        %s214 = scalar_lea.vmem [#allocation8], %s213
        %v216 = vld [vmem:[%s183] sm:$0xf]
        %v217 = vld [vmem:[%s183 + $0x4] sm:$0xf]
        %v218 = vld [vmem:[%s183 + $0x8] sm:$0x1]
        %v219 = vld [vmem:[%s183 + $0xc] sm:$0xf]
        %v220 = vld [vmem:[%s183 + $0x10] sm:$0xf]
        %v221 = vld [vmem:[%s183 + $0x14] sm:$0x1]
        %v222 = vld [vmem:[%s183 + $0x18] sm:$0xf]
        %v223 = vld [vmem:[%s183 + $0x1c] sm:$0xf]
        %v224 = vld [vmem:[%s183 + $0x20] sm:$0x1]
        %v225 = vld [vmem:[%s183 + $0x24] sm:$0xf]
        %v226 = vld [vmem:[%s183 + $0x28] sm:$0xf]
        %v227 = vld [vmem:[%s183 + $0x2c] sm:$0x1]
        %v228 = vld [vmem:[%s183 + $0x30] sm:$0xf]
        %v229 = vld [vmem:[%s183 + $0x34] sm:$0xf]
        %v230 = vld [vmem:[%s183 + $0x38] sm:$0x1]
        %v231 = vld [vmem:[%s183 + $0x3c] sm:$0xf]
        %v232 = vld [vmem:[%s183 + $0x40] sm:$0xf]
        %v233 = vld [vmem:[%s183 + $0x44] sm:$0x1]
        %v234 = vld [vmem:[%s183 + $0x48] sm:$0xf]
        %v235 = vld [vmem:[%s183 + $0x4c] sm:$0xf]
        %v236 = vld [vmem:[%s183 + $0x50] sm:$0x1]
        %v237 = vld [vmem:[%s183 + $0x54] sm:$0xf]
        %v238 = vld [vmem:[%s183 + $0x58] sm:$0xf]
        %v239 = vld [vmem:[%s183 + $0x5c] sm:$0x1]
        %v240 = vld [vmem:[%s183 + $0x60] sm:$0xf]
        %v241 = vld [vmem:[%s183 + $0x64] sm:$0xf]
        %v242 = vld [vmem:[%s183 + $0x68] sm:$0x1]
        %v243 = vld [vmem:[%s183 + $0x6c] sm:$0xf]
        %v244 = vld [vmem:[%s183 + $0x70] sm:$0xf]
        %v245 = vld [vmem:[%s183 + $0x74] sm:$0x1]
        %v246 = vld [vmem:[%s183 + $0x78] sm:$0xf]
        %v247 = vld [vmem:[%s183 + $0x7c] sm:$0xf]
        %v248 = vld [vmem:[%s183 + $0x80] sm:$0x1]
        %v249 = vld [vmem:[%s183 + $0x84] sm:$0xf]
        %v250 = vld [vmem:[%s183 + $0x88] sm:$0xf]
        %v251 = vld [vmem:[%s183 + $0x8c] sm:$0x1]
        %v252 = vld [vmem:[%s183 + $0x90] sm:$0xf]
        %v253 = vld [vmem:[%s183 + $0x94] sm:$0xf]
        %v254 = vld [vmem:[%s183 + $0x98] sm:$0x1]
        %v255 = vld [vmem:[%s183 + $0x9c] sm:$0xf]
        %v256 = vld [vmem:[%s183 + $0xa0] sm:$0xf]
        %v257 = vld [vmem:[%s183 + $0xa4] sm:$0x1]
        %v258 = vld [vmem:[%s183 + $0xa8] sm:$0xf]
        %v259 = vld [vmem:[%s183 + $0xac] sm:$0xf]
        %v260 = vld [vmem:[%s183 + $0xb0] sm:$0x1]
        %v261 = vld [vmem:[%s183 + $0xb4] sm:$0xf]
        %v262 = vld [vmem:[%s183 + $0xb8] sm:$0xf]
        %v263 = vld [vmem:[%s183 + $0xbc] sm:$0x1]
        %v264 = vld [vmem:[%s183 + $0xc0] sm:$0xf]
        %v265 = vld [vmem:[%s183 + $0xc4] sm:$0xf]
        %v266 = vld [vmem:[%s183 + $0xc8] sm:$0x1]
        %v267 = vld [vmem:[%s183 + $0xcc] sm:$0xf]
        %v268 = vld [vmem:[%s183 + $0xd0] sm:$0xf]
        %v269 = vld [vmem:[%s183 + $0xd4] sm:$0x1]
        %v270 = vld [vmem:[#allocation5] sm:$0x3]
        %vm271 = vsmask.f32 3328
        %vm272 = vsmask.f32 7440
        %vm273 = vmor %vm271, %vm272
        %v275 = vshrl.u32 %v216, 16
        %v277 = vrot.slane %v275, 4
        %v278 = vshll.u32 %v216, 16
        %v280 = vrot.slane %v278, 5
        %v281 = vor.u32 %v277, %v280
        %v282 = vrot.slane %v281, 4
        %v284 = vshll.u32 %v217, 16
        %v286 = vrot.slane %v284, 5
        %v287 = vsel %vm273, %v282, %v286
        %v288 = vshrl.u32 %v217, 16
        %v290 = vrot.slane %v288, 4
        %v291 = vor.u32 %v290, %v286
        %v292 = vrot.slane %v291, 4
        %v294 = vshll.u32 %v218, 16
        %v296 = vrot.slane %v294, 5
        %v297 = vsel %vm273, %v292, %v296
        %v299 = vshrl.u32 %v219, 16
        %v301 = vrot.slane %v299, 4
        %v302 = vshll.u32 %v219, 16
        %v304 = vrot.slane %v302, 5
        %v305 = vor.u32 %v301, %v304
        %v306 = vrot.slane %v305, 4
        %v308 = vshll.u32 %v220, 16
        %v310 = vrot.slane %v308, 5
        %v311 = vsel %vm273, %v306, %v310
        %v312 = vshrl.u32 %v220, 16
        %v314 = vrot.slane %v312, 4
        %v315 = vor.u32 %v314, %v310
        %v316 = vrot.slane %v315, 4
        %v318 = vshll.u32 %v221, 16
        %v320 = vrot.slane %v318, 5
        %v321 = vsel %vm273, %v316, %v320
        %v323 = vshrl.u32 %v222, 16
        %v325 = vrot.slane %v323, 4
        %v326 = vshll.u32 %v222, 16
        %v328 = vrot.slane %v326, 5
        %v329 = vor.u32 %v325, %v328
        %v330 = vrot.slane %v329, 4
        %v332 = vshll.u32 %v223, 16
        %v334 = vrot.slane %v332, 5
        %v335 = vsel %vm273, %v330, %v334
        %v336 = vshrl.u32 %v223, 16
        %v338 = vrot.slane %v336, 4
        %v339 = vor.u32 %v338, %v334
        %v340 = vrot.slane %v339, 4
        %v342 = vshll.u32 %v224, 16
        %v344 = vrot.slane %v342, 5
        %v345 = vsel %vm273, %v340, %v344
        %v347 = vshrl.u32 %v225, 16
        %v349 = vrot.slane %v347, 4
        %v350 = vshll.u32 %v225, 16
        %v352 = vrot.slane %v350, 5
        %v353 = vor.u32 %v349, %v352
        %v354 = vrot.slane %v353, 4
        %v356 = vshll.u32 %v226, 16
        %v358 = vrot.slane %v356, 5
        %v359 = vsel %vm273, %v354, %v358
        %v360 = vshrl.u32 %v226, 16
        %v362 = vrot.slane %v360, 4
        %v363 = vor.u32 %v362, %v358
        %v364 = vrot.slane %v363, 4
        %v366 = vshll.u32 %v227, 16
        %v368 = vrot.slane %v366, 5
        %v369 = vsel %vm273, %v364, %v368
        %v371 = vshrl.u32 %v228, 16
        %v373 = vrot.slane %v371, 4
        %v374 = vshll.u32 %v228, 16
        %v376 = vrot.slane %v374, 5
        %v377 = vor.u32 %v373, %v376
        %v378 = vrot.slane %v377, 4
        %v380 = vshll.u32 %v229, 16
        %v382 = vrot.slane %v380, 5
        %v383 = vsel %vm273, %v378, %v382
        %v384 = vshrl.u32 %v229, 16
        %v386 = vrot.slane %v384, 4
        %v387 = vor.u32 %v386, %v382
        %v388 = vrot.slane %v387, 4
        %v390 = vshll.u32 %v230, 16
        %v392 = vrot.slane %v390, 5
        %v393 = vsel %vm273, %v388, %v392
        %v395 = vshrl.u32 %v231, 16
        %v397 = vrot.slane %v395, 4
        %v398 = vshll.u32 %v231, 16
        %v400 = vrot.slane %v398, 5
        %v401 = vor.u32 %v397, %v400
        %v402 = vrot.slane %v401, 4
        %v404 = vshll.u32 %v232, 16
        %v406 = vrot.slane %v404, 5
        %v407 = vsel %vm273, %v402, %v406
        %v408 = vshrl.u32 %v232, 16
        %v410 = vrot.slane %v408, 4
        %v411 = vor.u32 %v410, %v406
        %v412 = vrot.slane %v411, 4
        %v414 = vshll.u32 %v233, 16
        %v416 = vrot.slane %v414, 5
        %v417 = vsel %vm273, %v412, %v416
        %v419 = vshrl.u32 %v234, 16
        %v421 = vrot.slane %v419, 4
        %v422 = vshll.u32 %v234, 16
        %v424 = vrot.slane %v422, 5
        %v425 = vor.u32 %v421, %v424
        %v426 = vrot.slane %v425, 4
        %v428 = vshll.u32 %v235, 16
        %v430 = vrot.slane %v428, 5
        %v431 = vsel %vm273, %v426, %v430
        %v432 = vshrl.u32 %v235, 16
        %v434 = vrot.slane %v432, 4
        %v435 = vor.u32 %v434, %v430
        %v436 = vrot.slane %v435, 4
        %v438 = vshll.u32 %v236, 16
        %v440 = vrot.slane %v438, 5
        %v441 = vsel %vm273, %v436, %v440
        %v443 = vshrl.u32 %v237, 16
        %v445 = vrot.slane %v443, 4
        %v446 = vshll.u32 %v237, 16
        %v448 = vrot.slane %v446, 5
        %v449 = vor.u32 %v445, %v448
        %v450 = vrot.slane %v449, 4
        %v452 = vshll.u32 %v238, 16
        %v454 = vrot.slane %v452, 5
        %v455 = vsel %vm273, %v450, %v454
        %v456 = vshrl.u32 %v238, 16
        %v458 = vrot.slane %v456, 4
        %v459 = vor.u32 %v458, %v454
        %v460 = vrot.slane %v459, 4
        %v462 = vshll.u32 %v239, 16
        %v464 = vrot.slane %v462, 5
        %v465 = vsel %vm273, %v460, %v464
        %v467 = vshrl.u32 %v240, 16
        %v469 = vrot.slane %v467, 4
        %v470 = vshll.u32 %v240, 16
        %v472 = vrot.slane %v470, 5
        %v473 = vor.u32 %v469, %v472
        %v474 = vrot.slane %v473, 4
        %v476 = vshll.u32 %v241, 16
        %v478 = vrot.slane %v476, 5
        %v479 = vsel %vm273, %v474, %v478
        %v480 = vshrl.u32 %v241, 16
        %v482 = vrot.slane %v480, 4
        %v483 = vor.u32 %v482, %v478
        %v484 = vrot.slane %v483, 4
        %v486 = vshll.u32 %v242, 16
        %v488 = vrot.slane %v486, 5
        %v489 = vsel %vm273, %v484, %v488
        %v491 = vshrl.u32 %v243, 16
        %v493 = vrot.slane %v491, 4
        %v494 = vshll.u32 %v243, 16
        %v496 = vrot.slane %v494, 5
        %v497 = vor.u32 %v493, %v496
        %v498 = vrot.slane %v497, 4
        %v500 = vshll.u32 %v244, 16
        %v502 = vrot.slane %v500, 5
        %v503 = vsel %vm273, %v498, %v502
        %v504 = vshrl.u32 %v244, 16
        %v506 = vrot.slane %v504, 4
        %v507 = vor.u32 %v506, %v502
        %v508 = vrot.slane %v507, 4
        %v510 = vshll.u32 %v245, 16
        %v512 = vrot.slane %v510, 5
        %v513 = vsel %vm273, %v508, %v512
        %v515 = vshrl.u32 %v246, 16
        %v517 = vrot.slane %v515, 4
        %v518 = vshll.u32 %v246, 16
        %v520 = vrot.slane %v518, 5
        %v521 = vor.u32 %v517, %v520
        %v522 = vrot.slane %v521, 4
        %v524 = vshll.u32 %v247, 16
        %v526 = vrot.slane %v524, 5
        %v527 = vsel %vm273, %v522, %v526
        %v528 = vshrl.u32 %v247, 16
        %v530 = vrot.slane %v528, 4
        %v531 = vor.u32 %v530, %v526
        %v532 = vrot.slane %v531, 4
        %v534 = vshll.u32 %v248, 16
        %v536 = vrot.slane %v534, 5
        %v537 = vsel %vm273, %v532, %v536
        %v539 = vshrl.u32 %v249, 16
        %v541 = vrot.slane %v539, 4
        %v542 = vshll.u32 %v249, 16
        %v544 = vrot.slane %v542, 5
        %v545 = vor.u32 %v541, %v544
        %v546 = vrot.slane %v545, 4
        %v548 = vshll.u32 %v250, 16
        %v550 = vrot.slane %v548, 5
        %v551 = vsel %vm273, %v546, %v550
        %v552 = vshrl.u32 %v250, 16
        %v554 = vrot.slane %v552, 4
        %v555 = vor.u32 %v554, %v550
        %v556 = vrot.slane %v555, 4
        %v558 = vshll.u32 %v251, 16
        %v560 = vrot.slane %v558, 5
        %v561 = vsel %vm273, %v556, %v560
        %v563 = vshrl.u32 %v252, 16
        %v565 = vrot.slane %v563, 4
        %v566 = vshll.u32 %v252, 16
        %v568 = vrot.slane %v566, 5
        %v569 = vor.u32 %v565, %v568
        %v570 = vrot.slane %v569, 4
        %v572 = vshll.u32 %v253, 16
        %v574 = vrot.slane %v572, 5
        %v575 = vsel %vm273, %v570, %v574
        %v576 = vshrl.u32 %v253, 16
        %v578 = vrot.slane %v576, 4
        %v579 = vor.u32 %v578, %v574
        %v580 = vrot.slane %v579, 4
        %v582 = vshll.u32 %v254, 16
        %v584 = vrot.slane %v582, 5
        %v585 = vsel %vm273, %v580, %v584
        %v587 = vshrl.u32 %v255, 16
        %v589 = vrot.slane %v587, 4
        %v590 = vshll.u32 %v255, 16
        %v592 = vrot.slane %v590, 5
        %v593 = vor.u32 %v589, %v592
        %v594 = vrot.slane %v593, 4
        %v596 = vshll.u32 %v256, 16
        %v598 = vrot.slane %v596, 5
        %v599 = vsel %vm273, %v594, %v598
        %v600 = vshrl.u32 %v256, 16
        %v602 = vrot.slane %v600, 4
        %v603 = vor.u32 %v602, %v598
        %v604 = vrot.slane %v603, 4
        %v606 = vshll.u32 %v257, 16
        %v608 = vrot.slane %v606, 5
        %v609 = vsel %vm273, %v604, %v608
        %v611 = vshrl.u32 %v258, 16
        %v613 = vrot.slane %v611, 4
        %v614 = vshll.u32 %v258, 16
        %v616 = vrot.slane %v614, 5
        %v617 = vor.u32 %v613, %v616
        %v618 = vrot.slane %v617, 4
        %v620 = vshll.u32 %v259, 16
        %v622 = vrot.slane %v620, 5
        %v623 = vsel %vm273, %v618, %v622
        %v624 = vshrl.u32 %v259, 16
        %v626 = vrot.slane %v624, 4
        %v627 = vor.u32 %v626, %v622
        %v628 = vrot.slane %v627, 4
        %v630 = vshll.u32 %v260, 16
        %v632 = vrot.slane %v630, 5
        %v633 = vsel %vm273, %v628, %v632
        %v635 = vshrl.u32 %v261, 16
        %v637 = vrot.slane %v635, 4
        %v638 = vshll.u32 %v261, 16
        %v640 = vrot.slane %v638, 5
        %v641 = vor.u32 %v637, %v640
        %v642 = vrot.slane %v641, 4
        %v644 = vshll.u32 %v262, 16
        %v646 = vrot.slane %v644, 5
        %v647 = vsel %vm273, %v642, %v646
        %v648 = vshrl.u32 %v262, 16
        %v650 = vrot.slane %v648, 4
        %v651 = vor.u32 %v650, %v646
        %v652 = vrot.slane %v651, 4
        %v654 = vshll.u32 %v263, 16
        %v656 = vrot.slane %v654, 5
        %v657 = vsel %vm273, %v652, %v656
        %s658 = scalar_lea.vmem [#allocation5], 2
        %v659 = vld [vmem:[%s658] sm:$0x3]
        %v660 = vunpack.c.l.b16 %v287
        %v661 = vunpack.c.l.b16 %v297
        %v662 = vunpack.c.l.b16 %v311
        %v663 = vunpack.c.l.b16 %v321
        %v664 = vunpack.c.l.b16 %v335
        %v665 = vunpack.c.l.b16 %v345
        %v666 = vunpack.c.l.b16 %v359
        %v667 = vunpack.c.l.b16 %v369
        %v668 = vunpack.c.l.b16 %v383
        %v669 = vunpack.c.l.b16 %v393
        %v670 = vunpack.c.l.b16 %v407
        %v671 = vunpack.c.l.b16 %v417
        %v672 = vunpack.c.l.b16 %v431
        %v673 = vunpack.c.l.b16 %v441
        %v674 = vunpack.c.l.b16 %v455
        %v675 = vunpack.c.l.b16 %v465
        %v676 = vunpack.c.l.b16 %v479
        %v677 = vunpack.c.l.b16 %v489
        %v678 = vunpack.c.l.b16 %v503
        %v679 = vunpack.c.l.b16 %v513
        %v680 = vunpack.c.l.b16 %v527
        %v681 = vunpack.c.l.b16 %v537
        %v682 = vunpack.c.l.b16 %v551
        %v683 = vunpack.c.l.b16 %v561
        %v684 = vunpack.c.l.b16 %v575
        %v685 = vunpack.c.l.b16 %v585
        %v686 = vunpack.c.l.b16 %v599
        %v687 = vunpack.c.l.b16 %v609
        %v688 = vunpack.c.l.b16 %v623
        %v689 = vunpack.c.l.b16 %v633
        %v690 = vunpack.c.l.b16 %v647
        %v691 = vunpack.c.l.b16 %v657
        %v692 = vpack.c.b16 %v661, %v660
        %v693 = vpack.c.b16 %v663, %v662
        %v694 = vpack.c.b16 %v665, %v664
        %v695 = vpack.c.b16 %v667, %v666
        %v696 = vpack.c.b16 %v669, %v668
        %v697 = vpack.c.b16 %v671, %v670
        %v698 = vpack.c.b16 %v673, %v672
        %v699 = vpack.c.b16 %v675, %v674
        %v700 = vpack.c.b16 %v677, %v676
        %v701 = vpack.c.b16 %v679, %v678
        %v702 = vpack.c.b16 %v681, %v680
        %v703 = vpack.c.b16 %v683, %v682
        %v704 = vpack.c.b16 %v685, %v684
        %v705 = vpack.c.b16 %v687, %v686
        %v706 = vpack.c.b16 %v689, %v688
        %v707 = vpack.c.b16 %v691, %v690
        %vm708 = vcmask 31744
        %v710 = vsel %vm708, %v692, 0
        %v713 = vsel %vm708, %v693, 0
        %v716 = vsel %vm708, %v694, 0
        %v719 = vsel %vm708, %v695, 0
        %v722 = vsel %vm708, %v696, 0
        %v725 = vsel %vm708, %v697, 0
        %v728 = vsel %vm708, %v698, 0
        %v731 = vsel %vm708, %v699, 0
        %v734 = vsel %vm708, %v700, 0
        %v737 = vsel %vm708, %v701, 0
        %v740 = vsel %vm708, %v702, 0
        %v743 = vsel %vm708, %v703, 0
        %v746 = vsel %vm708, %v704, 0
        %v749 = vsel %vm708, %v705, 0
        %v752 = vsel %vm708, %v706, 0
        %v755 = vsel %vm708, %v707, 0
        %vm757 = vcmask 1041408
        %v759 = vsel %vm757, %v659, 0
        %761 = vmatprep.subr.bf16.mxu0 0
        %762 = vmatpush1.bf16.msra.mxu0 %v759
        %763 = vmatprep.subr.bf16.mxu0 0
        %764 = vmatpush1.bf16.msra.mxu0 0
        %765 = vmatprep.subr.bf16.mxu0 0
        %766 = vmatpush1.bf16.msra.mxu0 0
        %767 = vmatprep.subr.bf16.mxu0 0
        %768 = vmatpush1.bf16.msra.mxu0 0
        %769 = vmatprep.subr.bf16.mxu0 0
        %770 = vmatpush1.bf16.msra.mxu0 0
        %771 = vmatprep.subr.bf16.mxu0 0
        %772 = vmatpush1.bf16.msra.mxu0 0
        %773 = vmatprep.subr.bf16.mxu0 0
        %774 = vmatpush1.bf16.msra.mxu0 0
        %775 = vmatprep.subr.bf16.mxu0 0
        %776 = vmatpush1.bf16.msra.mxu0 0
        %777 = vmatprep.subr.bf16.mxu0 0
        %778 = vmatpush1.bf16.msra.mxu0 0
        %779 = vmatprep.subr.bf16.mxu0 0
        %780 = vmatpush1.bf16.msra.mxu0 0
        %781 = vmatprep.subr.bf16.mxu0 0
        %782 = vmatpush1.bf16.msra.mxu0 0
        %783 = vmatprep.subr.bf16.mxu0 0
        %784 = vmatpush1.bf16.msra.mxu0 0
        %785 = vmatprep.subr.bf16.mxu0 0
        %786 = vmatpush1.bf16.msra.mxu0 0
        %787 = vmatprep.subr.bf16.mxu0 0
        %788 = vmatpush1.bf16.msra.mxu0 0
        %789 = vmatprep.subr.bf16.mxu0 0
        %790 = vmatpush1.bf16.msra.mxu0 0
        %791 = vmatprep.subr.bf16.mxu0 0
        %792 = vmatpush1.bf16.msra.mxu0 0
        %793 = vmatprep.mubr.bf16.mxu0 0
        %794 = vmatmul.mubr.bf16.gmra.mrb[0].mxu0 %v710
        %v795 = vpop.f32.mrb[0].mxu0
        %v796 = vadd.f32 0.0, %v795
        %v797 = vpop.f32.mrb[0].mxu0
        %v798 = vpop.f32.mrb[0].mxu0
        %v799 = vadd.f32 0.0, %v798
        %v800 = vpop.f32.mrb[0].mxu0
        %801 = vmatprep.mubr.bf16.mxu0 0
        %802 = vmatmul.mubr.bf16.gmra.mrb[0].mxu0 %v713
        %v803 = vpop.f32.mrb[0].mxu0
        %v804 = vadd.f32 0.0, %v803
        %v805 = vpop.f32.mrb[0].mxu0
        %v806 = vpop.f32.mrb[0].mxu0
        %v807 = vadd.f32 0.0, %v806
        %v808 = vpop.f32.mrb[0].mxu0
        %809 = vmatprep.mubr.bf16.mxu0 0
        %810 = vmatmul.mubr.bf16.gmra.mrb[0].mxu0 %v716
        %v811 = vpop.f32.mrb[0].mxu0
        %v812 = vadd.f32 0.0, %v811
        %v813 = vpop.f32.mrb[0].mxu0
        %v814 = vpop.f32.mrb[0].mxu0
        %v815 = vadd.f32 0.0, %v814
        %v816 = vpop.f32.mrb[0].mxu0
        %817 = vmatprep.mubr.bf16.mxu0 0
        %818 = vmatmul.mubr.bf16.gmra.mrb[0].mxu0 %v719
        %v819 = vpop.f32.mrb[0].mxu0
        %v820 = vadd.f32 0.0, %v819
        %v821 = vpop.f32.mrb[0].mxu0
        %v822 = vpop.f32.mrb[0].mxu0
        %v823 = vadd.f32 0.0, %v822
        %v824 = vpop.f32.mrb[0].mxu0
        %825 = vmatprep.mubr.bf16.mxu0 0
        %826 = vmatmul.mubr.bf16.gmra.mrb[0].mxu0 %v722
        %v827 = vpop.f32.mrb[0].mxu0
        %v828 = vadd.f32 0.0, %v827
        %v829 = vpop.f32.mrb[0].mxu0
        %v830 = vpop.f32.mrb[0].mxu0
        %v831 = vadd.f32 0.0, %v830
        %v832 = vpop.f32.mrb[0].mxu0
        %833 = vmatprep.mubr.bf16.mxu0 0
        %834 = vmatmul.mubr.bf16.gmra.mrb[0].mxu0 %v725
        %v835 = vpop.f32.mrb[0].mxu0
        %v836 = vadd.f32 0.0, %v835
        %v837 = vpop.f32.mrb[0].mxu0
        %v838 = vpop.f32.mrb[0].mxu0
        %v839 = vadd.f32 0.0, %v838
        %v840 = vpop.f32.mrb[0].mxu0
        %841 = vmatprep.mubr.bf16.mxu0 0
        %842 = vmatmul.mubr.bf16.gmra.mrb[0].mxu0 %v728
        %v843 = vpop.f32.mrb[0].mxu0
        %v844 = vadd.f32 0.0, %v843
        %v845 = vpop.f32.mrb[0].mxu0
        %v846 = vpop.f32.mrb[0].mxu0
        %v847 = vadd.f32 0.0, %v846
        %v848 = vpop.f32.mrb[0].mxu0
        %849 = vmatprep.mubr.bf16.mxu0 0
        %850 = vmatmul.mubr.bf16.gmra.mrb[0].mxu0 %v731
        %v851 = vpop.f32.mrb[0].mxu0
        %v852 = vadd.f32 0.0, %v851
        %v853 = vpop.f32.mrb[0].mxu0
        %v854 = vpop.f32.mrb[0].mxu0
        %v855 = vadd.f32 0.0, %v854
        %v856 = vpop.f32.mrb[0].mxu0
        %857 = vmatprep.mubr.bf16.mxu0 0
        %858 = vmatmul.mubr.bf16.gmra.mrb[0].mxu0 %v734
        %v859 = vpop.f32.mrb[0].mxu0
        %v860 = vadd.f32 0.0, %v859
        %v861 = vpop.f32.mrb[0].mxu0
        %v862 = vpop.f32.mrb[0].mxu0
        %v863 = vadd.f32 0.0, %v862
        %v864 = vpop.f32.mrb[0].mxu0
        %865 = vmatprep.mubr.bf16.mxu0 0
        %866 = vmatmul.mubr.bf16.gmra.mrb[0].mxu0 %v737
        %v867 = vpop.f32.mrb[0].mxu0
        %v868 = vadd.f32 0.0, %v867
        %v869 = vpop.f32.mrb[0].mxu0
        %v870 = vpop.f32.mrb[0].mxu0
        %v871 = vadd.f32 0.0, %v870
        %v872 = vpop.f32.mrb[0].mxu0
        %873 = vmatprep.mubr.bf16.mxu0 0
        %874 = vmatmul.mubr.bf16.gmra.mrb[0].mxu0 %v740
        %v875 = vpop.f32.mrb[0].mxu0
        %v876 = vadd.f32 0.0, %v875
        %v877 = vpop.f32.mrb[0].mxu0
        %v878 = vpop.f32.mrb[0].mxu0
        %v879 = vadd.f32 0.0, %v878
        %v880 = vpop.f32.mrb[0].mxu0
        %881 = vmatprep.mubr.bf16.mxu0 0
        %882 = vmatmul.mubr.bf16.gmra.mrb[0].mxu0 %v743
        %v883 = vpop.f32.mrb[0].mxu0
        %v884 = vadd.f32 0.0, %v883
        %v885 = vpop.f32.mrb[0].mxu0
        %v886 = vpop.f32.mrb[0].mxu0
        %v887 = vadd.f32 0.0, %v886
        %v888 = vpop.f32.mrb[0].mxu0
        %889 = vmatprep.mubr.bf16.mxu0 0
        %890 = vmatmul.mubr.bf16.gmra.mrb[0].mxu0 %v746
        %v891 = vpop.f32.mrb[0].mxu0
        %v892 = vadd.f32 0.0, %v891
        %v893 = vpop.f32.mrb[0].mxu0
        %v894 = vpop.f32.mrb[0].mxu0
        %v895 = vadd.f32 0.0, %v894
        %v896 = vpop.f32.mrb[0].mxu0
        %897 = vmatprep.mubr.bf16.mxu0 0
        %898 = vmatmul.mubr.bf16.gmra.mrb[0].mxu0 %v749
        %v899 = vpop.f32.mrb[0].mxu0
        %v900 = vadd.f32 0.0, %v899
        %v901 = vpop.f32.mrb[0].mxu0
        %v902 = vpop.f32.mrb[0].mxu0
        %v903 = vadd.f32 0.0, %v902
        %v904 = vpop.f32.mrb[0].mxu0
        %905 = vmatprep.mubr.bf16.mxu0 0
        %906 = vmatmul.mubr.bf16.gmra.mrb[0].mxu0 %v752
        %v907 = vpop.f32.mrb[0].mxu0
        %v908 = vadd.f32 0.0, %v907
        %v909 = vpop.f32.mrb[0].mxu0
        %v910 = vpop.f32.mrb[0].mxu0
        %v911 = vadd.f32 0.0, %v910
        %v912 = vpop.f32.mrb[0].mxu0
        %913 = vmatprep.mubr.bf16.mxu0 0
        %914 = vmatmul.mubr.bf16.gmra.mrb[0].mxu0 %v755
        %v915 = vpop.f32.mrb[0].mxu0
        %v916 = vadd.f32 0.0, %v915
        %v917 = vpop.f32.mrb[0].mxu0
        %v918 = vpop.f32.mrb[0].mxu0
        %v919 = vadd.f32 0.0, %v918
        %v920 = vpop.f32.mrb[0].mxu0
        %921 = vdwg.mxu0
        %v954 = vunpack.c.l.b16 %v216
        %v955 = vunpack.c.l.b16 %v217
        %v956 = vunpack.c.l.b16 %v219
        %v957 = vunpack.c.l.b16 %v220
        %v958 = vunpack.c.l.b16 %v222
        %v959 = vunpack.c.l.b16 %v223
        %v960 = vunpack.c.l.b16 %v225
        %v961 = vunpack.c.l.b16 %v226
        %v962 = vunpack.c.l.b16 %v228
        %v963 = vunpack.c.l.b16 %v229
        %v964 = vunpack.c.l.b16 %v231
        %v965 = vunpack.c.l.b16 %v232
        %v966 = vunpack.c.l.b16 %v234
        %v967 = vunpack.c.l.b16 %v235
        %v968 = vunpack.c.l.b16 %v237
        %v969 = vunpack.c.l.b16 %v238
        %v970 = vunpack.c.l.b16 %v240
        %v971 = vunpack.c.l.b16 %v241
        %v972 = vunpack.c.l.b16 %v243
        %v973 = vunpack.c.l.b16 %v244
        %v974 = vunpack.c.l.b16 %v246
        %v975 = vunpack.c.l.b16 %v247
        %v976 = vunpack.c.l.b16 %v249
        %v977 = vunpack.c.l.b16 %v250
        %v978 = vunpack.c.l.b16 %v252
        %v979 = vunpack.c.l.b16 %v253
        %v980 = vunpack.c.l.b16 %v255
        %v981 = vunpack.c.l.b16 %v256
        %v982 = vunpack.c.l.b16 %v258
        %v983 = vunpack.c.l.b16 %v259
        %v984 = vunpack.c.l.b16 %v261
        %v985 = vunpack.c.l.b16 %v262
        %v986 = vpack.c.b16 %v955, %v954
        %v987 = vpack.c.b16 %v957, %v956
        %v988 = vpack.c.b16 %v959, %v958
        %v989 = vpack.c.b16 %v961, %v960
        %v990 = vpack.c.b16 %v963, %v962
        %v991 = vpack.c.b16 %v965, %v964
        %v992 = vpack.c.b16 %v967, %v966
        %v993 = vpack.c.b16 %v969, %v968
        %v994 = vpack.c.b16 %v971, %v970
        %v995 = vpack.c.b16 %v973, %v972
        %v996 = vpack.c.b16 %v975, %v974
        %v997 = vpack.c.b16 %v977, %v976
        %v998 = vpack.c.b16 %v979, %v978
        %v999 = vpack.c.b16 %v981, %v980
        %v1000 = vpack.c.b16 %v983, %v982
        %v1001 = vpack.c.b16 %v985, %v984
        %v1003 = vsel %vm708, %v986, 0
        %v1006 = vsel %vm708, %v987, 0
        %v1009 = vsel %vm708, %v988, 0
        %v1012 = vsel %vm708, %v989, 0
        %v1015 = vsel %vm708, %v990, 0
        %v1018 = vsel %vm708, %v991, 0
        %v1021 = vsel %vm708, %v992, 0
        %v1024 = vsel %vm708, %v993, 0
        %v1027 = vsel %vm708, %v994, 0
        %v1030 = vsel %vm708, %v995, 0
        %v1033 = vsel %vm708, %v996, 0
        %v1036 = vsel %vm708, %v997, 0
        %v1039 = vsel %vm708, %v998, 0
        %v1042 = vsel %vm708, %v999, 0
        %v1045 = vsel %vm708, %v1000, 0
        %v1048 = vsel %vm708, %v1001, 0
        %v1051 = vsel %vm757, %v270, 0
        %1053 = vmatprep.subr.bf16.mxu0 0
        %1054 = vmatpush1.bf16.msra.mxu0 %v1051
        %1055 = vmatprep.subr.bf16.mxu0 0
        %1056 = vmatpush1.bf16.msra.mxu0 0
        %1057 = vmatprep.subr.bf16.mxu0 0
        %1058 = vmatpush1.bf16.msra.mxu0 0
        %1059 = vmatprep.subr.bf16.mxu0 0
        %1060 = vmatpush1.bf16.msra.mxu0 0
        %1061 = vmatprep.subr.bf16.mxu0 0
        %1062 = vmatpush1.bf16.msra.mxu0 0
        %1063 = vmatprep.subr.bf16.mxu0 0
        %1064 = vmatpush1.bf16.msra.mxu0 0
        %1065 = vmatprep.subr.bf16.mxu0 0
        %1066 = vmatpush1.bf16.msra.mxu0 0
        %1067 = vmatprep.subr.bf16.mxu0 0
        %1068 = vmatpush1.bf16.msra.mxu0 0
        %1069 = vmatprep.subr.bf16.mxu0 0
        %1070 = vmatpush1.bf16.msra.mxu0 0
        %1071 = vmatprep.subr.bf16.mxu0 0
        %1072 = vmatpush1.bf16.msra.mxu0 0
        %1073 = vmatprep.subr.bf16.mxu0 0
        %1074 = vmatpush1.bf16.msra.mxu0 0
        %1075 = vmatprep.subr.bf16.mxu0 0
        %1076 = vmatpush1.bf16.msra.mxu0 0
        %1077 = vmatprep.subr.bf16.mxu0 0
        %1078 = vmatpush1.bf16.msra.mxu0 0
        %1079 = vmatprep.subr.bf16.mxu0 0
        %1080 = vmatpush1.bf16.msra.mxu0 0
        %1081 = vmatprep.subr.bf16.mxu0 0
        %1082 = vmatpush1.bf16.msra.mxu0 0
        %1083 = vmatprep.subr.bf16.mxu0 0
        %1084 = vmatpush1.bf16.msra.mxu0 0
        %1085 = vmatprep.mubr.bf16.mxu0 0
        %1086 = vmatmul.mubr.bf16.gmra.mrb[0].mxu0 %v1003
        %v1087 = vpop.f32.mrb[0].mxu0
        %v1088 = vadd.f32 %v796, %v1087
        %v1089 = vpop.f32.mrb[0].mxu0
        %v1090 = vpop.f32.mrb[0].mxu0
        %v1091 = vadd.f32 %v799, %v1090
        %v1092 = vpop.f32.mrb[0].mxu0
        %1093 = vmatprep.mubr.bf16.mxu0 0
        %1094 = vmatmul.mubr.bf16.gmra.mrb[0].mxu0 %v1006
        %v1095 = vpop.f32.mrb[0].mxu0
        %v1096 = vadd.f32 %v804, %v1095
        %v1097 = vpop.f32.mrb[0].mxu0
        %v1098 = vpop.f32.mrb[0].mxu0
        %v1099 = vadd.f32 %v807, %v1098
        %v1100 = vpop.f32.mrb[0].mxu0
        %1101 = vmatprep.mubr.bf16.mxu0 0
        %1102 = vmatmul.mubr.bf16.gmra.mrb[0].mxu0 %v1009
        %v1103 = vpop.f32.mrb[0].mxu0
        %v1104 = vadd.f32 %v812, %v1103
        %v1105 = vpop.f32.mrb[0].mxu0
        %v1106 = vpop.f32.mrb[0].mxu0
        %v1107 = vadd.f32 %v815, %v1106
        %v1108 = vpop.f32.mrb[0].mxu0
        %1109 = vmatprep.mubr.bf16.mxu0 0
        %1110 = vmatmul.mubr.bf16.gmra.mrb[0].mxu0 %v1012
        %v1111 = vpop.f32.mrb[0].mxu0
        %v1112 = vadd.f32 %v820, %v1111
        %v1113 = vpop.f32.mrb[0].mxu0
        %v1114 = vpop.f32.mrb[0].mxu0
        %v1115 = vadd.f32 %v823, %v1114
        %v1116 = vpop.f32.mrb[0].mxu0
        %1117 = vmatprep.mubr.bf16.mxu0 0
        %1118 = vmatmul.mubr.bf16.gmra.mrb[0].mxu0 %v1015
        %v1119 = vpop.f32.mrb[0].mxu0
        %v1120 = vadd.f32 %v828, %v1119
        %v1121 = vpop.f32.mrb[0].mxu0
        %v1122 = vpop.f32.mrb[0].mxu0
        %v1123 = vadd.f32 %v831, %v1122
        %v1124 = vpop.f32.mrb[0].mxu0
        %1125 = vmatprep.mubr.bf16.mxu0 0
        %1126 = vmatmul.mubr.bf16.gmra.mrb[0].mxu0 %v1018
        %v1127 = vpop.f32.mrb[0].mxu0
        %v1128 = vadd.f32 %v836, %v1127
        %v1129 = vpop.f32.mrb[0].mxu0
        %v1130 = vpop.f32.mrb[0].mxu0
        %v1131 = vadd.f32 %v839, %v1130
        %v1132 = vpop.f32.mrb[0].mxu0
        %1133 = vmatprep.mubr.bf16.mxu0 0
        %1134 = vmatmul.mubr.bf16.gmra.mrb[0].mxu0 %v1021
        %v1135 = vpop.f32.mrb[0].mxu0
        %v1136 = vadd.f32 %v844, %v1135
        %v1137 = vpop.f32.mrb[0].mxu0
        %v1138 = vpop.f32.mrb[0].mxu0
        %v1139 = vadd.f32 %v847, %v1138
        %v1140 = vpop.f32.mrb[0].mxu0
        %1141 = vmatprep.mubr.bf16.mxu0 0
        %1142 = vmatmul.mubr.bf16.gmra.mrb[0].mxu0 %v1024
        %v1143 = vpop.f32.mrb[0].mxu0
        %v1144 = vadd.f32 %v852, %v1143
        %v1145 = vpop.f32.mrb[0].mxu0
        %v1146 = vpop.f32.mrb[0].mxu0
        %v1147 = vadd.f32 %v855, %v1146
        %v1148 = vpop.f32.mrb[0].mxu0
        %1149 = vmatprep.mubr.bf16.mxu0 0
        %1150 = vmatmul.mubr.bf16.gmra.mrb[0].mxu0 %v1027
        %v1151 = vpop.f32.mrb[0].mxu0
        %v1152 = vadd.f32 %v860, %v1151
        %v1153 = vpop.f32.mrb[0].mxu0
        %v1154 = vpop.f32.mrb[0].mxu0
        %v1155 = vadd.f32 %v863, %v1154
        %v1156 = vpop.f32.mrb[0].mxu0
        %1157 = vmatprep.mubr.bf16.mxu0 0
        %1158 = vmatmul.mubr.bf16.gmra.mrb[0].mxu0 %v1030
        %v1159 = vpop.f32.mrb[0].mxu0
        %v1160 = vadd.f32 %v868, %v1159
        %v1161 = vpop.f32.mrb[0].mxu0
        %v1162 = vpop.f32.mrb[0].mxu0
        %v1163 = vadd.f32 %v871, %v1162
        %v1164 = vpop.f32.mrb[0].mxu0
        %1165 = vmatprep.mubr.bf16.mxu0 0
        %1166 = vmatmul.mubr.bf16.gmra.mrb[0].mxu0 %v1033
        %v1167 = vpop.f32.mrb[0].mxu0
        %v1168 = vadd.f32 %v876, %v1167
        %v1169 = vpop.f32.mrb[0].mxu0
        %v1170 = vpop.f32.mrb[0].mxu0
        %v1171 = vadd.f32 %v879, %v1170
        %v1172 = vpop.f32.mrb[0].mxu0
        %1173 = vmatprep.mubr.bf16.mxu0 0
        %1174 = vmatmul.mubr.bf16.gmra.mrb[0].mxu0 %v1036
        %v1175 = vpop.f32.mrb[0].mxu0
        %v1176 = vadd.f32 %v884, %v1175
        %v1177 = vpop.f32.mrb[0].mxu0
        %v1178 = vpop.f32.mrb[0].mxu0
        %v1179 = vadd.f32 %v887, %v1178
        %v1180 = vpop.f32.mrb[0].mxu0
        %1181 = vmatprep.mubr.bf16.mxu0 0
        %1182 = vmatmul.mubr.bf16.gmra.mrb[0].mxu0 %v1039
        %v1183 = vpop.f32.mrb[0].mxu0
        %v1184 = vadd.f32 %v892, %v1183
        %v1185 = vpop.f32.mrb[0].mxu0
        %v1186 = vpop.f32.mrb[0].mxu0
        %v1187 = vadd.f32 %v895, %v1186
        %v1188 = vpop.f32.mrb[0].mxu0
        %1189 = vmatprep.mubr.bf16.mxu0 0
        %1190 = vmatmul.mubr.bf16.gmra.mrb[0].mxu0 %v1042
        %v1191 = vpop.f32.mrb[0].mxu0
        %v1192 = vadd.f32 %v900, %v1191
        %v1193 = vpop.f32.mrb[0].mxu0
        %v1194 = vpop.f32.mrb[0].mxu0
        %v1195 = vadd.f32 %v903, %v1194
        %v1196 = vpop.f32.mrb[0].mxu0
        %1197 = vmatprep.mubr.bf16.mxu0 0
        %1198 = vmatmul.mubr.bf16.gmra.mrb[0].mxu0 %v1045
        %v1199 = vpop.f32.mrb[0].mxu0
        %v1200 = vadd.f32 %v908, %v1199
        %v1201 = vpop.f32.mrb[0].mxu0
        %v1202 = vpop.f32.mrb[0].mxu0
        %v1203 = vadd.f32 %v911, %v1202
        %v1204 = vpop.f32.mrb[0].mxu0
        %1205 = vmatprep.mubr.bf16.mxu0 0
        %1206 = vmatmul.mubr.bf16.gmra.mrb[0].mxu0 %v1048
        %v1207 = vpop.f32.mrb[0].mxu0
        %v1208 = vadd.f32 %v916, %v1207
        %v1209 = vpop.f32.mrb[0].mxu0
        %v1210 = vpop.f32.mrb[0].mxu0
        %v1211 = vadd.f32 %v919, %v1210
        %v1212 = vpop.f32.mrb[0].mxu0
        %1213 = vdwg.mxu0
        %vm1230 = vcmask 1042432
        %vm1231 = vcmask 1046532
        %vm1232 = vmor %vm1230, %vm1231
        %v1233 = vrot.slane %v216, 5
        %v1234 = vrot.slane %v1233, 4
        %v1235 = vrot.slane %v217, 5
        %v1236 = vsel %vm1232, %v1234, %v1235
        %v1237 = vrot.slane %v1235, 4
        %v1238 = vrot.slane %v218, 5
        %v1239 = vsel %vm1232, %v1237, %v1238
        %v1240 = vrot.slane %v219, 5
        %v1241 = vrot.slane %v1240, 4
        %v1242 = vrot.slane %v220, 5
        %v1243 = vsel %vm1232, %v1241, %v1242
        %v1244 = vrot.slane %v1242, 4
        %v1245 = vrot.slane %v221, 5
        %v1246 = vsel %vm1232, %v1244, %v1245
        %v1247 = vrot.slane %v222, 5
        %v1248 = vrot.slane %v1247, 4
        %v1249 = vrot.slane %v223, 5
        %v1250 = vsel %vm1232, %v1248, %v1249
        %v1251 = vrot.slane %v1249, 4
        %v1252 = vrot.slane %v224, 5
        %v1253 = vsel %vm1232, %v1251, %v1252
        %v1254 = vrot.slane %v225, 5
        %v1255 = vrot.slane %v1254, 4
        %v1256 = vrot.slane %v226, 5
        %v1257 = vsel %vm1232, %v1255, %v1256
        %v1258 = vrot.slane %v1256, 4
        %v1259 = vrot.slane %v227, 5
        %v1260 = vsel %vm1232, %v1258, %v1259
        %v1261 = vrot.slane %v228, 5
        %v1262 = vrot.slane %v1261, 4
        %v1263 = vrot.slane %v229, 5
        %v1264 = vsel %vm1232, %v1262, %v1263
        %v1265 = vrot.slane %v1263, 4
        %v1266 = vrot.slane %v230, 5
        %v1267 = vsel %vm1232, %v1265, %v1266
        %v1268 = vrot.slane %v231, 5
        %v1269 = vrot.slane %v1268, 4
        %v1270 = vrot.slane %v232, 5
        %v1271 = vsel %vm1232, %v1269, %v1270
        %v1272 = vrot.slane %v1270, 4
        %v1273 = vrot.slane %v233, 5
        %v1274 = vsel %vm1232, %v1272, %v1273
        %v1275 = vrot.slane %v234, 5
        %v1276 = vrot.slane %v1275, 4
        %v1277 = vrot.slane %v235, 5
        %v1278 = vsel %vm1232, %v1276, %v1277
        %v1279 = vrot.slane %v1277, 4
        %v1280 = vrot.slane %v236, 5
        %v1281 = vsel %vm1232, %v1279, %v1280
        %v1282 = vrot.slane %v237, 5
        %v1283 = vrot.slane %v1282, 4
        %v1284 = vrot.slane %v238, 5
        %v1285 = vsel %vm1232, %v1283, %v1284
        %v1286 = vrot.slane %v1284, 4
        %v1287 = vrot.slane %v239, 5
        %v1288 = vsel %vm1232, %v1286, %v1287
        %v1289 = vrot.slane %v240, 5
        %v1290 = vrot.slane %v1289, 4
        %v1291 = vrot.slane %v241, 5
        %v1292 = vsel %vm1232, %v1290, %v1291
        %v1293 = vrot.slane %v1291, 4
        %v1294 = vrot.slane %v242, 5
        %v1295 = vsel %vm1232, %v1293, %v1294
        %v1296 = vrot.slane %v243, 5
        %v1297 = vrot.slane %v1296, 4
        %v1298 = vrot.slane %v244, 5
        %v1299 = vsel %vm1232, %v1297, %v1298
        %v1300 = vrot.slane %v1298, 4
        %v1301 = vrot.slane %v245, 5
        %v1302 = vsel %vm1232, %v1300, %v1301
        %v1303 = vrot.slane %v246, 5
        %v1304 = vrot.slane %v1303, 4
        %v1305 = vrot.slane %v247, 5
        %v1306 = vsel %vm1232, %v1304, %v1305
        %v1307 = vrot.slane %v1305, 4
        %v1308 = vrot.slane %v248, 5
        %v1309 = vsel %vm1232, %v1307, %v1308
        %v1310 = vrot.slane %v249, 5
        %v1311 = vrot.slane %v1310, 4
        %v1312 = vrot.slane %v250, 5
        %v1313 = vsel %vm1232, %v1311, %v1312
        %v1314 = vrot.slane %v1312, 4
        %v1315 = vrot.slane %v251, 5
        %v1316 = vsel %vm1232, %v1314, %v1315
        %v1317 = vrot.slane %v252, 5
        %v1318 = vrot.slane %v1317, 4
        %v1319 = vrot.slane %v253, 5
        %v1320 = vsel %vm1232, %v1318, %v1319
        %v1321 = vrot.slane %v1319, 4
        %v1322 = vrot.slane %v254, 5
        %v1323 = vsel %vm1232, %v1321, %v1322
        %v1324 = vrot.slane %v255, 5
        %v1325 = vrot.slane %v1324, 4
        %v1326 = vrot.slane %v256, 5
        %v1327 = vsel %vm1232, %v1325, %v1326
        %v1328 = vrot.slane %v1326, 4
        %v1329 = vrot.slane %v257, 5
        %v1330 = vsel %vm1232, %v1328, %v1329
        %v1331 = vrot.slane %v258, 5
        %v1332 = vrot.slane %v1331, 4
        %v1333 = vrot.slane %v259, 5
        %v1334 = vsel %vm1232, %v1332, %v1333
        %v1335 = vrot.slane %v1333, 4
        %v1336 = vrot.slane %v260, 5
        %v1337 = vsel %vm1232, %v1335, %v1336
        %v1338 = vrot.slane %v261, 5
        %v1339 = vrot.slane %v1338, 4
        %v1340 = vrot.slane %v262, 5
        %v1341 = vsel %vm1232, %v1339, %v1340
        %v1342 = vrot.slane %v1340, 4
        %v1343 = vrot.slane %v263, 5
        %v1344 = vsel %vm1232, %v1342, %v1343
        %s1345 = scalar_lea.vmem [#allocation5], 4
        %v1346 = vld [vmem:[%s1345] sm:$0x3]
        %v1347 = vunpack.c.l.b16 %v1236
        %v1348 = vunpack.c.l.b16 %v1239
        %v1349 = vunpack.c.l.b16 %v1243
        %v1350 = vunpack.c.l.b16 %v1246
        %v1351 = vunpack.c.l.b16 %v1250
        %v1352 = vunpack.c.l.b16 %v1253
        %v1353 = vunpack.c.l.b16 %v1257
        %v1354 = vunpack.c.l.b16 %v1260
        %v1355 = vunpack.c.l.b16 %v1264
        %v1356 = vunpack.c.l.b16 %v1267
        %v1357 = vunpack.c.l.b16 %v1271
        %v1358 = vunpack.c.l.b16 %v1274
        %v1359 = vunpack.c.l.b16 %v1278
        %v1360 = vunpack.c.l.b16 %v1281
        %v1361 = vunpack.c.l.b16 %v1285
        %v1362 = vunpack.c.l.b16 %v1288
        %v1363 = vunpack.c.l.b16 %v1292
        %v1364 = vunpack.c.l.b16 %v1295
        %v1365 = vunpack.c.l.b16 %v1299
        %v1366 = vunpack.c.l.b16 %v1302
        %v1367 = vunpack.c.l.b16 %v1306
        %v1368 = vunpack.c.l.b16 %v1309
        %v1369 = vunpack.c.l.b16 %v1313
        %v1370 = vunpack.c.l.b16 %v1316
        %v1371 = vunpack.c.l.b16 %v1320
        %v1372 = vunpack.c.l.b16 %v1323
        %v1373 = vunpack.c.l.b16 %v1327
        %v1374 = vunpack.c.l.b16 %v1330
        %v1375 = vunpack.c.l.b16 %v1334
        %v1376 = vunpack.c.l.b16 %v1337
        %v1377 = vunpack.c.l.b16 %v1341
        %v1378 = vunpack.c.l.b16 %v1344
        %v1379 = vpack.c.b16 %v1348, %v1347
        %v1380 = vpack.c.b16 %v1350, %v1349
        %v1381 = vpack.c.b16 %v1352, %v1351
        %v1382 = vpack.c.b16 %v1354, %v1353
        %v1383 = vpack.c.b16 %v1356, %v1355
        %v1384 = vpack.c.b16 %v1358, %v1357
        %v1385 = vpack.c.b16 %v1360, %v1359
        %v1386 = vpack.c.b16 %v1362, %v1361
        %v1387 = vpack.c.b16 %v1364, %v1363
        %v1388 = vpack.c.b16 %v1366, %v1365
        %v1389 = vpack.c.b16 %v1368, %v1367
        %v1390 = vpack.c.b16 %v1370, %v1369
        %v1391 = vpack.c.b16 %v1372, %v1371
        %v1392 = vpack.c.b16 %v1374, %v1373
        %v1393 = vpack.c.b16 %v1376, %v1375
        %v1394 = vpack.c.b16 %v1378, %v1377
        %v1396 = vsel %vm708, %v1379, 0
        %v1399 = vsel %vm708, %v1380, 0
        %v1402 = vsel %vm708, %v1381, 0
        %v1405 = vsel %vm708, %v1382, 0
        %v1408 = vsel %vm708, %v1383, 0
        %v1411 = vsel %vm708, %v1384, 0
        %v1414 = vsel %vm708, %v1385, 0
        %v1417 = vsel %vm708, %v1386, 0
        %v1420 = vsel %vm708, %v1387, 0
        %v1423 = vsel %vm708, %v1388, 0
        %v1426 = vsel %vm708, %v1389, 0
        %v1429 = vsel %vm708, %v1390, 0
        %v1432 = vsel %vm708, %v1391, 0
        %v1435 = vsel %vm708, %v1392, 0
        %v1438 = vsel %vm708, %v1393, 0
        %v1441 = vsel %vm708, %v1394, 0
        %v1444 = vsel %vm757, %v1346, 0
        %1446 = vmatprep.subr.bf16.mxu0 0
        %1447 = vmatpush1.bf16.msra.mxu0 %v1444
        %1448 = vmatprep.subr.bf16.mxu0 0
        %1449 = vmatpush1.bf16.msra.mxu0 0
        %1450 = vmatprep.subr.bf16.mxu0 0
        %1451 = vmatpush1.bf16.msra.mxu0 0
        %1452 = vmatprep.subr.bf16.mxu0 0
        %1453 = vmatpush1.bf16.msra.mxu0 0
        %1454 = vmatprep.subr.bf16.mxu0 0
        %1455 = vmatpush1.bf16.msra.mxu0 0
        %1456 = vmatprep.subr.bf16.mxu0 0
        %1457 = vmatpush1.bf16.msra.mxu0 0
        %1458 = vmatprep.subr.bf16.mxu0 0
        %1459 = vmatpush1.bf16.msra.mxu0 0
        %1460 = vmatprep.subr.bf16.mxu0 0
        %1461 = vmatpush1.bf16.msra.mxu0 0
        %1462 = vmatprep.subr.bf16.mxu0 0
        %1463 = vmatpush1.bf16.msra.mxu0 0
        %1464 = vmatprep.subr.bf16.mxu0 0
        %1465 = vmatpush1.bf16.msra.mxu0 0
        %1466 = vmatprep.subr.bf16.mxu0 0
        %1467 = vmatpush1.bf16.msra.mxu0 0
        %1468 = vmatprep.subr.bf16.mxu0 0
        %1469 = vmatpush1.bf16.msra.mxu0 0
        %1470 = vmatprep.subr.bf16.mxu0 0
        %1471 = vmatpush1.bf16.msra.mxu0 0
        %1472 = vmatprep.subr.bf16.mxu0 0
        %1473 = vmatpush1.bf16.msra.mxu0 0
        %1474 = vmatprep.subr.bf16.mxu0 0
        %1475 = vmatpush1.bf16.msra.mxu0 0
        %1476 = vmatprep.subr.bf16.mxu0 0
        %1477 = vmatpush1.bf16.msra.mxu0 0
        %1478 = vmatprep.mubr.bf16.mxu0 0
        %1479 = vmatmul.mubr.bf16.gmra.mrb[0].mxu0 %v1396
        %v1480 = vpop.f32.mrb[0].mxu0
        %v1481 = vadd.f32 0.0, %v1480
        %v1482 = vpop.f32.mrb[0].mxu0
        %v1483 = vpop.f32.mrb[0].mxu0
        %v1484 = vadd.f32 0.0, %v1483
        %v1485 = vpop.f32.mrb[0].mxu0
        %1486 = vmatprep.mubr.bf16.mxu0 0
        %1487 = vmatmul.mubr.bf16.gmra.mrb[0].mxu0 %v1399
        %v1488 = vpop.f32.mrb[0].mxu0
        %v1489 = vadd.f32 0.0, %v1488
        %v1490 = vpop.f32.mrb[0].mxu0
        %v1491 = vpop.f32.mrb[0].mxu0
        %v1492 = vadd.f32 0.0, %v1491
        %v1493 = vpop.f32.mrb[0].mxu0
        %1494 = vmatprep.mubr.bf16.mxu0 0
        %1495 = vmatmul.mubr.bf16.gmra.mrb[0].mxu0 %v1402
        %v1496 = vpop.f32.mrb[0].mxu0
        %v1497 = vadd.f32 0.0, %v1496
        %v1498 = vpop.f32.mrb[0].mxu0
        %v1499 = vpop.f32.mrb[0].mxu0
        %v1500 = vadd.f32 0.0, %v1499
        %v1501 = vpop.f32.mrb[0].mxu0
        %1502 = vmatprep.mubr.bf16.mxu0 0
        %1503 = vmatmul.mubr.bf16.gmra.mrb[0].mxu0 %v1405
        %v1504 = vpop.f32.mrb[0].mxu0
        %v1505 = vadd.f32 0.0, %v1504
        %v1506 = vpop.f32.mrb[0].mxu0
        %v1507 = vpop.f32.mrb[0].mxu0
        %v1508 = vadd.f32 0.0, %v1507
        %v1509 = vpop.f32.mrb[0].mxu0
        %1510 = vmatprep.mubr.bf16.mxu0 0
        %1511 = vmatmul.mubr.bf16.gmra.mrb[0].mxu0 %v1408
        %v1512 = vpop.f32.mrb[0].mxu0
        %v1513 = vadd.f32 0.0, %v1512
        %v1514 = vpop.f32.mrb[0].mxu0
        %v1515 = vpop.f32.mrb[0].mxu0
        %v1516 = vadd.f32 0.0, %v1515
        %v1517 = vpop.f32.mrb[0].mxu0
        %1518 = vmatprep.mubr.bf16.mxu0 0
        %1519 = vmatmul.mubr.bf16.gmra.mrb[0].mxu0 %v1411
        %v1520 = vpop.f32.mrb[0].mxu0
        %v1521 = vadd.f32 0.0, %v1520
        %v1522 = vpop.f32.mrb[0].mxu0
        %v1523 = vpop.f32.mrb[0].mxu0
        %v1524 = vadd.f32 0.0, %v1523
        %v1525 = vpop.f32.mrb[0].mxu0
        %1526 = vmatprep.mubr.bf16.mxu0 0
        %1527 = vmatmul.mubr.bf16.gmra.mrb[0].mxu0 %v1414
        %v1528 = vpop.f32.mrb[0].mxu0
        %v1529 = vadd.f32 0.0, %v1528
        %v1530 = vpop.f32.mrb[0].mxu0
        %v1531 = vpop.f32.mrb[0].mxu0
        %v1532 = vadd.f32 0.0, %v1531
        %v1533 = vpop.f32.mrb[0].mxu0
        %1534 = vmatprep.mubr.bf16.mxu0 0
        %1535 = vmatmul.mubr.bf16.gmra.mrb[0].mxu0 %v1417
        %v1536 = vpop.f32.mrb[0].mxu0
        %v1537 = vadd.f32 0.0, %v1536
        %v1538 = vpop.f32.mrb[0].mxu0
        %v1539 = vpop.f32.mrb[0].mxu0
        %v1540 = vadd.f32 0.0, %v1539
        %v1541 = vpop.f32.mrb[0].mxu0
        %1542 = vmatprep.mubr.bf16.mxu0 0
        %1543 = vmatmul.mubr.bf16.gmra.mrb[0].mxu0 %v1420
        %v1544 = vpop.f32.mrb[0].mxu0
        %v1545 = vadd.f32 0.0, %v1544
        %v1546 = vpop.f32.mrb[0].mxu0
        %v1547 = vpop.f32.mrb[0].mxu0
        %v1548 = vadd.f32 0.0, %v1547
        %v1549 = vpop.f32.mrb[0].mxu0
        %1550 = vmatprep.mubr.bf16.mxu0 0
        %1551 = vmatmul.mubr.bf16.gmra.mrb[0].mxu0 %v1423
        %v1552 = vpop.f32.mrb[0].mxu0
        %v1553 = vadd.f32 0.0, %v1552
        %v1554 = vpop.f32.mrb[0].mxu0
        %v1555 = vpop.f32.mrb[0].mxu0
        %v1556 = vadd.f32 0.0, %v1555
        %v1557 = vpop.f32.mrb[0].mxu0
        %1558 = vmatprep.mubr.bf16.mxu0 0
        %1559 = vmatmul.mubr.bf16.gmra.mrb[0].mxu0 %v1426
        %v1560 = vpop.f32.mrb[0].mxu0
        %v1561 = vadd.f32 0.0, %v1560
        %v1562 = vpop.f32.mrb[0].mxu0
        %v1563 = vpop.f32.mrb[0].mxu0
        %v1564 = vadd.f32 0.0, %v1563
        %v1565 = vpop.f32.mrb[0].mxu0
        %1566 = vmatprep.mubr.bf16.mxu0 0
        %1567 = vmatmul.mubr.bf16.gmra.mrb[0].mxu0 %v1429
        %v1568 = vpop.f32.mrb[0].mxu0
        %v1569 = vadd.f32 0.0, %v1568
        %v1570 = vpop.f32.mrb[0].mxu0
        %v1571 = vpop.f32.mrb[0].mxu0
        %v1572 = vadd.f32 0.0, %v1571
        %v1573 = vpop.f32.mrb[0].mxu0
        %1574 = vmatprep.mubr.bf16.mxu0 0
        %1575 = vmatmul.mubr.bf16.gmra.mrb[0].mxu0 %v1432
        %v1576 = vpop.f32.mrb[0].mxu0
        %v1577 = vadd.f32 0.0, %v1576
        %v1578 = vpop.f32.mrb[0].mxu0
        %v1579 = vpop.f32.mrb[0].mxu0
        %v1580 = vadd.f32 0.0, %v1579
        %v1581 = vpop.f32.mrb[0].mxu0
        %1582 = vmatprep.mubr.bf16.mxu0 0
        %1583 = vmatmul.mubr.bf16.gmra.mrb[0].mxu0 %v1435
        %v1584 = vpop.f32.mrb[0].mxu0
        %v1585 = vadd.f32 0.0, %v1584
        %v1586 = vpop.f32.mrb[0].mxu0
        %v1587 = vpop.f32.mrb[0].mxu0
        %v1588 = vadd.f32 0.0, %v1587
        %v1589 = vpop.f32.mrb[0].mxu0
        %1590 = vmatprep.mubr.bf16.mxu0 0
        %1591 = vmatmul.mubr.bf16.gmra.mrb[0].mxu0 %v1438
        %v1592 = vpop.f32.mrb[0].mxu0
        %v1593 = vadd.f32 0.0, %v1592
        %v1594 = vpop.f32.mrb[0].mxu0
        %v1595 = vpop.f32.mrb[0].mxu0
        %v1596 = vadd.f32 0.0, %v1595
        %v1597 = vpop.f32.mrb[0].mxu0
        %1598 = vmatprep.mubr.bf16.mxu0 0
        %1599 = vmatmul.mubr.bf16.gmra.mrb[0].mxu0 %v1441
        %v1600 = vpop.f32.mrb[0].mxu0
        %v1601 = vadd.f32 0.0, %v1600
        %v1602 = vpop.f32.mrb[0].mxu0
        %v1603 = vpop.f32.mrb[0].mxu0
        %v1604 = vadd.f32 0.0, %v1603
        %v1605 = vpop.f32.mrb[0].mxu0
        %1606 = vdwg.mxu0
        %v1607 = vadd.f32 %v1088, %v1481
        %v1608 = vadd.f32 %v1091, %v1484
        %v1609 = vadd.f32 %v1096, %v1489
        %v1610 = vadd.f32 %v1099, %v1492
        %v1611 = vadd.f32 %v1104, %v1497
        %v1612 = vadd.f32 %v1107, %v1500
        %v1613 = vadd.f32 %v1112, %v1505
        %v1614 = vadd.f32 %v1115, %v1508
        %v1615 = vadd.f32 %v1120, %v1513
        %v1616 = vadd.f32 %v1123, %v1516
        %v1617 = vadd.f32 %v1128, %v1521
        %v1618 = vadd.f32 %v1131, %v1524
        %v1619 = vadd.f32 %v1136, %v1529
        %v1620 = vadd.f32 %v1139, %v1532
        %v1621 = vadd.f32 %v1144, %v1537
        %v1622 = vadd.f32 %v1147, %v1540
        %v1623 = vadd.f32 %v1152, %v1545
        %v1624 = vadd.f32 %v1155, %v1548
        %v1625 = vadd.f32 %v1160, %v1553
        %v1626 = vadd.f32 %v1163, %v1556
        %v1627 = vadd.f32 %v1168, %v1561
        %v1628 = vadd.f32 %v1171, %v1564
        %v1629 = vadd.f32 %v1176, %v1569
        %v1630 = vadd.f32 %v1179, %v1572
        %v1631 = vadd.f32 %v1184, %v1577
        %v1632 = vadd.f32 %v1187, %v1580
        %v1633 = vadd.f32 %v1192, %v1585
        %v1634 = vadd.f32 %v1195, %v1588
        %v1635 = vadd.f32 %v1200, %v1593
        %v1636 = vadd.f32 %v1203, %v1596
        %v1637 = vadd.f32 %v1208, %v1601
        %v1638 = vadd.f32 %v1211, %v1604
        %s1639 = scalar_lea.vmem [#allocation5], 6
        %v1640 = vld [vmem:[%s1639] sm:$0x3]
        %v1643 = vunpack.c.l.b16 %v264
        %v1644 = vunpack.c.l.b16 %v265
        %v1645 = vpack.c.b16 %v1644, %v1643
        %v1647 = vsel %vm708, %v1645, 0
        %v1650 = vsel %vm757, %v1640, 0
        %1652 = vmatprep.subr.bf16.mxu0 0
        %1653 = vmatpush1.bf16.msra.mxu0 %v1650
        %1654 = vmatprep.subr.bf16.mxu0 0
        %1655 = vmatpush1.bf16.msra.mxu0 0
        %1656 = vmatprep.subr.bf16.mxu0 0
        %1657 = vmatpush1.bf16.msra.mxu0 0
        %1658 = vmatprep.subr.bf16.mxu0 0
        %1659 = vmatpush1.bf16.msra.mxu0 0
        %1660 = vmatprep.subr.bf16.mxu0 0
        %1661 = vmatpush1.bf16.msra.mxu0 0
        %1662 = vmatprep.subr.bf16.mxu0 0
        %1663 = vmatpush1.bf16.msra.mxu0 0
        %1664 = vmatprep.subr.bf16.mxu0 0
        %1665 = vmatpush1.bf16.msra.mxu0 0
        %1666 = vmatprep.subr.bf16.mxu0 0
        %1667 = vmatpush1.bf16.msra.mxu0 0
        %1668 = vmatprep.subr.bf16.mxu0 0
        %1669 = vmatpush1.bf16.msra.mxu0 0
        %1670 = vmatprep.subr.bf16.mxu0 0
        %1671 = vmatpush1.bf16.msra.mxu0 0
        %1672 = vmatprep.subr.bf16.mxu0 0
        %1673 = vmatpush1.bf16.msra.mxu0 0
        %1674 = vmatprep.subr.bf16.mxu0 0
        %1675 = vmatpush1.bf16.msra.mxu0 0
        %1676 = vmatprep.subr.bf16.mxu0 0
        %1677 = vmatpush1.bf16.msra.mxu0 0
        %1678 = vmatprep.subr.bf16.mxu0 0
        %1679 = vmatpush1.bf16.msra.mxu0 0
        %1680 = vmatprep.subr.bf16.mxu0 0
        %1681 = vmatpush1.bf16.msra.mxu0 0
        %1682 = vmatprep.subr.bf16.mxu0 0
        %1683 = vmatpush1.bf16.msra.mxu0 0
        %1684 = vmatprep.mubr.bf16.mxu0 0
        %1685 = vmatmul.mubr.bf16.gmra.mrb[0].mxu0 %v1006
        %v1686 = vpop.f32.mrb[0].mxu0
        %v1687 = vadd.f32 0.0, %v1686
        %v1688 = vpop.f32.mrb[0].mxu0
        %v1689 = vpop.f32.mrb[0].mxu0
        %v1690 = vadd.f32 0.0, %v1689
        %v1691 = vpop.f32.mrb[0].mxu0
        %1692 = vmatprep.mubr.bf16.mxu0 0
        %1693 = vmatmul.mubr.bf16.gmra.mrb[0].mxu0 %v1009
        %v1694 = vpop.f32.mrb[0].mxu0
        %v1695 = vadd.f32 0.0, %v1694
        %v1696 = vpop.f32.mrb[0].mxu0
        %v1697 = vpop.f32.mrb[0].mxu0
        %v1698 = vadd.f32 0.0, %v1697
        %v1699 = vpop.f32.mrb[0].mxu0
        %1700 = vmatprep.mubr.bf16.mxu0 0
        %1701 = vmatmul.mubr.bf16.gmra.mrb[0].mxu0 %v1012
        %v1702 = vpop.f32.mrb[0].mxu0
        %v1703 = vadd.f32 0.0, %v1702
        %v1704 = vpop.f32.mrb[0].mxu0
        %v1705 = vpop.f32.mrb[0].mxu0
        %v1706 = vadd.f32 0.0, %v1705
        %v1707 = vpop.f32.mrb[0].mxu0
        %1708 = vmatprep.mubr.bf16.mxu0 0
        %1709 = vmatmul.mubr.bf16.gmra.mrb[0].mxu0 %v1015
        %v1710 = vpop.f32.mrb[0].mxu0
        %v1711 = vadd.f32 0.0, %v1710
        %v1712 = vpop.f32.mrb[0].mxu0
        %v1713 = vpop.f32.mrb[0].mxu0
        %v1714 = vadd.f32 0.0, %v1713
        %v1715 = vpop.f32.mrb[0].mxu0
        %1716 = vmatprep.mubr.bf16.mxu0 0
        %1717 = vmatmul.mubr.bf16.gmra.mrb[0].mxu0 %v1018
        %v1718 = vpop.f32.mrb[0].mxu0
        %v1719 = vadd.f32 0.0, %v1718
        %v1720 = vpop.f32.mrb[0].mxu0
        %v1721 = vpop.f32.mrb[0].mxu0
        %v1722 = vadd.f32 0.0, %v1721
        %v1723 = vpop.f32.mrb[0].mxu0
        %1724 = vmatprep.mubr.bf16.mxu0 0
        %1725 = vmatmul.mubr.bf16.gmra.mrb[0].mxu0 %v1021
        %v1726 = vpop.f32.mrb[0].mxu0
        %v1727 = vadd.f32 0.0, %v1726
        %v1728 = vpop.f32.mrb[0].mxu0
        %v1729 = vpop.f32.mrb[0].mxu0
        %v1730 = vadd.f32 0.0, %v1729
        %v1731 = vpop.f32.mrb[0].mxu0
        %1732 = vmatprep.mubr.bf16.mxu0 0
        %1733 = vmatmul.mubr.bf16.gmra.mrb[0].mxu0 %v1024
        %v1734 = vpop.f32.mrb[0].mxu0
        %v1735 = vadd.f32 0.0, %v1734
        %v1736 = vpop.f32.mrb[0].mxu0
        %v1737 = vpop.f32.mrb[0].mxu0
        %v1738 = vadd.f32 0.0, %v1737
        %v1739 = vpop.f32.mrb[0].mxu0
        %1740 = vmatprep.mubr.bf16.mxu0 0
        %1741 = vmatmul.mubr.bf16.gmra.mrb[0].mxu0 %v1027
        %v1742 = vpop.f32.mrb[0].mxu0
        %v1743 = vadd.f32 0.0, %v1742
        %v1744 = vpop.f32.mrb[0].mxu0
        %v1745 = vpop.f32.mrb[0].mxu0
        %v1746 = vadd.f32 0.0, %v1745
        %v1747 = vpop.f32.mrb[0].mxu0
        %1748 = vmatprep.mubr.bf16.mxu0 0
        %1749 = vmatmul.mubr.bf16.gmra.mrb[0].mxu0 %v1030
        %v1750 = vpop.f32.mrb[0].mxu0
        %v1751 = vadd.f32 0.0, %v1750
        %v1752 = vpop.f32.mrb[0].mxu0
        %v1753 = vpop.f32.mrb[0].mxu0
        %v1754 = vadd.f32 0.0, %v1753
        %v1755 = vpop.f32.mrb[0].mxu0
        %1756 = vmatprep.mubr.bf16.mxu0 0
        %1757 = vmatmul.mubr.bf16.gmra.mrb[0].mxu0 %v1033
        %v1758 = vpop.f32.mrb[0].mxu0
        %v1759 = vadd.f32 0.0, %v1758
        %v1760 = vpop.f32.mrb[0].mxu0
        %v1761 = vpop.f32.mrb[0].mxu0
        %v1762 = vadd.f32 0.0, %v1761
        %v1763 = vpop.f32.mrb[0].mxu0
        %1764 = vmatprep.mubr.bf16.mxu0 0
        %1765 = vmatmul.mubr.bf16.gmra.mrb[0].mxu0 %v1036
        %v1766 = vpop.f32.mrb[0].mxu0
        %v1767 = vadd.f32 0.0, %v1766
        %v1768 = vpop.f32.mrb[0].mxu0
        %v1769 = vpop.f32.mrb[0].mxu0
        %v1770 = vadd.f32 0.0, %v1769
        %v1771 = vpop.f32.mrb[0].mxu0
        %1772 = vmatprep.mubr.bf16.mxu0 0
        %1773 = vmatmul.mubr.bf16.gmra.mrb[0].mxu0 %v1039
        %v1774 = vpop.f32.mrb[0].mxu0
        %v1775 = vadd.f32 0.0, %v1774
        %v1776 = vpop.f32.mrb[0].mxu0
        %v1777 = vpop.f32.mrb[0].mxu0
        %v1778 = vadd.f32 0.0, %v1777
        %v1779 = vpop.f32.mrb[0].mxu0
        %1780 = vmatprep.mubr.bf16.mxu0 0
        %1781 = vmatmul.mubr.bf16.gmra.mrb[0].mxu0 %v1042
        %v1782 = vpop.f32.mrb[0].mxu0
        %v1783 = vadd.f32 0.0, %v1782
        %v1784 = vpop.f32.mrb[0].mxu0
        %v1785 = vpop.f32.mrb[0].mxu0
        %v1786 = vadd.f32 0.0, %v1785
        %v1787 = vpop.f32.mrb[0].mxu0
        %1788 = vmatprep.mubr.bf16.mxu0 0
        %1789 = vmatmul.mubr.bf16.gmra.mrb[0].mxu0 %v1045
        %v1790 = vpop.f32.mrb[0].mxu0
        %v1791 = vadd.f32 0.0, %v1790
        %v1792 = vpop.f32.mrb[0].mxu0
        %v1793 = vpop.f32.mrb[0].mxu0
        %v1794 = vadd.f32 0.0, %v1793
        %v1795 = vpop.f32.mrb[0].mxu0
        %1796 = vmatprep.mubr.bf16.mxu0 0
        %1797 = vmatmul.mubr.bf16.gmra.mrb[0].mxu0 %v1048
        %v1798 = vpop.f32.mrb[0].mxu0
        %v1799 = vadd.f32 0.0, %v1798
        %v1800 = vpop.f32.mrb[0].mxu0
        %v1801 = vpop.f32.mrb[0].mxu0
        %v1802 = vadd.f32 0.0, %v1801
        %v1803 = vpop.f32.mrb[0].mxu0
        %1804 = vmatprep.mubr.bf16.mxu0 0
        %1805 = vmatmul.mubr.bf16.gmra.mrb[0].mxu0 %v1647
        %v1806 = vpop.f32.mrb[0].mxu0
        %v1807 = vadd.f32 0.0, %v1806
        %v1808 = vpop.f32.mrb[0].mxu0
        %v1809 = vpop.f32.mrb[0].mxu0
        %v1810 = vadd.f32 0.0, %v1809
        %v1811 = vpop.f32.mrb[0].mxu0
        %1812 = vdwg.mxu0
        %v1813 = vadd.f32 %v1607, %v1687
        %v1814 = vadd.f32 %v1608, %v1690
        %v1815 = vadd.f32 %v1609, %v1695
        %v1816 = vadd.f32 %v1610, %v1698
        %v1817 = vadd.f32 %v1611, %v1703
        %v1818 = vadd.f32 %v1612, %v1706
        %v1819 = vadd.f32 %v1613, %v1711
        %v1820 = vadd.f32 %v1614, %v1714
        %v1821 = vadd.f32 %v1615, %v1719
        %v1822 = vadd.f32 %v1616, %v1722
        %v1823 = vadd.f32 %v1617, %v1727
        %v1824 = vadd.f32 %v1618, %v1730
        %v1825 = vadd.f32 %v1619, %v1735
        %v1826 = vadd.f32 %v1620, %v1738
        %v1827 = vadd.f32 %v1621, %v1743
        %v1828 = vadd.f32 %v1622, %v1746
        %v1829 = vadd.f32 %v1623, %v1751
        %v1830 = vadd.f32 %v1624, %v1754
        %v1831 = vadd.f32 %v1625, %v1759
        %v1832 = vadd.f32 %v1626, %v1762
        %v1833 = vadd.f32 %v1627, %v1767
        %v1834 = vadd.f32 %v1628, %v1770
        %v1835 = vadd.f32 %v1629, %v1775
        %v1836 = vadd.f32 %v1630, %v1778
        %v1837 = vadd.f32 %v1631, %v1783
        %v1838 = vadd.f32 %v1632, %v1786
        %v1839 = vadd.f32 %v1633, %v1791
        %v1840 = vadd.f32 %v1634, %v1794
        %v1841 = vadd.f32 %v1635, %v1799
        %v1842 = vadd.f32 %v1636, %v1802
        %v1843 = vadd.f32 %v1637, %v1807
        %v1844 = vadd.f32 %v1638, %v1810
        %v1846 = vshrl.u32 %v264, 16
        %v1848 = vrot.slane %v1846, 4
        %v1849 = vshll.u32 %v264, 16
        %v1851 = vrot.slane %v1849, 5
        %v1852 = vor.u32 %v1848, %v1851
        %v1853 = vrot.slane %v1852, 4
        %v1855 = vshll.u32 %v265, 16
        %v1857 = vrot.slane %v1855, 5
        %v1858 = vsel %vm273, %v1853, %v1857
        %v1859 = vshrl.u32 %v265, 16
        %v1861 = vrot.slane %v1859, 4
        %v1862 = vor.u32 %v1861, %v1857
        %v1863 = vrot.slane %v1862, 4
        %v1865 = vshll.u32 %v266, 16
        %v1867 = vrot.slane %v1865, 5
        %v1868 = vsel %vm273, %v1863, %v1867
        %s1869 = scalar_lea.vmem [#allocation5], 8
        %v1870 = vld [vmem:[%s1869] sm:$0x3]
        %v1871 = vunpack.c.l.b16 %v1858
        %v1872 = vunpack.c.l.b16 %v1868
        %v1873 = vpack.c.b16 %v1872, %v1871
        %v1875 = vsel %vm708, %v1873, 0
        %v1878 = vsel %vm757, %v1870, 0
        %1880 = vmatprep.subr.bf16.mxu0 0
        %1881 = vmatpush1.bf16.msra.mxu0 %v1878
        %1882 = vmatprep.subr.bf16.mxu0 0
        %1883 = vmatpush1.bf16.msra.mxu0 0
        %1884 = vmatprep.subr.bf16.mxu0 0
        %1885 = vmatpush1.bf16.msra.mxu0 0
        %1886 = vmatprep.subr.bf16.mxu0 0
        %1887 = vmatpush1.bf16.msra.mxu0 0
        %1888 = vmatprep.subr.bf16.mxu0 0
        %1889 = vmatpush1.bf16.msra.mxu0 0
        %1890 = vmatprep.subr.bf16.mxu0 0
        %1891 = vmatpush1.bf16.msra.mxu0 0
        %1892 = vmatprep.subr.bf16.mxu0 0
        %1893 = vmatpush1.bf16.msra.mxu0 0
        %1894 = vmatprep.subr.bf16.mxu0 0
        %1895 = vmatpush1.bf16.msra.mxu0 0
        %1896 = vmatprep.subr.bf16.mxu0 0
        %1897 = vmatpush1.bf16.msra.mxu0 0
        %1898 = vmatprep.subr.bf16.mxu0 0
        %1899 = vmatpush1.bf16.msra.mxu0 0
        %1900 = vmatprep.subr.bf16.mxu0 0
        %1901 = vmatpush1.bf16.msra.mxu0 0
        %1902 = vmatprep.subr.bf16.mxu0 0
        %1903 = vmatpush1.bf16.msra.mxu0 0
        %1904 = vmatprep.subr.bf16.mxu0 0
        %1905 = vmatpush1.bf16.msra.mxu0 0
        %1906 = vmatprep.subr.bf16.mxu0 0
        %1907 = vmatpush1.bf16.msra.mxu0 0
        %1908 = vmatprep.subr.bf16.mxu0 0
        %1909 = vmatpush1.bf16.msra.mxu0 0
        %1910 = vmatprep.subr.bf16.mxu0 0
        %1911 = vmatpush1.bf16.msra.mxu0 0
        %1912 = vmatprep.mubr.bf16.mxu0 0
        %1913 = vmatmul.mubr.bf16.gmra.mrb[0].mxu0 %v713
        %v1914 = vpop.f32.mrb[0].mxu0
        %v1915 = vadd.f32 0.0, %v1914
        %v1916 = vpop.f32.mrb[0].mxu0
        %v1917 = vpop.f32.mrb[0].mxu0
        %v1918 = vadd.f32 0.0, %v1917
        %v1919 = vpop.f32.mrb[0].mxu0
        %1920 = vmatprep.mubr.bf16.mxu0 0
        %1921 = vmatmul.mubr.bf16.gmra.mrb[0].mxu0 %v716
        %v1922 = vpop.f32.mrb[0].mxu0
        %v1923 = vadd.f32 0.0, %v1922
        %v1924 = vpop.f32.mrb[0].mxu0
        %v1925 = vpop.f32.mrb[0].mxu0
        %v1926 = vadd.f32 0.0, %v1925
        %v1927 = vpop.f32.mrb[0].mxu0
        %1928 = vmatprep.mubr.bf16.mxu0 0
        %1929 = vmatmul.mubr.bf16.gmra.mrb[0].mxu0 %v719
        %v1930 = vpop.f32.mrb[0].mxu0
        %v1931 = vadd.f32 0.0, %v1930
        %v1932 = vpop.f32.mrb[0].mxu0
        %v1933 = vpop.f32.mrb[0].mxu0
        %v1934 = vadd.f32 0.0, %v1933
        %v1935 = vpop.f32.mrb[0].mxu0
        %1936 = vmatprep.mubr.bf16.mxu0 0
        %1937 = vmatmul.mubr.bf16.gmra.mrb[0].mxu0 %v722
        %v1938 = vpop.f32.mrb[0].mxu0
        %v1939 = vadd.f32 0.0, %v1938
        %v1940 = vpop.f32.mrb[0].mxu0
        %v1941 = vpop.f32.mrb[0].mxu0
        %v1942 = vadd.f32 0.0, %v1941
        %v1943 = vpop.f32.mrb[0].mxu0
        %1944 = vmatprep.mubr.bf16.mxu0 0
        %1945 = vmatmul.mubr.bf16.gmra.mrb[0].mxu0 %v725
        %v1946 = vpop.f32.mrb[0].mxu0
        %v1947 = vadd.f32 0.0, %v1946
        %v1948 = vpop.f32.mrb[0].mxu0
        %v1949 = vpop.f32.mrb[0].mxu0
        %v1950 = vadd.f32 0.0, %v1949
        %v1951 = vpop.f32.mrb[0].mxu0
        %1952 = vmatprep.mubr.bf16.mxu0 0
        %1953 = vmatmul.mubr.bf16.gmra.mrb[0].mxu0 %v728
        %v1954 = vpop.f32.mrb[0].mxu0
        %v1955 = vadd.f32 0.0, %v1954
        %v1956 = vpop.f32.mrb[0].mxu0
        %v1957 = vpop.f32.mrb[0].mxu0
        %v1958 = vadd.f32 0.0, %v1957
        %v1959 = vpop.f32.mrb[0].mxu0
        %1960 = vmatprep.mubr.bf16.mxu0 0
        %1961 = vmatmul.mubr.bf16.gmra.mrb[0].mxu0 %v731
        %v1962 = vpop.f32.mrb[0].mxu0
        %v1963 = vadd.f32 0.0, %v1962
        %v1964 = vpop.f32.mrb[0].mxu0
        %v1965 = vpop.f32.mrb[0].mxu0
        %v1966 = vadd.f32 0.0, %v1965
        %v1967 = vpop.f32.mrb[0].mxu0
        %1968 = vmatprep.mubr.bf16.mxu0 0
        %1969 = vmatmul.mubr.bf16.gmra.mrb[0].mxu0 %v734
        %v1970 = vpop.f32.mrb[0].mxu0
        %v1971 = vadd.f32 0.0, %v1970
        %v1972 = vpop.f32.mrb[0].mxu0
        %v1973 = vpop.f32.mrb[0].mxu0
        %v1974 = vadd.f32 0.0, %v1973
        %v1975 = vpop.f32.mrb[0].mxu0
        %1976 = vmatprep.mubr.bf16.mxu0 0
        %1977 = vmatmul.mubr.bf16.gmra.mrb[0].mxu0 %v737
        %v1978 = vpop.f32.mrb[0].mxu0
        %v1979 = vadd.f32 0.0, %v1978
        %v1980 = vpop.f32.mrb[0].mxu0
        %v1981 = vpop.f32.mrb[0].mxu0
        %v1982 = vadd.f32 0.0, %v1981
        %v1983 = vpop.f32.mrb[0].mxu0
        %1984 = vmatprep.mubr.bf16.mxu0 0
        %1985 = vmatmul.mubr.bf16.gmra.mrb[0].mxu0 %v740
        %v1986 = vpop.f32.mrb[0].mxu0
        %v1987 = vadd.f32 0.0, %v1986
        %v1988 = vpop.f32.mrb[0].mxu0
        %v1989 = vpop.f32.mrb[0].mxu0
        %v1990 = vadd.f32 0.0, %v1989
        %v1991 = vpop.f32.mrb[0].mxu0
        %1992 = vmatprep.mubr.bf16.mxu0 0
        %1993 = vmatmul.mubr.bf16.gmra.mrb[0].mxu0 %v743
        %v1994 = vpop.f32.mrb[0].mxu0
        %v1995 = vadd.f32 0.0, %v1994
        %v1996 = vpop.f32.mrb[0].mxu0
        %v1997 = vpop.f32.mrb[0].mxu0
        %v1998 = vadd.f32 0.0, %v1997
        %v1999 = vpop.f32.mrb[0].mxu0
        %2000 = vmatprep.mubr.bf16.mxu0 0
        %2001 = vmatmul.mubr.bf16.gmra.mrb[0].mxu0 %v746
        %v2002 = vpop.f32.mrb[0].mxu0
        %v2003 = vadd.f32 0.0, %v2002
        %v2004 = vpop.f32.mrb[0].mxu0
        %v2005 = vpop.f32.mrb[0].mxu0
        %v2006 = vadd.f32 0.0, %v2005
        %v2007 = vpop.f32.mrb[0].mxu0
        %2008 = vmatprep.mubr.bf16.mxu0 0
        %2009 = vmatmul.mubr.bf16.gmra.mrb[0].mxu0 %v749
        %v2010 = vpop.f32.mrb[0].mxu0
        %v2011 = vadd.f32 0.0, %v2010
        %v2012 = vpop.f32.mrb[0].mxu0
        %v2013 = vpop.f32.mrb[0].mxu0
        %v2014 = vadd.f32 0.0, %v2013
        %v2015 = vpop.f32.mrb[0].mxu0
        %2016 = vmatprep.mubr.bf16.mxu0 0
        %2017 = vmatmul.mubr.bf16.gmra.mrb[0].mxu0 %v752
        %v2018 = vpop.f32.mrb[0].mxu0
        %v2019 = vadd.f32 0.0, %v2018
        %v2020 = vpop.f32.mrb[0].mxu0
        %v2021 = vpop.f32.mrb[0].mxu0
        %v2022 = vadd.f32 0.0, %v2021
        %v2023 = vpop.f32.mrb[0].mxu0
        %2024 = vmatprep.mubr.bf16.mxu0 0
        %2025 = vmatmul.mubr.bf16.gmra.mrb[0].mxu0 %v755
        %v2026 = vpop.f32.mrb[0].mxu0
        %v2027 = vadd.f32 0.0, %v2026
        %v2028 = vpop.f32.mrb[0].mxu0
        %v2029 = vpop.f32.mrb[0].mxu0
        %v2030 = vadd.f32 0.0, %v2029
        %v2031 = vpop.f32.mrb[0].mxu0
        %2032 = vmatprep.mubr.bf16.mxu0 0
        %2033 = vmatmul.mubr.bf16.gmra.mrb[0].mxu0 %v1875
        %v2034 = vpop.f32.mrb[0].mxu0
        %v2035 = vadd.f32 0.0, %v2034
        %v2036 = vpop.f32.mrb[0].mxu0
        %v2037 = vpop.f32.mrb[0].mxu0
        %v2038 = vadd.f32 0.0, %v2037
        %v2039 = vpop.f32.mrb[0].mxu0
        %2040 = vdwg.mxu0
        %v2041 = vadd.f32 %v1813, %v1915
        %v2042 = vadd.f32 %v1814, %v1918
        %v2043 = vadd.f32 %v1815, %v1923
        %v2044 = vadd.f32 %v1816, %v1926
        %v2045 = vadd.f32 %v1817, %v1931
        %v2046 = vadd.f32 %v1818, %v1934
        %v2047 = vadd.f32 %v1819, %v1939
        %v2048 = vadd.f32 %v1820, %v1942
        %v2049 = vadd.f32 %v1821, %v1947
        %v2050 = vadd.f32 %v1822, %v1950
        %v2051 = vadd.f32 %v1823, %v1955
        %v2052 = vadd.f32 %v1824, %v1958
        %v2053 = vadd.f32 %v1825, %v1963
        %v2054 = vadd.f32 %v1826, %v1966
        %v2055 = vadd.f32 %v1827, %v1971
        %v2056 = vadd.f32 %v1828, %v1974
        %v2057 = vadd.f32 %v1829, %v1979
        %v2058 = vadd.f32 %v1830, %v1982
        %v2059 = vadd.f32 %v1831, %v1987
        %v2060 = vadd.f32 %v1832, %v1990
        %v2061 = vadd.f32 %v1833, %v1995
        %v2062 = vadd.f32 %v1834, %v1998
        %v2063 = vadd.f32 %v1835, %v2003
        %v2064 = vadd.f32 %v1836, %v2006
        %v2065 = vadd.f32 %v1837, %v2011
        %v2066 = vadd.f32 %v1838, %v2014
        %v2067 = vadd.f32 %v1839, %v2019
        %v2068 = vadd.f32 %v1840, %v2022
        %v2069 = vadd.f32 %v1841, %v2027
        %v2070 = vadd.f32 %v1842, %v2030
        %v2071 = vadd.f32 %v1843, %v2035
        %v2072 = vadd.f32 %v1844, %v2038
        %v2074 = vrot.slane %v264, 5
        %v2075 = vrot.slane %v2074, 4
        %v2076 = vrot.slane %v265, 5
        %v2077 = vsel %vm1232, %v2075, %v2076
        %v2078 = vrot.slane %v2076, 4
        %v2079 = vrot.slane %v266, 5
        %v2080 = vsel %vm1232, %v2078, %v2079
        %s2081 = scalar_lea.vmem [#allocation5], 10
        %v2082 = vld [vmem:[%s2081] sm:$0x3]
        %v2083 = vunpack.c.l.b16 %v2077
        %v2084 = vunpack.c.l.b16 %v2080
        %v2085 = vpack.c.b16 %v2084, %v2083
        %v2087 = vsel %vm708, %v2085, 0
        %v2090 = vsel %vm757, %v2082, 0
        %2092 = vmatprep.subr.bf16.mxu0 0
        %2093 = vmatpush1.bf16.msra.mxu0 %v2090
        %2094 = vmatprep.subr.bf16.mxu0 0
        %2095 = vmatpush1.bf16.msra.mxu0 0
        %2096 = vmatprep.subr.bf16.mxu0 0
        %2097 = vmatpush1.bf16.msra.mxu0 0
        %2098 = vmatprep.subr.bf16.mxu0 0
        %2099 = vmatpush1.bf16.msra.mxu0 0
        %2100 = vmatprep.subr.bf16.mxu0 0
        %2101 = vmatpush1.bf16.msra.mxu0 0
        %2102 = vmatprep.subr.bf16.mxu0 0
        %2103 = vmatpush1.bf16.msra.mxu0 0
        %2104 = vmatprep.subr.bf16.mxu0 0
        %2105 = vmatpush1.bf16.msra.mxu0 0
        %2106 = vmatprep.subr.bf16.mxu0 0
        %2107 = vmatpush1.bf16.msra.mxu0 0
        %2108 = vmatprep.subr.bf16.mxu0 0
        %2109 = vmatpush1.bf16.msra.mxu0 0
        %2110 = vmatprep.subr.bf16.mxu0 0
        %2111 = vmatpush1.bf16.msra.mxu0 0
        %2112 = vmatprep.subr.bf16.mxu0 0
        %2113 = vmatpush1.bf16.msra.mxu0 0
        %2114 = vmatprep.subr.bf16.mxu0 0
        %2115 = vmatpush1.bf16.msra.mxu0 0
        %2116 = vmatprep.subr.bf16.mxu0 0
        %2117 = vmatpush1.bf16.msra.mxu0 0
        %2118 = vmatprep.subr.bf16.mxu0 0
        %2119 = vmatpush1.bf16.msra.mxu0 0
        %2120 = vmatprep.subr.bf16.mxu0 0
        %2121 = vmatpush1.bf16.msra.mxu0 0
        %2122 = vmatprep.subr.bf16.mxu0 0
        %2123 = vmatpush1.bf16.msra.mxu0 0
        %2124 = vmatprep.mubr.bf16.mxu0 0
        %2125 = vmatmul.mubr.bf16.gmra.mrb[0].mxu0 %v1399
        %v2126 = vpop.f32.mrb[0].mxu0
        %v2127 = vadd.f32 0.0, %v2126
        %v2128 = vpop.f32.mrb[0].mxu0
        %v2129 = vpop.f32.mrb[0].mxu0
        %v2130 = vadd.f32 0.0, %v2129
        %v2131 = vpop.f32.mrb[0].mxu0
        %2132 = vmatprep.mubr.bf16.mxu0 0
        %2133 = vmatmul.mubr.bf16.gmra.mrb[0].mxu0 %v1402
        %v2134 = vpop.f32.mrb[0].mxu0
        %v2135 = vadd.f32 0.0, %v2134
        %v2136 = vpop.f32.mrb[0].mxu0
        %v2137 = vpop.f32.mrb[0].mxu0
        %v2138 = vadd.f32 0.0, %v2137
        %v2139 = vpop.f32.mrb[0].mxu0
        %2140 = vmatprep.mubr.bf16.mxu0 0
        %2141 = vmatmul.mubr.bf16.gmra.mrb[0].mxu0 %v1405
        %v2142 = vpop.f32.mrb[0].mxu0
        %v2143 = vadd.f32 0.0, %v2142
        %v2144 = vpop.f32.mrb[0].mxu0
        %v2145 = vpop.f32.mrb[0].mxu0
        %v2146 = vadd.f32 0.0, %v2145
        %v2147 = vpop.f32.mrb[0].mxu0
        %2148 = vmatprep.mubr.bf16.mxu0 0
        %2149 = vmatmul.mubr.bf16.gmra.mrb[0].mxu0 %v1408
        %v2150 = vpop.f32.mrb[0].mxu0
        %v2151 = vadd.f32 0.0, %v2150
        %v2152 = vpop.f32.mrb[0].mxu0
        %v2153 = vpop.f32.mrb[0].mxu0
        %v2154 = vadd.f32 0.0, %v2153
        %v2155 = vpop.f32.mrb[0].mxu0
        %2156 = vmatprep.mubr.bf16.mxu0 0
        %2157 = vmatmul.mubr.bf16.gmra.mrb[0].mxu0 %v1411
        %v2158 = vpop.f32.mrb[0].mxu0
        %v2159 = vadd.f32 0.0, %v2158
        %v2160 = vpop.f32.mrb[0].mxu0
        %v2161 = vpop.f32.mrb[0].mxu0
        %v2162 = vadd.f32 0.0, %v2161
        %v2163 = vpop.f32.mrb[0].mxu0
        %2164 = vmatprep.mubr.bf16.mxu0 0
        %2165 = vmatmul.mubr.bf16.gmra.mrb[0].mxu0 %v1414
        %v2166 = vpop.f32.mrb[0].mxu0
        %v2167 = vadd.f32 0.0, %v2166
        %v2168 = vpop.f32.mrb[0].mxu0
        %v2169 = vpop.f32.mrb[0].mxu0
        %v2170 = vadd.f32 0.0, %v2169
        %v2171 = vpop.f32.mrb[0].mxu0
        %2172 = vmatprep.mubr.bf16.mxu0 0
        %2173 = vmatmul.mubr.bf16.gmra.mrb[0].mxu0 %v1417
        %v2174 = vpop.f32.mrb[0].mxu0
        %v2175 = vadd.f32 0.0, %v2174
        %v2176 = vpop.f32.mrb[0].mxu0
        %v2177 = vpop.f32.mrb[0].mxu0
        %v2178 = vadd.f32 0.0, %v2177
        %v2179 = vpop.f32.mrb[0].mxu0
        %2180 = vmatprep.mubr.bf16.mxu0 0
        %2181 = vmatmul.mubr.bf16.gmra.mrb[0].mxu0 %v1420
        %v2182 = vpop.f32.mrb[0].mxu0
        %v2183 = vadd.f32 0.0, %v2182
        %v2184 = vpop.f32.mrb[0].mxu0
        %v2185 = vpop.f32.mrb[0].mxu0
        %v2186 = vadd.f32 0.0, %v2185
        %v2187 = vpop.f32.mrb[0].mxu0
        %2188 = vmatprep.mubr.bf16.mxu0 0
        %2189 = vmatmul.mubr.bf16.gmra.mrb[0].mxu0 %v1423
        %v2190 = vpop.f32.mrb[0].mxu0
        %v2191 = vadd.f32 0.0, %v2190
        %v2192 = vpop.f32.mrb[0].mxu0
        %v2193 = vpop.f32.mrb[0].mxu0
        %v2194 = vadd.f32 0.0, %v2193
        %v2195 = vpop.f32.mrb[0].mxu0
        %2196 = vmatprep.mubr.bf16.mxu0 0
        %2197 = vmatmul.mubr.bf16.gmra.mrb[0].mxu0 %v1426
        %v2198 = vpop.f32.mrb[0].mxu0
        %v2199 = vadd.f32 0.0, %v2198
        %v2200 = vpop.f32.mrb[0].mxu0
        %v2201 = vpop.f32.mrb[0].mxu0
        %v2202 = vadd.f32 0.0, %v2201
        %v2203 = vpop.f32.mrb[0].mxu0
        %2204 = vmatprep.mubr.bf16.mxu0 0
        %2205 = vmatmul.mubr.bf16.gmra.mrb[0].mxu0 %v1429
        %v2206 = vpop.f32.mrb[0].mxu0
        %v2207 = vadd.f32 0.0, %v2206
        %v2208 = vpop.f32.mrb[0].mxu0
        %v2209 = vpop.f32.mrb[0].mxu0
        %v2210 = vadd.f32 0.0, %v2209
        %v2211 = vpop.f32.mrb[0].mxu0
        %2212 = vmatprep.mubr.bf16.mxu0 0
        %2213 = vmatmul.mubr.bf16.gmra.mrb[0].mxu0 %v1432
        %v2214 = vpop.f32.mrb[0].mxu0
        %v2215 = vadd.f32 0.0, %v2214
        %v2216 = vpop.f32.mrb[0].mxu0
        %v2217 = vpop.f32.mrb[0].mxu0
        %v2218 = vadd.f32 0.0, %v2217
        %v2219 = vpop.f32.mrb[0].mxu0
        %2220 = vmatprep.mubr.bf16.mxu0 0
        %2221 = vmatmul.mubr.bf16.gmra.mrb[0].mxu0 %v1435
        %v2222 = vpop.f32.mrb[0].mxu0
        %v2223 = vadd.f32 0.0, %v2222
        %v2224 = vpop.f32.mrb[0].mxu0
        %v2225 = vpop.f32.mrb[0].mxu0
        %v2226 = vadd.f32 0.0, %v2225
        %v2227 = vpop.f32.mrb[0].mxu0
        %2228 = vmatprep.mubr.bf16.mxu0 0
        %2229 = vmatmul.mubr.bf16.gmra.mrb[0].mxu0 %v1438
        %v2230 = vpop.f32.mrb[0].mxu0
        %v2231 = vadd.f32 0.0, %v2230
        %v2232 = vpop.f32.mrb[0].mxu0
        %v2233 = vpop.f32.mrb[0].mxu0
        %v2234 = vadd.f32 0.0, %v2233
        %v2235 = vpop.f32.mrb[0].mxu0
        %2236 = vmatprep.mubr.bf16.mxu0 0
        %2237 = vmatmul.mubr.bf16.gmra.mrb[0].mxu0 %v1441
        %v2238 = vpop.f32.mrb[0].mxu0
        %v2239 = vadd.f32 0.0, %v2238
        %v2240 = vpop.f32.mrb[0].mxu0
        %v2241 = vpop.f32.mrb[0].mxu0
        %v2242 = vadd.f32 0.0, %v2241
        %v2243 = vpop.f32.mrb[0].mxu0
        %2244 = vmatprep.mubr.bf16.mxu0 0
        %2245 = vmatmul.mubr.bf16.gmra.mrb[0].mxu0 %v2087
        %v2246 = vpop.f32.mrb[0].mxu0
        %v2247 = vadd.f32 0.0, %v2246
        %v2248 = vpop.f32.mrb[0].mxu0
        %v2249 = vpop.f32.mrb[0].mxu0
        %v2250 = vadd.f32 0.0, %v2249
        %v2251 = vpop.f32.mrb[0].mxu0
        %2252 = vdwg.mxu0
        %v2253 = vadd.f32 %v2041, %v2127
        %v2254 = vadd.f32 %v2042, %v2130
        %v2255 = vadd.f32 %v2043, %v2135
        %v2256 = vadd.f32 %v2044, %v2138
        %v2257 = vadd.f32 %v2045, %v2143
        %v2258 = vadd.f32 %v2046, %v2146
        %v2259 = vadd.f32 %v2047, %v2151
        %v2260 = vadd.f32 %v2048, %v2154
        %v2261 = vadd.f32 %v2049, %v2159
        %v2262 = vadd.f32 %v2050, %v2162
        %v2263 = vadd.f32 %v2051, %v2167
        %v2264 = vadd.f32 %v2052, %v2170
        %v2265 = vadd.f32 %v2053, %v2175
        %v2266 = vadd.f32 %v2054, %v2178
        %v2267 = vadd.f32 %v2055, %v2183
        %v2268 = vadd.f32 %v2056, %v2186
        %v2269 = vadd.f32 %v2057, %v2191
        %v2270 = vadd.f32 %v2058, %v2194
        %v2271 = vadd.f32 %v2059, %v2199
        %v2272 = vadd.f32 %v2060, %v2202
        %v2273 = vadd.f32 %v2061, %v2207
        %v2274 = vadd.f32 %v2062, %v2210
        %v2275 = vadd.f32 %v2063, %v2215
        %v2276 = vadd.f32 %v2064, %v2218
        %v2277 = vadd.f32 %v2065, %v2223
        %v2278 = vadd.f32 %v2066, %v2226
        %v2279 = vadd.f32 %v2067, %v2231
        %v2280 = vadd.f32 %v2068, %v2234
        %v2281 = vadd.f32 %v2069, %v2239
        %v2282 = vadd.f32 %v2070, %v2242
        %v2283 = vadd.f32 %v2071, %v2247
        %v2284 = vadd.f32 %v2072, %v2250
        %s2285 = scalar_lea.vmem [#allocation5], 12
        %v2286 = vld [vmem:[%s2285] sm:$0x3]
        %v2289 = vunpack.c.l.b16 %v267
        %v2290 = vunpack.c.l.b16 %v268
        %v2291 = vpack.c.b16 %v2290, %v2289
        %v2293 = vsel %vm708, %v2291, 0
        %v2296 = vsel %vm757, %v2286, 0
        %2298 = vmatprep.subr.bf16.mxu0 0
        %2299 = vmatpush1.bf16.msra.mxu0 %v2296
        %2300 = vmatprep.subr.bf16.mxu0 0
        %2301 = vmatpush1.bf16.msra.mxu0 0
        %2302 = vmatprep.subr.bf16.mxu0 0
        %2303 = vmatpush1.bf16.msra.mxu0 0
        %2304 = vmatprep.subr.bf16.mxu0 0
        %2305 = vmatpush1.bf16.msra.mxu0 0
        %2306 = vmatprep.subr.bf16.mxu0 0
        %2307 = vmatpush1.bf16.msra.mxu0 0
        %2308 = vmatprep.subr.bf16.mxu0 0
        %2309 = vmatpush1.bf16.msra.mxu0 0
        %2310 = vmatprep.subr.bf16.mxu0 0
        %2311 = vmatpush1.bf16.msra.mxu0 0
        %2312 = vmatprep.subr.bf16.mxu0 0
        %2313 = vmatpush1.bf16.msra.mxu0 0
        %2314 = vmatprep.subr.bf16.mxu0 0
        %2315 = vmatpush1.bf16.msra.mxu0 0
        %2316 = vmatprep.subr.bf16.mxu0 0
        %2317 = vmatpush1.bf16.msra.mxu0 0
        %2318 = vmatprep.subr.bf16.mxu0 0
        %2319 = vmatpush1.bf16.msra.mxu0 0
        %2320 = vmatprep.subr.bf16.mxu0 0
        %2321 = vmatpush1.bf16.msra.mxu0 0
        %2322 = vmatprep.subr.bf16.mxu0 0
        %2323 = vmatpush1.bf16.msra.mxu0 0
        %2324 = vmatprep.subr.bf16.mxu0 0
        %2325 = vmatpush1.bf16.msra.mxu0 0
        %2326 = vmatprep.subr.bf16.mxu0 0
        %2327 = vmatpush1.bf16.msra.mxu0 0
        %2328 = vmatprep.subr.bf16.mxu0 0
        %2329 = vmatpush1.bf16.msra.mxu0 0
        %2330 = vmatprep.mubr.bf16.mxu0 0
        %2331 = vmatmul.mubr.bf16.gmra.mrb[0].mxu0 %v1009
        %v2332 = vpop.f32.mrb[0].mxu0
        %v2333 = vadd.f32 0.0, %v2332
        %v2334 = vpop.f32.mrb[0].mxu0
        %v2335 = vpop.f32.mrb[0].mxu0
        %v2336 = vadd.f32 0.0, %v2335
        %v2337 = vpop.f32.mrb[0].mxu0
        %2338 = vmatprep.mubr.bf16.mxu0 0
        %2339 = vmatmul.mubr.bf16.gmra.mrb[0].mxu0 %v1012
        %v2340 = vpop.f32.mrb[0].mxu0
        %v2341 = vadd.f32 0.0, %v2340
        %v2342 = vpop.f32.mrb[0].mxu0
        %v2343 = vpop.f32.mrb[0].mxu0
        %v2344 = vadd.f32 0.0, %v2343
        %v2345 = vpop.f32.mrb[0].mxu0
        %2346 = vmatprep.mubr.bf16.mxu0 0
        %2347 = vmatmul.mubr.bf16.gmra.mrb[0].mxu0 %v1015
        %v2348 = vpop.f32.mrb[0].mxu0
        %v2349 = vadd.f32 0.0, %v2348
        %v2350 = vpop.f32.mrb[0].mxu0
        %v2351 = vpop.f32.mrb[0].mxu0
        %v2352 = vadd.f32 0.0, %v2351
        %v2353 = vpop.f32.mrb[0].mxu0
        %2354 = vmatprep.mubr.bf16.mxu0 0
        %2355 = vmatmul.mubr.bf16.gmra.mrb[0].mxu0 %v1018
        %v2356 = vpop.f32.mrb[0].mxu0
        %v2357 = vadd.f32 0.0, %v2356
        %v2358 = vpop.f32.mrb[0].mxu0
        %v2359 = vpop.f32.mrb[0].mxu0
        %v2360 = vadd.f32 0.0, %v2359
        %v2361 = vpop.f32.mrb[0].mxu0
        %2362 = vmatprep.mubr.bf16.mxu0 0
        %2363 = vmatmul.mubr.bf16.gmra.mrb[0].mxu0 %v1021
        %v2364 = vpop.f32.mrb[0].mxu0
        %v2365 = vadd.f32 0.0, %v2364
        %v2366 = vpop.f32.mrb[0].mxu0
        %v2367 = vpop.f32.mrb[0].mxu0
        %v2368 = vadd.f32 0.0, %v2367
        %v2369 = vpop.f32.mrb[0].mxu0
        %2370 = vmatprep.mubr.bf16.mxu0 0
        %2371 = vmatmul.mubr.bf16.gmra.mrb[0].mxu0 %v1024
        %v2372 = vpop.f32.mrb[0].mxu0
        %v2373 = vadd.f32 0.0, %v2372
        %v2374 = vpop.f32.mrb[0].mxu0
        %v2375 = vpop.f32.mrb[0].mxu0
        %v2376 = vadd.f32 0.0, %v2375
        %v2377 = vpop.f32.mrb[0].mxu0
        %2378 = vmatprep.mubr.bf16.mxu0 0
        %2379 = vmatmul.mubr.bf16.gmra.mrb[0].mxu0 %v1027
        %v2380 = vpop.f32.mrb[0].mxu0
        %v2381 = vadd.f32 0.0, %v2380
        %v2382 = vpop.f32.mrb[0].mxu0
        %v2383 = vpop.f32.mrb[0].mxu0
        %v2384 = vadd.f32 0.0, %v2383
        %v2385 = vpop.f32.mrb[0].mxu0
        %2386 = vmatprep.mubr.bf16.mxu0 0
        %2387 = vmatmul.mubr.bf16.gmra.mrb[0].mxu0 %v1030
        %v2388 = vpop.f32.mrb[0].mxu0
        %v2389 = vadd.f32 0.0, %v2388
        %v2390 = vpop.f32.mrb[0].mxu0
        %v2391 = vpop.f32.mrb[0].mxu0
        %v2392 = vadd.f32 0.0, %v2391
        %v2393 = vpop.f32.mrb[0].mxu0
        %2394 = vmatprep.mubr.bf16.mxu0 0
        %2395 = vmatmul.mubr.bf16.gmra.mrb[0].mxu0 %v1033
        %v2396 = vpop.f32.mrb[0].mxu0
        %v2397 = vadd.f32 0.0, %v2396
        %v2398 = vpop.f32.mrb[0].mxu0
        %v2399 = vpop.f32.mrb[0].mxu0
        %v2400 = vadd.f32 0.0, %v2399
        %v2401 = vpop.f32.mrb[0].mxu0
        %2402 = vmatprep.mubr.bf16.mxu0 0
        %2403 = vmatmul.mubr.bf16.gmra.mrb[0].mxu0 %v1036
        %v2404 = vpop.f32.mrb[0].mxu0
        %v2405 = vadd.f32 0.0, %v2404
        %v2406 = vpop.f32.mrb[0].mxu0
        %v2407 = vpop.f32.mrb[0].mxu0
        %v2408 = vadd.f32 0.0, %v2407
        %v2409 = vpop.f32.mrb[0].mxu0
        %2410 = vmatprep.mubr.bf16.mxu0 0
        %2411 = vmatmul.mubr.bf16.gmra.mrb[0].mxu0 %v1039
        %v2412 = vpop.f32.mrb[0].mxu0
        %v2413 = vadd.f32 0.0, %v2412
        %v2414 = vpop.f32.mrb[0].mxu0
        %v2415 = vpop.f32.mrb[0].mxu0
        %v2416 = vadd.f32 0.0, %v2415
        %v2417 = vpop.f32.mrb[0].mxu0
        %2418 = vmatprep.mubr.bf16.mxu0 0
        %2419 = vmatmul.mubr.bf16.gmra.mrb[0].mxu0 %v1042
        %v2420 = vpop.f32.mrb[0].mxu0
        %v2421 = vadd.f32 0.0, %v2420
        %v2422 = vpop.f32.mrb[0].mxu0
        %v2423 = vpop.f32.mrb[0].mxu0
        %v2424 = vadd.f32 0.0, %v2423
        %v2425 = vpop.f32.mrb[0].mxu0
        %2426 = vmatprep.mubr.bf16.mxu0 0
        %2427 = vmatmul.mubr.bf16.gmra.mrb[0].mxu0 %v1045
        %v2428 = vpop.f32.mrb[0].mxu0
        %v2429 = vadd.f32 0.0, %v2428
        %v2430 = vpop.f32.mrb[0].mxu0
        %v2431 = vpop.f32.mrb[0].mxu0
        %v2432 = vadd.f32 0.0, %v2431
        %v2433 = vpop.f32.mrb[0].mxu0
        %2434 = vmatprep.mubr.bf16.mxu0 0
        %2435 = vmatmul.mubr.bf16.gmra.mrb[0].mxu0 %v1048
        %v2436 = vpop.f32.mrb[0].mxu0
        %v2437 = vadd.f32 0.0, %v2436
        %v2438 = vpop.f32.mrb[0].mxu0
        %v2439 = vpop.f32.mrb[0].mxu0
        %v2440 = vadd.f32 0.0, %v2439
        %v2441 = vpop.f32.mrb[0].mxu0
        %2442 = vmatprep.mubr.bf16.mxu0 0
        %2443 = vmatmul.mubr.bf16.gmra.mrb[0].mxu0 %v1647
        %v2444 = vpop.f32.mrb[0].mxu0
        %v2445 = vadd.f32 0.0, %v2444
        %v2446 = vpop.f32.mrb[0].mxu0
        %v2447 = vpop.f32.mrb[0].mxu0
        %v2448 = vadd.f32 0.0, %v2447
        %v2449 = vpop.f32.mrb[0].mxu0
        %2450 = vmatprep.mubr.bf16.mxu0 0
        %2451 = vmatmul.mubr.bf16.gmra.mrb[0].mxu0 %v2293
        %v2452 = vpop.f32.mrb[0].mxu0
        %v2453 = vadd.f32 0.0, %v2452
        %v2454 = vpop.f32.mrb[0].mxu0
        %v2455 = vpop.f32.mrb[0].mxu0
        %v2456 = vadd.f32 0.0, %v2455
        %v2457 = vpop.f32.mrb[0].mxu0
        %2458 = vdwg.mxu0
        %v2459 = vadd.f32 %v2253, %v2333
        %v2460 = vadd.f32 %v2254, %v2336
        %v2461 = vadd.f32 %v2255, %v2341
        %v2462 = vadd.f32 %v2256, %v2344
        %v2463 = vadd.f32 %v2257, %v2349
        %v2464 = vadd.f32 %v2258, %v2352
        %v2465 = vadd.f32 %v2259, %v2357
        %v2466 = vadd.f32 %v2260, %v2360
        %v2467 = vadd.f32 %v2261, %v2365
        %v2468 = vadd.f32 %v2262, %v2368
        %v2469 = vadd.f32 %v2263, %v2373
        %v2470 = vadd.f32 %v2264, %v2376
        %v2471 = vadd.f32 %v2265, %v2381
        %v2472 = vadd.f32 %v2266, %v2384
        %v2473 = vadd.f32 %v2267, %v2389
        %v2474 = vadd.f32 %v2268, %v2392
        %v2475 = vadd.f32 %v2269, %v2397
        %v2476 = vadd.f32 %v2270, %v2400
        %v2477 = vadd.f32 %v2271, %v2405
        %v2478 = vadd.f32 %v2272, %v2408
        %v2479 = vadd.f32 %v2273, %v2413
        %v2480 = vadd.f32 %v2274, %v2416
        %v2481 = vadd.f32 %v2275, %v2421
        %v2482 = vadd.f32 %v2276, %v2424
        %v2483 = vadd.f32 %v2277, %v2429
        %v2484 = vadd.f32 %v2278, %v2432
        %v2485 = vadd.f32 %v2279, %v2437
        %v2486 = vadd.f32 %v2280, %v2440
        %v2487 = vadd.f32 %v2281, %v2445
        %v2488 = vadd.f32 %v2282, %v2448
        %v2489 = vadd.f32 %v2283, %v2453
        %v2490 = vadd.f32 %v2284, %v2456
        %v2492 = vshrl.u32 %v267, 16
        %v2494 = vrot.slane %v2492, 4
        %v2495 = vshll.u32 %v267, 16
        %v2497 = vrot.slane %v2495, 5
        %v2498 = vor.u32 %v2494, %v2497
        %v2499 = vrot.slane %v2498, 4
        %v2501 = vshll.u32 %v268, 16
        %v2503 = vrot.slane %v2501, 5
        %v2504 = vsel %vm273, %v2499, %v2503
        %v2505 = vshrl.u32 %v268, 16
        %v2507 = vrot.slane %v2505, 4
        %v2508 = vor.u32 %v2507, %v2503
        %v2509 = vrot.slane %v2508, 4
        %v2511 = vshll.u32 %v269, 16
        %v2513 = vrot.slane %v2511, 5
        %v2514 = vsel %vm273, %v2509, %v2513
        %s2515 = scalar_lea.vmem [#allocation5], 14
        %v2516 = vld [vmem:[%s2515] sm:$0x3]
        %v2517 = vunpack.c.l.b16 %v2504
        %v2518 = vunpack.c.l.b16 %v2514
        %v2519 = vpack.c.b16 %v2518, %v2517
        %v2521 = vsel %vm708, %v2519, 0
        %v2524 = vsel %vm757, %v2516, 0
        %2526 = vmatprep.subr.bf16.mxu0 0
        %2527 = vmatpush1.bf16.msra.mxu0 %v2524
        %2528 = vmatprep.subr.bf16.mxu0 0
        %2529 = vmatpush1.bf16.msra.mxu0 0
        %2530 = vmatprep.subr.bf16.mxu0 0
        %2531 = vmatpush1.bf16.msra.mxu0 0
        %2532 = vmatprep.subr.bf16.mxu0 0
        %2533 = vmatpush1.bf16.msra.mxu0 0
        %2534 = vmatprep.subr.bf16.mxu0 0
        %2535 = vmatpush1.bf16.msra.mxu0 0
        %2536 = vmatprep.subr.bf16.mxu0 0
        %2537 = vmatpush1.bf16.msra.mxu0 0
        %2538 = vmatprep.subr.bf16.mxu0 0
        %2539 = vmatpush1.bf16.msra.mxu0 0
        %2540 = vmatprep.subr.bf16.mxu0 0
        %2541 = vmatpush1.bf16.msra.mxu0 0
        %2542 = vmatprep.subr.bf16.mxu0 0
        %2543 = vmatpush1.bf16.msra.mxu0 0
        %2544 = vmatprep.subr.bf16.mxu0 0
        %2545 = vmatpush1.bf16.msra.mxu0 0
        %2546 = vmatprep.subr.bf16.mxu0 0
        %2547 = vmatpush1.bf16.msra.mxu0 0
        %2548 = vmatprep.subr.bf16.mxu0 0
        %2549 = vmatpush1.bf16.msra.mxu0 0
        %2550 = vmatprep.subr.bf16.mxu0 0
        %2551 = vmatpush1.bf16.msra.mxu0 0
        %2552 = vmatprep.subr.bf16.mxu0 0
        %2553 = vmatpush1.bf16.msra.mxu0 0
        %2554 = vmatprep.subr.bf16.mxu0 0
        %2555 = vmatpush1.bf16.msra.mxu0 0
        %2556 = vmatprep.subr.bf16.mxu0 0
        %2557 = vmatpush1.bf16.msra.mxu0 0
        %2558 = vmatprep.mubr.bf16.mxu0 0
        %2559 = vmatmul.mubr.bf16.gmra.mrb[0].mxu0 %v716
        %v2560 = vpop.f32.mrb[0].mxu0
        %v2561 = vadd.f32 0.0, %v2560
        %v2562 = vpop.f32.mrb[0].mxu0
        %v2563 = vpop.f32.mrb[0].mxu0
        %v2564 = vadd.f32 0.0, %v2563
        %v2565 = vpop.f32.mrb[0].mxu0
        %2566 = vmatprep.mubr.bf16.mxu0 0
        %2567 = vmatmul.mubr.bf16.gmra.mrb[0].mxu0 %v719
        %v2568 = vpop.f32.mrb[0].mxu0
        %v2569 = vadd.f32 0.0, %v2568
        %v2570 = vpop.f32.mrb[0].mxu0
        %v2571 = vpop.f32.mrb[0].mxu0
        %v2572 = vadd.f32 0.0, %v2571
        %v2573 = vpop.f32.mrb[0].mxu0
        %2574 = vmatprep.mubr.bf16.mxu0 0
        %2575 = vmatmul.mubr.bf16.gmra.mrb[0].mxu0 %v722
        %v2576 = vpop.f32.mrb[0].mxu0
        %v2577 = vadd.f32 0.0, %v2576
        %v2578 = vpop.f32.mrb[0].mxu0
        %v2579 = vpop.f32.mrb[0].mxu0
        %v2580 = vadd.f32 0.0, %v2579
        %v2581 = vpop.f32.mrb[0].mxu0
        %2582 = vmatprep.mubr.bf16.mxu0 0
        %2583 = vmatmul.mubr.bf16.gmra.mrb[0].mxu0 %v725
        %v2584 = vpop.f32.mrb[0].mxu0
        %v2585 = vadd.f32 0.0, %v2584
        %v2586 = vpop.f32.mrb[0].mxu0
        %v2587 = vpop.f32.mrb[0].mxu0
        %v2588 = vadd.f32 0.0, %v2587
        %v2589 = vpop.f32.mrb[0].mxu0
        %2590 = vmatprep.mubr.bf16.mxu0 0
        %2591 = vmatmul.mubr.bf16.gmra.mrb[0].mxu0 %v728
        %v2592 = vpop.f32.mrb[0].mxu0
        %v2593 = vadd.f32 0.0, %v2592
        %v2594 = vpop.f32.mrb[0].mxu0
        %v2595 = vpop.f32.mrb[0].mxu0
        %v2596 = vadd.f32 0.0, %v2595
        %v2597 = vpop.f32.mrb[0].mxu0
        %2598 = vmatprep.mubr.bf16.mxu0 0
        %2599 = vmatmul.mubr.bf16.gmra.mrb[0].mxu0 %v731
        %v2600 = vpop.f32.mrb[0].mxu0
        %v2601 = vadd.f32 0.0, %v2600
        %v2602 = vpop.f32.mrb[0].mxu0
        %v2603 = vpop.f32.mrb[0].mxu0
        %v2604 = vadd.f32 0.0, %v2603
        %v2605 = vpop.f32.mrb[0].mxu0
        %2606 = vmatprep.mubr.bf16.mxu0 0
        %2607 = vmatmul.mubr.bf16.gmra.mrb[0].mxu0 %v734
        %v2608 = vpop.f32.mrb[0].mxu0
        %v2609 = vadd.f32 0.0, %v2608
        %v2610 = vpop.f32.mrb[0].mxu0
        %v2611 = vpop.f32.mrb[0].mxu0
        %v2612 = vadd.f32 0.0, %v2611
        %v2613 = vpop.f32.mrb[0].mxu0
        %2614 = vmatprep.mubr.bf16.mxu0 0
        %2615 = vmatmul.mubr.bf16.gmra.mrb[0].mxu0 %v737
        %v2616 = vpop.f32.mrb[0].mxu0
        %v2617 = vadd.f32 0.0, %v2616
        %v2618 = vpop.f32.mrb[0].mxu0
        %v2619 = vpop.f32.mrb[0].mxu0
        %v2620 = vadd.f32 0.0, %v2619
        %v2621 = vpop.f32.mrb[0].mxu0
        %2622 = vmatprep.mubr.bf16.mxu0 0
        %2623 = vmatmul.mubr.bf16.gmra.mrb[0].mxu0 %v740
        %v2624 = vpop.f32.mrb[0].mxu0
        %v2625 = vadd.f32 0.0, %v2624
        %v2626 = vpop.f32.mrb[0].mxu0
        %v2627 = vpop.f32.mrb[0].mxu0
        %v2628 = vadd.f32 0.0, %v2627
        %v2629 = vpop.f32.mrb[0].mxu0
        %2630 = vmatprep.mubr.bf16.mxu0 0
        %2631 = vmatmul.mubr.bf16.gmra.mrb[0].mxu0 %v743
        %v2632 = vpop.f32.mrb[0].mxu0
        %v2633 = vadd.f32 0.0, %v2632
        %v2634 = vpop.f32.mrb[0].mxu0
        %v2635 = vpop.f32.mrb[0].mxu0
        %v2636 = vadd.f32 0.0, %v2635
        %v2637 = vpop.f32.mrb[0].mxu0
        %2638 = vmatprep.mubr.bf16.mxu0 0
        %2639 = vmatmul.mubr.bf16.gmra.mrb[0].mxu0 %v746
        %v2640 = vpop.f32.mrb[0].mxu0
        %v2641 = vadd.f32 0.0, %v2640
        %v2642 = vpop.f32.mrb[0].mxu0
        %v2643 = vpop.f32.mrb[0].mxu0
        %v2644 = vadd.f32 0.0, %v2643
        %v2645 = vpop.f32.mrb[0].mxu0
        %2646 = vmatprep.mubr.bf16.mxu0 0
        %2647 = vmatmul.mubr.bf16.gmra.mrb[0].mxu0 %v749
        %v2648 = vpop.f32.mrb[0].mxu0
        %v2649 = vadd.f32 0.0, %v2648
        %v2650 = vpop.f32.mrb[0].mxu0
        %v2651 = vpop.f32.mrb[0].mxu0
        %v2652 = vadd.f32 0.0, %v2651
        %v2653 = vpop.f32.mrb[0].mxu0
        %2654 = vmatprep.mubr.bf16.mxu0 0
        %2655 = vmatmul.mubr.bf16.gmra.mrb[0].mxu0 %v752
        %v2656 = vpop.f32.mrb[0].mxu0
        %v2657 = vadd.f32 0.0, %v2656
        %v2658 = vpop.f32.mrb[0].mxu0
        %v2659 = vpop.f32.mrb[0].mxu0
        %v2660 = vadd.f32 0.0, %v2659
        %v2661 = vpop.f32.mrb[0].mxu0
        %2662 = vmatprep.mubr.bf16.mxu0 0
        %2663 = vmatmul.mubr.bf16.gmra.mrb[0].mxu0 %v755
        %v2664 = vpop.f32.mrb[0].mxu0
        %v2665 = vadd.f32 0.0, %v2664
        %v2666 = vpop.f32.mrb[0].mxu0
        %v2667 = vpop.f32.mrb[0].mxu0
        %v2668 = vadd.f32 0.0, %v2667
        %v2669 = vpop.f32.mrb[0].mxu0
        %2670 = vmatprep.mubr.bf16.mxu0 0
        %2671 = vmatmul.mubr.bf16.gmra.mrb[0].mxu0 %v1875
        %v2672 = vpop.f32.mrb[0].mxu0
        %v2673 = vadd.f32 0.0, %v2672
        %v2674 = vpop.f32.mrb[0].mxu0
        %v2675 = vpop.f32.mrb[0].mxu0
        %v2676 = vadd.f32 0.0, %v2675
        %v2677 = vpop.f32.mrb[0].mxu0
        %2678 = vmatprep.mubr.bf16.mxu0 0
        %2679 = vmatmul.mubr.bf16.gmra.mrb[0].mxu0 %v2521
        %v2680 = vpop.f32.mrb[0].mxu0
        %v2681 = vadd.f32 0.0, %v2680
        %v2682 = vpop.f32.mrb[0].mxu0
        %v2683 = vpop.f32.mrb[0].mxu0
        %v2684 = vadd.f32 0.0, %v2683
        %v2685 = vpop.f32.mrb[0].mxu0
        %2686 = vdwg.mxu0
        %v2687 = vadd.f32 %v2459, %v2561
        %v2688 = vadd.f32 %v2460, %v2564
        %v2689 = vadd.f32 %v2461, %v2569
        %v2690 = vadd.f32 %v2462, %v2572
        %v2691 = vadd.f32 %v2463, %v2577
        %v2692 = vadd.f32 %v2464, %v2580
        %v2693 = vadd.f32 %v2465, %v2585
        %v2694 = vadd.f32 %v2466, %v2588
        %v2695 = vadd.f32 %v2467, %v2593
        %v2696 = vadd.f32 %v2468, %v2596
        %v2697 = vadd.f32 %v2469, %v2601
        %v2698 = vadd.f32 %v2470, %v2604
        %v2699 = vadd.f32 %v2471, %v2609
        %v2700 = vadd.f32 %v2472, %v2612
        %v2701 = vadd.f32 %v2473, %v2617
        %v2702 = vadd.f32 %v2474, %v2620
        %v2703 = vadd.f32 %v2475, %v2625
        %v2704 = vadd.f32 %v2476, %v2628
        %v2705 = vadd.f32 %v2477, %v2633
        %v2706 = vadd.f32 %v2478, %v2636
        %v2707 = vadd.f32 %v2479, %v2641
        %v2708 = vadd.f32 %v2480, %v2644
        %v2709 = vadd.f32 %v2481, %v2649
        %v2710 = vadd.f32 %v2482, %v2652
        %v2711 = vadd.f32 %v2483, %v2657
        %v2712 = vadd.f32 %v2484, %v2660
        %v2713 = vadd.f32 %v2485, %v2665
        %v2714 = vadd.f32 %v2486, %v2668
        %v2715 = vadd.f32 %v2487, %v2673
        %v2716 = vadd.f32 %v2488, %v2676
        %v2717 = vadd.f32 %v2489, %v2681
        %v2718 = vadd.f32 %v2490, %v2684
        %v2720 = vrot.slane %v267, 5
        %v2721 = vrot.slane %v2720, 4
        %v2722 = vrot.slane %v268, 5
        %v2723 = vsel %vm1232, %v2721, %v2722
        %v2724 = vrot.slane %v2722, 4
        %v2725 = vrot.slane %v269, 5
        %v2726 = vsel %vm1232, %v2724, %v2725
        %s2727 = scalar_lea.vmem [#allocation5], 16
        %v2728 = vld [vmem:[%s2727] sm:$0x3]
        %v2729 = vunpack.c.l.b16 %v2723
        %v2730 = vunpack.c.l.b16 %v2726
        %v2731 = vpack.c.b16 %v2730, %v2729
        %v2733 = vsel %vm708, %v2731, 0
        %v2736 = vsel %vm757, %v2728, 0
        %2738 = vmatprep.subr.bf16.mxu0 0
        %2739 = vmatpush1.bf16.msra.mxu0 %v2736
        %2740 = vmatprep.subr.bf16.mxu0 0
        %2741 = vmatpush1.bf16.msra.mxu0 0
        %2742 = vmatprep.subr.bf16.mxu0 0
        %2743 = vmatpush1.bf16.msra.mxu0 0
        %2744 = vmatprep.subr.bf16.mxu0 0
        %2745 = vmatpush1.bf16.msra.mxu0 0
        %2746 = vmatprep.subr.bf16.mxu0 0
        %2747 = vmatpush1.bf16.msra.mxu0 0
        %2748 = vmatprep.subr.bf16.mxu0 0
        %2749 = vmatpush1.bf16.msra.mxu0 0
        %2750 = vmatprep.subr.bf16.mxu0 0
        %2751 = vmatpush1.bf16.msra.mxu0 0
        %2752 = vmatprep.subr.bf16.mxu0 0
        %2753 = vmatpush1.bf16.msra.mxu0 0
        %2754 = vmatprep.subr.bf16.mxu0 0
        %2755 = vmatpush1.bf16.msra.mxu0 0
        %2756 = vmatprep.subr.bf16.mxu0 0
        %2757 = vmatpush1.bf16.msra.mxu0 0
        %2758 = vmatprep.subr.bf16.mxu0 0
        %2759 = vmatpush1.bf16.msra.mxu0 0
        %2760 = vmatprep.subr.bf16.mxu0 0
        %2761 = vmatpush1.bf16.msra.mxu0 0
        %2762 = vmatprep.subr.bf16.mxu0 0
        %2763 = vmatpush1.bf16.msra.mxu0 0
        %2764 = vmatprep.subr.bf16.mxu0 0
        %2765 = vmatpush1.bf16.msra.mxu0 0
        %2766 = vmatprep.subr.bf16.mxu0 0
        %2767 = vmatpush1.bf16.msra.mxu0 0
        %2768 = vmatprep.subr.bf16.mxu0 0
        %2769 = vmatpush1.bf16.msra.mxu0 0
        %2770 = vmatprep.mubr.bf16.mxu0 0
        %2771 = vmatmul.mubr.bf16.gmra.mrb[0].mxu0 %v1402
        %v2772 = vpop.f32.mrb[0].mxu0
        %v2773 = vadd.f32 0.0, %v2772
        %v2774 = vpop.f32.mrb[0].mxu0
        %v2775 = vpop.f32.mrb[0].mxu0
        %v2776 = vadd.f32 0.0, %v2775
        %v2777 = vpop.f32.mrb[0].mxu0
        %2778 = vmatprep.mubr.bf16.mxu0 0
        %2779 = vmatmul.mubr.bf16.gmra.mrb[0].mxu0 %v1405
        %v2780 = vpop.f32.mrb[0].mxu0
        %v2781 = vadd.f32 0.0, %v2780
        %v2782 = vpop.f32.mrb[0].mxu0
        %v2783 = vpop.f32.mrb[0].mxu0
        %v2784 = vadd.f32 0.0, %v2783
        %v2785 = vpop.f32.mrb[0].mxu0
        %2786 = vmatprep.mubr.bf16.mxu0 0
        %2787 = vmatmul.mubr.bf16.gmra.mrb[0].mxu0 %v1408
        %v2788 = vpop.f32.mrb[0].mxu0
        %v2789 = vadd.f32 0.0, %v2788
        %v2790 = vpop.f32.mrb[0].mxu0
        %v2791 = vpop.f32.mrb[0].mxu0
        %v2792 = vadd.f32 0.0, %v2791
        %v2793 = vpop.f32.mrb[0].mxu0
        %2794 = vmatprep.mubr.bf16.mxu0 0
        %2795 = vmatmul.mubr.bf16.gmra.mrb[0].mxu0 %v1411
        %v2796 = vpop.f32.mrb[0].mxu0
        %v2797 = vadd.f32 0.0, %v2796
        %v2798 = vpop.f32.mrb[0].mxu0
        %v2799 = vpop.f32.mrb[0].mxu0
        %v2800 = vadd.f32 0.0, %v2799
        %v2801 = vpop.f32.mrb[0].mxu0
        %2802 = vmatprep.mubr.bf16.mxu0 0
        %2803 = vmatmul.mubr.bf16.gmra.mrb[0].mxu0 %v1414
        %v2804 = vpop.f32.mrb[0].mxu0
        %v2805 = vadd.f32 0.0, %v2804
        %v2806 = vpop.f32.mrb[0].mxu0
        %v2807 = vpop.f32.mrb[0].mxu0
        %v2808 = vadd.f32 0.0, %v2807
        %v2809 = vpop.f32.mrb[0].mxu0
        %2810 = vmatprep.mubr.bf16.mxu0 0
        %2811 = vmatmul.mubr.bf16.gmra.mrb[0].mxu0 %v1417
        %v2812 = vpop.f32.mrb[0].mxu0
        %v2813 = vadd.f32 0.0, %v2812
        %v2814 = vpop.f32.mrb[0].mxu0
        %v2815 = vpop.f32.mrb[0].mxu0
        %v2816 = vadd.f32 0.0, %v2815
        %v2817 = vpop.f32.mrb[0].mxu0
        %2818 = vmatprep.mubr.bf16.mxu0 0
        %2819 = vmatmul.mubr.bf16.gmra.mrb[0].mxu0 %v1420
        %v2820 = vpop.f32.mrb[0].mxu0
        %v2821 = vadd.f32 0.0, %v2820
        %v2822 = vpop.f32.mrb[0].mxu0
        %v2823 = vpop.f32.mrb[0].mxu0
        %v2824 = vadd.f32 0.0, %v2823
        %v2825 = vpop.f32.mrb[0].mxu0
        %2826 = vmatprep.mubr.bf16.mxu0 0
        %2827 = vmatmul.mubr.bf16.gmra.mrb[0].mxu0 %v1423
        %v2828 = vpop.f32.mrb[0].mxu0
        %v2829 = vadd.f32 0.0, %v2828
        %v2830 = vpop.f32.mrb[0].mxu0
        %v2831 = vpop.f32.mrb[0].mxu0
        %v2832 = vadd.f32 0.0, %v2831
        %v2833 = vpop.f32.mrb[0].mxu0
        %2834 = vmatprep.mubr.bf16.mxu0 0
        %2835 = vmatmul.mubr.bf16.gmra.mrb[0].mxu0 %v1426
        %v2836 = vpop.f32.mrb[0].mxu0
        %v2837 = vadd.f32 0.0, %v2836
        %v2838 = vpop.f32.mrb[0].mxu0
        %v2839 = vpop.f32.mrb[0].mxu0
        %v2840 = vadd.f32 0.0, %v2839
        %v2841 = vpop.f32.mrb[0].mxu0
        %2842 = vmatprep.mubr.bf16.mxu0 0
        %2843 = vmatmul.mubr.bf16.gmra.mrb[0].mxu0 %v1429
        %v2844 = vpop.f32.mrb[0].mxu0
        %v2845 = vadd.f32 0.0, %v2844
        %v2846 = vpop.f32.mrb[0].mxu0
        %v2847 = vpop.f32.mrb[0].mxu0
        %v2848 = vadd.f32 0.0, %v2847
        %v2849 = vpop.f32.mrb[0].mxu0
        %2850 = vmatprep.mubr.bf16.mxu0 0
        %2851 = vmatmul.mubr.bf16.gmra.mrb[0].mxu0 %v1432
        %v2852 = vpop.f32.mrb[0].mxu0
        %v2853 = vadd.f32 0.0, %v2852
        %v2854 = vpop.f32.mrb[0].mxu0
        %v2855 = vpop.f32.mrb[0].mxu0
        %v2856 = vadd.f32 0.0, %v2855
        %v2857 = vpop.f32.mrb[0].mxu0
        %2858 = vmatprep.mubr.bf16.mxu0 0
        %2859 = vmatmul.mubr.bf16.gmra.mrb[0].mxu0 %v1435
        %v2860 = vpop.f32.mrb[0].mxu0
        %v2861 = vadd.f32 0.0, %v2860
        %v2862 = vpop.f32.mrb[0].mxu0
        %v2863 = vpop.f32.mrb[0].mxu0
        %v2864 = vadd.f32 0.0, %v2863
        %v2865 = vpop.f32.mrb[0].mxu0
        %2866 = vmatprep.mubr.bf16.mxu0 0
        %2867 = vmatmul.mubr.bf16.gmra.mrb[0].mxu0 %v1438
        %v2868 = vpop.f32.mrb[0].mxu0
        %v2869 = vadd.f32 0.0, %v2868
        %v2870 = vpop.f32.mrb[0].mxu0
        %v2871 = vpop.f32.mrb[0].mxu0
        %v2872 = vadd.f32 0.0, %v2871
        %v2873 = vpop.f32.mrb[0].mxu0
        %2874 = vmatprep.mubr.bf16.mxu0 0
        %2875 = vmatmul.mubr.bf16.gmra.mrb[0].mxu0 %v1441
        %v2876 = vpop.f32.mrb[0].mxu0
        %v2877 = vadd.f32 0.0, %v2876
        %v2878 = vpop.f32.mrb[0].mxu0
        %v2879 = vpop.f32.mrb[0].mxu0
        %v2880 = vadd.f32 0.0, %v2879
        %v2881 = vpop.f32.mrb[0].mxu0
        %2882 = vmatprep.mubr.bf16.mxu0 0
        %2883 = vmatmul.mubr.bf16.gmra.mrb[0].mxu0 %v2087
        %v2884 = vpop.f32.mrb[0].mxu0
        %v2885 = vadd.f32 0.0, %v2884
        %v2886 = vpop.f32.mrb[0].mxu0
        %v2887 = vpop.f32.mrb[0].mxu0
        %v2888 = vadd.f32 0.0, %v2887
        %v2889 = vpop.f32.mrb[0].mxu0
        %2890 = vmatprep.mubr.bf16.mxu0 0
        %2891 = vmatmul.mubr.bf16.gmra.mrb[0].mxu0 %v2733
        %v2892 = vpop.f32.mrb[0].mxu0
        %v2893 = vadd.f32 0.0, %v2892
        %v2894 = vpop.f32.mrb[0].mxu0
        %v2895 = vpop.f32.mrb[0].mxu0
        %v2896 = vadd.f32 0.0, %v2895
        %v2897 = vpop.f32.mrb[0].mxu0
        %2898 = vdwg.mxu0
        %v2899 = vadd.f32 %v2687, %v2773
        %v2900 = vadd.f32 %v2688, %v2776
        %v2901 = vadd.f32 %v2689, %v2781
        %v2902 = vadd.f32 %v2690, %v2784
        %v2903 = vadd.f32 %v2691, %v2789
        %v2904 = vadd.f32 %v2692, %v2792
        %v2905 = vadd.f32 %v2693, %v2797
        %v2906 = vadd.f32 %v2694, %v2800
        %v2907 = vadd.f32 %v2695, %v2805
        %v2908 = vadd.f32 %v2696, %v2808
        %v2909 = vadd.f32 %v2697, %v2813
        %v2910 = vadd.f32 %v2698, %v2816
        %v2911 = vadd.f32 %v2699, %v2821
        %v2912 = vadd.f32 %v2700, %v2824
        %v2913 = vadd.f32 %v2701, %v2829
        %v2914 = vadd.f32 %v2702, %v2832
        %v2915 = vadd.f32 %v2703, %v2837
        %v2916 = vadd.f32 %v2704, %v2840
        %v2917 = vadd.f32 %v2705, %v2845
        %v2918 = vadd.f32 %v2706, %v2848
        %v2919 = vadd.f32 %v2707, %v2853
        %v2920 = vadd.f32 %v2708, %v2856
        %v2921 = vadd.f32 %v2709, %v2861
        %v2922 = vadd.f32 %v2710, %v2864
        %v2923 = vadd.f32 %v2711, %v2869
        %v2924 = vadd.f32 %v2712, %v2872
        %v2925 = vadd.f32 %v2713, %v2877
        %v2926 = vadd.f32 %v2714, %v2880
        %v2927 = vadd.f32 %v2715, %v2885
        %v2928 = vadd.f32 %v2716, %v2888
        %v2929 = vadd.f32 %v2717, %v2893
        %v2930 = vadd.f32 %v2718, %v2896
        %v2931 = vadd.f32 %v2899, %v2900
        %v2932 = vadd.f32 %v2931, %v2901
        %v2933 = vadd.f32 %v2932, %v2902
        %v2934 = vadd.f32 %v2933, %v2903
        %v2935 = vadd.f32 %v2934, %v2904
        %v2936 = vadd.f32 %v2935, %v2905
        %v2937 = vadd.f32 %v2936, %v2906
        %v2938 = vadd.f32 %v2937, %v2907
        %v2939 = vadd.f32 %v2938, %v2908
        %v2940 = vadd.f32 %v2939, %v2909
        %v2941 = vadd.f32 %v2940, %v2910
        %v2942 = vadd.f32 %v2941, %v2911
        %v2943 = vadd.f32 %v2942, %v2912
        %v2944 = vadd.f32 %v2943, %v2913
        %v2945 = vadd.f32 %v2944, %v2914
        %v2946 = vadd.f32 %v2945, %v2915
        %v2947 = vadd.f32 %v2946, %v2916
        %v2948 = vadd.f32 %v2947, %v2917
        %v2949 = vadd.f32 %v2948, %v2918
        %v2950 = vadd.f32 %v2949, %v2919
        %v2951 = vadd.f32 %v2950, %v2920
        %v2952 = vadd.f32 %v2951, %v2921
        %v2953 = vadd.f32 %v2952, %v2922
        %v2954 = vadd.f32 %v2953, %v2923
        %v2955 = vadd.f32 %v2954, %v2924
        %v2956 = vadd.f32 %v2955, %v2925
        %v2957 = vadd.f32 %v2956, %v2926
        %v2958 = vadd.f32 %v2957, %v2927
        %v2959 = vadd.f32 %v2958, %v2928
        %v2960 = vadd.f32 %v2959, %v2929
        %v2961 = vadd.f32 %v2960, %v2930
        %v2962 = vrot.slane %v2961, 4
        %v2963 = vadd.f32 %v2961, %v2962
        %v2964 = vrot.slane %v2963, 2
        %v2965 = vadd.f32 %v2963, %v2964
        %v2966 = vrot.slane %v2965, 1
        %v2967 = vadd.f32 %v2965, %v2966
        %v2968 = vmul.f32 %v2899, %v2899
        %v2969 = vmul.f32 %v2900, %v2900
        %v2970 = vmul.f32 %v2901, %v2901
        %v2971 = vmul.f32 %v2902, %v2902
        %v2972 = vmul.f32 %v2903, %v2903
        %v2973 = vmul.f32 %v2904, %v2904
        %v2974 = vmul.f32 %v2905, %v2905
        %v2975 = vmul.f32 %v2906, %v2906
        %v2976 = vmul.f32 %v2907, %v2907
        %v2977 = vmul.f32 %v2908, %v2908
        %v2978 = vmul.f32 %v2909, %v2909
        %v2979 = vmul.f32 %v2910, %v2910
        %v2980 = vmul.f32 %v2911, %v2911
        %v2981 = vmul.f32 %v2912, %v2912
        %v2982 = vmul.f32 %v2913, %v2913
        %v2983 = vmul.f32 %v2914, %v2914
        %v2984 = vmul.f32 %v2915, %v2915
        %v2985 = vmul.f32 %v2916, %v2916
        %v2986 = vmul.f32 %v2917, %v2917
        %v2987 = vmul.f32 %v2918, %v2918
        %v2988 = vmul.f32 %v2919, %v2919
        %v2989 = vmul.f32 %v2920, %v2920
        %v2990 = vmul.f32 %v2921, %v2921
        %v2991 = vmul.f32 %v2922, %v2922
        %v2992 = vmul.f32 %v2923, %v2923
        %v2993 = vmul.f32 %v2924, %v2924
        %v2994 = vmul.f32 %v2925, %v2925
        %v2995 = vmul.f32 %v2926, %v2926
        %v2996 = vmul.f32 %v2927, %v2927
        %v2997 = vmul.f32 %v2928, %v2928
        %v2998 = vmul.f32 %v2929, %v2929
        %v2999 = vmul.f32 %v2930, %v2930
        %v3000 = vadd.f32 %v2968, %v2969
        %v3001 = vadd.f32 %v3000, %v2970
        %v3002 = vadd.f32 %v3001, %v2971
        %v3003 = vadd.f32 %v3002, %v2972
        %v3004 = vadd.f32 %v3003, %v2973
        %v3005 = vadd.f32 %v3004, %v2974
        %v3006 = vadd.f32 %v3005, %v2975
        %v3007 = vadd.f32 %v3006, %v2976
        %v3008 = vadd.f32 %v3007, %v2977
        %v3009 = vadd.f32 %v3008, %v2978
        %v3010 = vadd.f32 %v3009, %v2979
        %v3011 = vadd.f32 %v3010, %v2980
        %v3012 = vadd.f32 %v3011, %v2981
        %v3013 = vadd.f32 %v3012, %v2982
        %v3014 = vadd.f32 %v3013, %v2983
        %v3015 = vadd.f32 %v3014, %v2984
        %v3016 = vadd.f32 %v3015, %v2985
        %v3017 = vadd.f32 %v3016, %v2986
        %v3018 = vadd.f32 %v3017, %v2987
        %v3019 = vadd.f32 %v3018, %v2988
        %v3020 = vadd.f32 %v3019, %v2989
        %v3021 = vadd.f32 %v3020, %v2990
        %v3022 = vadd.f32 %v3021, %v2991
        %v3023 = vadd.f32 %v3022, %v2992
        %v3024 = vadd.f32 %v3023, %v2993
        %v3025 = vadd.f32 %v3024, %v2994
        %v3026 = vadd.f32 %v3025, %v2995
        %v3027 = vadd.f32 %v3026, %v2996
        %v3028 = vadd.f32 %v3027, %v2997
        %v3029 = vadd.f32 %v3028, %v2998
        %v3030 = vadd.f32 %v3029, %v2999
        %v3031 = vrot.slane %v3030, 4
        %v3032 = vadd.f32 %v3030, %v3031
        %v3033 = vrot.slane %v3032, 2
        %v3034 = vadd.f32 %v3032, %v3033
        %v3035 = vrot.slane %v3034, 1
        %v3036 = vadd.f32 %v3034, %v3035
        %vm3037 = vcmask 1040384
        %v3038 = vsel %vm3037, %v2967, %v3036
        %3039 = vst [vmem:[%s214] sm:$0x3] %v3038
        %v3040 = vpack.c.bf16 %v2900, %v2899
        %v3041 = vpack.c.bf16 %v2902, %v2901
        %v3042 = vpack.c.bf16 %v2904, %v2903
        %v3043 = vpack.c.bf16 %v2906, %v2905
        %v3044 = vpack.c.bf16 %v2908, %v2907
        %v3045 = vpack.c.bf16 %v2910, %v2909
        %v3046 = vpack.c.bf16 %v2912, %v2911
        %v3047 = vpack.c.bf16 %v2914, %v2913
        %v3048 = vpack.c.bf16 %v2916, %v2915
        %v3049 = vpack.c.bf16 %v2918, %v2917
        %v3050 = vpack.c.bf16 %v2920, %v2919
        %v3051 = vpack.c.bf16 %v2922, %v2921
        %v3052 = vpack.c.bf16 %v2924, %v2923
        %v3053 = vpack.c.bf16 %v2926, %v2925
        %v3054 = vpack.c.bf16 %v2928, %v2927
        %v3055 = vpack.c.bf16 %v2930, %v2929
        %v3072 = vunpack.c.l.b16 %v3040
        %v3073 = vunpack.c.h.b16 %v3040
        %v3074 = vunpack.c.l.b16 %v3041
        %v3075 = vunpack.c.h.b16 %v3041
        %v3076 = vunpack.c.l.b16 %v3042
        %v3077 = vunpack.c.h.b16 %v3042
        %v3078 = vunpack.c.l.b16 %v3043
        %v3079 = vunpack.c.h.b16 %v3043
        %v3080 = vunpack.c.l.b16 %v3044
        %v3081 = vunpack.c.h.b16 %v3044
        %v3082 = vunpack.c.l.b16 %v3045
        %v3083 = vunpack.c.h.b16 %v3045
        %v3084 = vunpack.c.l.b16 %v3046
        %v3085 = vunpack.c.h.b16 %v3046
        %v3086 = vunpack.c.l.b16 %v3047
        %v3087 = vunpack.c.h.b16 %v3047
        %v3088 = vunpack.c.l.b16 %v3048
        %v3089 = vunpack.c.h.b16 %v3048
        %v3090 = vunpack.c.l.b16 %v3049
        %v3091 = vunpack.c.h.b16 %v3049
        %v3092 = vunpack.c.l.b16 %v3050
        %v3093 = vunpack.c.h.b16 %v3050
        %v3094 = vunpack.c.l.b16 %v3051
        %v3095 = vunpack.c.h.b16 %v3051
        %v3096 = vunpack.c.l.b16 %v3052
        %v3097 = vunpack.c.h.b16 %v3052
        %v3098 = vunpack.c.l.b16 %v3053
        %v3099 = vunpack.c.h.b16 %v3053
        %v3100 = vunpack.c.l.b16 %v3054
        %v3101 = vunpack.c.h.b16 %v3054
        %v3102 = vunpack.c.l.b16 %v3055
        %v3103 = vunpack.c.h.b16 %v3055
        %v3104 = vpack.c.b16 %v3072, %v3072
        %v3105 = vpack.c.b16 %v3073, %v3073
        %v3106 = vpack.c.b16 %v3074, %v3074
        %v3107 = vpack.c.b16 %v3075, %v3075
        %v3108 = vpack.c.b16 %v3076, %v3076
        %v3109 = vpack.c.b16 %v3077, %v3077
        %v3110 = vpack.c.b16 %v3078, %v3078
        %v3111 = vpack.c.b16 %v3079, %v3079
        %v3112 = vpack.c.b16 %v3080, %v3080
        %v3113 = vpack.c.b16 %v3081, %v3081
        %v3114 = vpack.c.b16 %v3082, %v3082
        %v3115 = vpack.c.b16 %v3083, %v3083
        %v3116 = vpack.c.b16 %v3084, %v3084
        %v3117 = vpack.c.b16 %v3085, %v3085
        %v3118 = vpack.c.b16 %v3086, %v3086
        %v3119 = vpack.c.b16 %v3087, %v3087
        %v3120 = vpack.c.b16 %v3088, %v3088
        %v3121 = vpack.c.b16 %v3089, %v3089
        %v3122 = vpack.c.b16 %v3090, %v3090
        %v3123 = vpack.c.b16 %v3091, %v3091
        %v3124 = vpack.c.b16 %v3092, %v3092
        %v3125 = vpack.c.b16 %v3093, %v3093
        %v3126 = vpack.c.b16 %v3094, %v3094
        %v3127 = vpack.c.b16 %v3095, %v3095
        %v3128 = vpack.c.b16 %v3096, %v3096
        %v3129 = vpack.c.b16 %v3097, %v3097
        %v3130 = vpack.c.b16 %v3098, %v3098
        %v3131 = vpack.c.b16 %v3099, %v3099
        %v3132 = vpack.c.b16 %v3100, %v3100
        %v3133 = vpack.c.b16 %v3101, %v3101
        %v3134 = vpack.c.b16 %v3102, %v3102
        %v3135 = vpack.c.b16 %v3103, %v3103
        %3168 = vst [vmem:[%s207] sm:$0xf] %v3104
        %3169 = vst [vmem:[%s207 + $0x4] sm:$0xf] %v3105
        %3170 = vst [vmem:[%s207 + $0x8] sm:$0xf] %v3106
        %3171 = vst [vmem:[%s207 + $0xc] sm:$0xf] %v3107
        %3172 = vst [vmem:[%s207 + $0x10] sm:$0xf] %v3108
        %3173 = vst [vmem:[%s207 + $0x14] sm:$0xf] %v3109
        %3174 = vst [vmem:[%s207 + $0x18] sm:$0xf] %v3110
        %3175 = vst [vmem:[%s207 + $0x1c] sm:$0xf] %v3111
        %3176 = vst [vmem:[%s207 + $0x20] sm:$0xf] %v3112
        %3177 = vst [vmem:[%s207 + $0x24] sm:$0xf] %v3113
        %3178 = vst [vmem:[%s207 + $0x28] sm:$0xf] %v3114
        %3179 = vst [vmem:[%s207 + $0x2c] sm:$0xf] %v3115
        %3180 = vst [vmem:[%s207 + $0x30] sm:$0xf] %v3116
        %3181 = vst [vmem:[%s207 + $0x34] sm:$0xf] %v3117
        %3182 = vst [vmem:[%s207 + $0x38] sm:$0xf] %v3118
        %3183 = vst [vmem:[%s207 + $0x3c] sm:$0xf] %v3119
        %3184 = vst [vmem:[%s207 + $0x40] sm:$0xf] %v3120
        %3185 = vst [vmem:[%s207 + $0x44] sm:$0xf] %v3121
        %3186 = vst [vmem:[%s207 + $0x48] sm:$0xf] %v3122
        %3187 = vst [vmem:[%s207 + $0x4c] sm:$0xf] %v3123
        %3188 = vst [vmem:[%s207 + $0x50] sm:$0xf] %v3124
        %3189 = vst [vmem:[%s207 + $0x54] sm:$0xf] %v3125
        %3190 = vst [vmem:[%s207 + $0x58] sm:$0xf] %v3126
        %3191 = vst [vmem:[%s207 + $0x5c] sm:$0xf] %v3127
        %3192 = vst [vmem:[%s207 + $0x60] sm:$0xf] %v3128
        %3193 = vst [vmem:[%s207 + $0x64] sm:$0xf] %v3129
        %3194 = vst [vmem:[%s207 + $0x68] sm:$0xf] %v3130
        %3195 = vst [vmem:[%s207 + $0x6c] sm:$0xf] %v3131
        %3196 = vst [vmem:[%s207 + $0x70] sm:$0xf] %v3132
        %3197 = vst [vmem:[%s207 + $0x74] sm:$0xf] %v3133
        %3198 = vst [vmem:[%s207 + $0x78] sm:$0xf] %v3134
        %3199 = vst [vmem:[%s207 + $0x7c] sm:$0xf] %v3135
        %s3200 = sand.u32 %s80, 1
        %s3201 = scalar_lea.sflag [#allocation4], %s3200
        %s3202 = sand.u32 %s80, 1
        %s3203 = smul.addr %s3202, 128
        %s3204 = scalar_lea.vmem [#allocation7], %s3203
        %s3205 = sand.u32 %s106, 1
        %s3206 = scalar_lea.sflag [#allocation9], %s3205
        %s3207 = sand.u32 %s106, 1
        %s3208 = smul.addr %s3207, 2
        %s3209 = scalar_lea.vmem [#allocation8], %s3208
        // Predicated region
        $region37: #{conv_bn_relu.3} parent=27 // pred_check
          %p3210 = pneg %p90
        $region38: #{conv_bn_relu.3} parent=27 // pred_check_branch
          %3212 = sbr.rel (%p3210) target = $region40
        $region39: #{conv_bn_relu.3} parent=27 // pred_region
          %s3214 = ssub.s32 2048, 2048
          %3215 = vsyncadd %s3201, %s3214
          %s3216 = smul.addr %s25, 32
          %s3217 = smul.addr %s3216, 64
          %s3218 = scalar_lea.hbm %s2, %s3217
          %s3219 = sshll.u32 %s3204, 4
          %s3220 = int_to_ptr.vmem [resolvable:$true] %s3219
          %3225 = dma.vmem_to_hbm [thread:$0]  %s3220, 2048, %s3218, %s3201, 64, 64, 4
        $region40: #{conv_bn_relu.3} parent=27 // pred_fallthru
          _
        // Predicated region
        $region41: #{conv_bn_relu.3} parent=27 // pred_check
          %p3226 = pneg %p116
        $region42: #{conv_bn_relu.3} parent=27 // pred_check_branch
          %3228 = sbr.rel (%p3226) target = $region44
        $region43: #{conv_bn_relu.3} parent=27 // pred_region
          %s3230 = ssub.s32 32, 32
          %3231 = vsyncadd %s3206, %s3230
          %s3232 = smul.addr %s25, 32
          %s3233 = scalar_lea.hbm %s3, %s3232
          %s3235 = sshll.u32 %s3209, 4
          %s3236 = int_to_ptr.vmem [resolvable:$true] %s3235
          %3238 = dma.vmem_to_hbm [thread:$0]  %s3236, 32, %s3233, %s3206
        $region44: #{conv_bn_relu.3} parent=27 // pred_fallthru
          _
      $region28: #{conv_bn_relu.3} parent=5 // pred_fallthru
        _
      %p3239 = scmp.le.s32.totalorder 2, %s20
      // Predicated region
      $region45: #{conv_bn_relu.3} parent=5 // pred_check
        %p3240 = pneg %p3239
      $region46: #{conv_bn_relu.3} parent=5 // pred_check_branch
        %3242 = sbr.rel (%p3240) target = $region48
      $region47: #{conv_bn_relu.3} parent=5 // pred_region
        %s3243 = ssub.s32 %s20, 2
        // Predicated region
        $region49: #{conv_bn_relu.3} parent=47 // pred_check
          %p3244 = pneg %p96
        $region50: #{conv_bn_relu.3} parent=47 // pred_check_branch
          %3246 = sbr.rel (%p3244) target = $region52
        $region51: #{conv_bn_relu.3} parent=47 // pred_region
          %s3247 = sand.u32 %s81, 1
          %s3248 = scalar_lea.sflag [#allocation4], %s3247
          %s3249 = sand.u32 %s81, 1
          %s3250 = smul.addr %s3249, 128
          %s3251 = scalar_lea.vmem [#allocation7], %s3250
          %3252 = dma.done %s3248, 2048
        $region52: #{conv_bn_relu.3} parent=47 // pred_fallthru
          _
        // Predicated region
        $region53: #{conv_bn_relu.3} parent=47 // pred_check
          %p3253 = pneg %p122
        $region54: #{conv_bn_relu.3} parent=47 // pred_check_branch
          %3255 = sbr.rel (%p3253) target = $region56
        $region55: #{conv_bn_relu.3} parent=47 // pred_region
          %s3256 = sand.u32 %s107, 1
          %s3257 = scalar_lea.sflag [#allocation9], %s3256
          %s3258 = sand.u32 %s107, 1
          %s3259 = smul.addr %s3258, 2
          %s3260 = scalar_lea.vmem [#allocation8], %s3259
          %3261 = dma.done %s3257, 32
        $region56: #{conv_bn_relu.3} parent=47 // pred_fallthru
          _
      $region48: #{conv_bn_relu.3} parent=5 // pred_fallthru
        _
    $region6: #{conv_bn_relu.3} parent=1 // loop_footer
      %s24 = sadd.s32 1, %s20
    $region7: #{conv_bn_relu.3} parent=1 // loop_footer_branch
      %19 = sbr.rel target = $region3
    $region8: #{conv_bn_relu.3} parent=1 // loop_exit
      _
    %3262 = vsyncpa [#allocation3], 1
    %s3263 = scalar_lea.sflag [#allocation3], 1
    %3264 = vsyncpa %s3263, 1
    %3265 = vsyncpa [#allocation6], 1
    %3266 = vsyncpa [#allocation4], 1
    %s3267 = scalar_lea.sflag [#allocation4], 1
    %3268 = vsyncpa %s3267, 1
    %3269 = vsyncpa [#allocation9], 1
    %s3270 = scalar_lea.sflag [#allocation9], 1
    %3271 = vsyncpa %s3270, 1

</llo_original>
